<compile_context>
chip_gen: v7x
topology: tpu7x:2x2x1
jax: 0.10.0
libtpu: 0.0.40
codegen_flags: <defaults>
</compile_context>

<pallas_src>
import numpy as np
import jax
import jax.numpy as jnp
from jax.experimental import pallas as pl
from jax.experimental.pallas import tpu as pltpu


# --------------------------------------------------------------------------
# Interpolation matrices (PyTorch F.interpolate(..., align_corners=False))
# --------------------------------------------------------------------------
def _linear_interp_matrix(out_size: int, in_size: int) -> np.ndarray:
    """Dense (out_size, in_size) 1-D linear interpolation matrix."""
    i = np.arange(out_size, dtype=np.float64)
    src = (i + 0.5) * (in_size / out_size) - 0.5
    src = np.maximum(src, 0.0)                      # PyTorch clamps negative src
    i0 = np.minimum(np.floor(src).astype(np.int64), in_size - 1)
    frac = src - i0
    i1 = np.minimum(i0 + 1, in_size - 1)
    m = np.zeros((out_size, in_size), dtype=np.float32)
    rows = np.arange(out_size)
    np.add.at(m, (rows, i0), (1.0 - frac).astype(np.float32))
    np.add.at(m, (rows, i1), frac.astype(np.float32))
    return m


# --------------------------------------------------------------------------
# Planning helpers
# --------------------------------------------------------------------------
def _round_up(x: int, m: int) -> int:
    return ((x + m - 1) // m) * m


def _tpu_vmem_capacity() -> int:
    try:
        info = pltpu.get_tpu_info()
        cap = int(getattr(info, "vmem_capacity_bytes", 0))
        if cap > 0:
            return cap
    except Exception:
        pass
    return 64 * 1024 * 1024       # conservative default (v7x per-core VMEM)


def _vmem_estimate_kron(tw, Din, Hin, Win, Dout, Hout):
    """Rough VMEM bytes for the kron-fused kernel at band width tw."""
    f = 4
    dh, DH = Din * Hin, Dout * Hout
    blocks = 2 * f * (dh * Win + Win * tw + DH * dh + Hout * tw)   # double-buffered blocks
    interm = f * (dh * tw + 3 * DH * tw + 4 * Hout * tw)           # live intermediates
    return blocks + interm


def _choose_tw_kron(wout_pad, Din, Hin, Win, Dout, Hout, budget):
    """Largest lane-aligned band width dividing wout_pad that fits the budget."""
    best, tw = 128, 128
    while tw <= wout_pad:
        if wout_pad % tw == 0 and _vmem_estimate_kron(tw, Din, Hin, Win, Dout, Hout) <= budget:
            best = tw
        tw += 128
    return best


# --------------------------------------------------------------------------
# Kernels
# --------------------------------------------------------------------------
def _softmin_regress(up3, o_ref):
    """up3: (Dout, Hout, TW) upsampled cost volume band -> regressed disparity."""
    Dout, Hout, TW = up3.shape
    m = jnp.min(up3, axis=0, keepdims=True)                         # (1, Hout, TW)
    e = jnp.exp(m - up3)                                            # softmin identity, EUP
    dvals = jax.lax.broadcasted_iota(jnp.int32, (Dout, 1, TW), 0).astype(jnp.float32)
    denom = jnp.sum(e, axis=0)                                      # (Hout, TW)
    num = jnp.sum(e * dvals, axis=0)                                # (Hout, TW)
    o_ref[0] = (num / denom).astype(o_ref.dtype)                    # exact divide (tiny)


def _disp_kernel_kron(x_ref, wwt_ref, wdh_ref, o_ref):
    # x_ref  : (1, Din*Hin, Win)        per-item cost volume (native layout, merged lead dims)
    # wwt_ref: (Win, TW)                W-interp columns for this output band
    # wdh_ref: (Dout*Hout, Din*Hin)     kron(wd, wh) fused D+H interpolation matrix
    # o_ref  : (1, Hout, TW)            lane-dense output band
    Hout, TW = o_ref.shape[1], o_ref.shape[2]
    Dout = wdh_ref.shape[0] // Hout
    # W interpolation (MXU), restricted to this band.
    xw = jnp.dot(x_ref[0], wwt_ref[...], preferred_element_type=jnp.float32)   # (Din*Hin, TW)
    # Fused D+H interpolation: one weight-stationary matmul, K = Din*Hin.
    up = jnp.dot(wdh_ref[...], xw, preferred_element_type=jnp.float32)         # (Dout*Hout, TW)
    up3 = up.reshape(Dout, Hout, TW)      # leading split (free when Hout % 8 == 0)
    _softmin_regress(up3, o_ref)


def _disp_kernel_separable(x_ref, wwt_ref, wh_ref, wd_ref, o_ref):
    # Fallback for cost volumes where kron(wd, wh) would not fit VMEM.
    Hout, Hin = wh_ref.shape
    Dout, Din = wd_ref.shape
    TW = o_ref.shape[2]
    xw = jnp.dot(x_ref[0], wwt_ref[...], preferred_element_type=jnp.float32)   # (Din*Hin, TW)
    xw3 = xw.reshape(Din, Hin, TW)
    wh3 = jnp.broadcast_to(wh_ref[...][None, :, :], (Din, Hout, Hin))          # in-kernel, tiny
    y = jax.lax.dot_general(wh3, xw3,
                            dimension_numbers=(((2,), (1,)), ((0,), (0,))),
                            preferred_element_type=jnp.float32)                # (Din, Hout, TW)
    y2 = y.reshape(Din, Hout * TW)        # free when TW == 128 (fallback uses TW=128)
    up = jnp.dot(wd_ref[...], y2, preferred_element_type=jnp.float32)          # (Dout, Hout*TW)
    _softmin_regress(up.reshape(Dout, Hout, TW), o_ref)


# --------------------------------------------------------------------------
# Wrapper
# --------------------------------------------------------------------------
def disp_forward(x: jax.Array, maxdisp: int, *, force_separable: bool = False) -> jax.Array:
    """Pallas implementation of Disp.forward. x: (N, 1, Din, Hin, Win) float32."""
    N, C, Din, Hin, Win = x.shape
    assert C == 1, "Disp expects a single-channel 5-D cost volume (C == 1)."
    Dout, Hout, Wout = int(maxdisp), 3 * Hin, 3 * Win
    Wout_pad = _round_up(Wout, 128)                 # lane-dense output width

    cap = _tpu_vmem_capacity()
    vmem_limit = int(min(cap * 0.7, 100 * 1024 * 1024))
    budget = vmem_limit // 2                        # headroom for double buffers / scratch

    wd = _linear_interp_matrix(Dout, Din)           # (Dout, Din)
    wh = _linear_interp_matrix(Hout, Hin)           # (Hout, Hin)
    ww = _linear_interp_matrix(Wout, Win)           # (Wout, Win)
    wwT = np.zeros((Win, Wout_pad), dtype=np.float32)
    wwT[:, :Wout] = ww.T                            # zero-padded columns -> finite, cropped later

    # Cost volume in native layout with the two leading dims merged (free reshape).
    xs = x[:, 0].astype(jnp.float32).reshape(N, Din * Hin, Win)

    kron_bytes = Dout * Hout * Din * Hin * 4
    use_kron = (not force_separable) and kron_bytes <= min(budget // 3, 16 * 1024 * 1024)

    if use_kron:
        TW = _choose_tw_kron(Wout_pad, Din, Hin, Win, Dout, Hout, budget)
        NB = Wout_pad // TW
        wdh = np.kron(wd, wh).astype(np.float32)    # (Dout*Hout, Din*Hin)
        grid_spec = pltpu.PrefetchScalarGridSpec(
            num_scalar_prefetch=0,
            grid=(N, NB),
            in_specs=[
                pl.BlockSpec((1, Din * Hin, Win), lambda n, b: (n, 0, 0)),
                pl.BlockSpec((Win, TW), lambda n, b: (0, b)),
                pl.BlockSpec((Dout * Hout, Din * Hin), lambda n, b: (0, 0)),
            ],
            out_specs=pl.BlockSpec((1, Hout, TW), lambda n, b: (n, 0, b)),
        )
        out = pl.pallas_call(
            _disp_kernel_kron,
            out_shape=jax.ShapeDtypeStruct((N, Hout, Wout_pad), jnp.float32),
            grid_spec=grid_spec,
            compiler_params=pltpu.CompilerParams(
                dimension_semantics=("parallel", "arbitrary"),
                vmem_limit_bytes=vmem_limit),
        )(xs, jnp.asarray(wwT), jnp.asarray(wdh))
    else:
        # Separable fallback (huge volumes): TW fixed at 128 keeps the minor-merge free.
        TW = 128
        NB = Wout_pad // TW
        grid_spec = pltpu.PrefetchScalarGridSpec(
            num_scalar_prefetch=0,
            grid=(N, NB),
            in_specs=[
                pl.BlockSpec((1, Din * Hin, Win), lambda n, b: (n, 0, 0)),
                pl.BlockSpec((Win, TW), lambda n, b: (0, b)),
                pl.BlockSpec((Hout, Hin), lambda n, b: (0, 0)),
                pl.BlockSpec((Dout, Din), lambda n, b: (0, 0)),
            ],
            out_specs=pl.BlockSpec((1, Hout, TW), lambda n, b: (n, 0, b)),
        )
        out = pl.pallas_call(
            _disp_kernel_separable,
            out_shape=jax.ShapeDtypeStruct((N, Hout, Wout_pad), jnp.float32),
            grid_spec=grid_spec,
            compiler_params=pltpu.CompilerParams(
                dimension_semantics=("parallel", "arbitrary"),
                vmem_limit_bytes=vmem_limit),
        )(xs, jnp.asarray(wwT), jnp.asarray(wh), jnp.asarray(wd))

    if Wout_pad != Wout:
        out = out[:, :, :Wout]
    return out


# --------------------------------------------------------------------------
# Pure-JAX reference (same separable interpolation matrices + softmin)
# --------------------------------------------------------------------------
def disp_reference(x: jax.Array, maxdisp: int) -> jax.Array:
    N, C, Din, Hin, Win = x.shape
    Hout, Wout, Dout = 3 * Hin, 3 * Win, int(maxdisp)
    wd = jnp.asarray(_linear_interp_matrix(Dout, Din))
    wh = jnp.asarray(_linear_interp_matrix(Hout, Hin))
    ww = jnp.asarray(_linear_interp_matrix(Wout, Win))
    xs = x[:, 0].astype(jnp.float32)                          # (N, Din, Hin, Win)
    up = jnp.einsum('ndhw,Ed->nEhw', xs, wd)
    up = jnp.einsum('nEhw,Hh->nEHw', up, wh)
    up = jnp.einsum('nEHw,Ww->nEHW', up, ww)                  # (N, Dout, Hout, Wout)
    p = jax.nn.softmax(-up, axis=1)                           # Softmin
    disp = jnp.arange(Dout, dtype=jnp.float32)[None, :, None, None]
    return jnp.sum(p * disp, axis=1)                          # (N, Hout, Wout)


if __name__ == "__main__":
    key = jax.random.PRNGKey(0)
    k1, k2 = jax.random.split(key)

    # Primary test: lane-aligned widths, exercises the fused kron path.
    N, C, Din, Hin, Win = 2, 1, 12, 8, 128
    maxdisp = 48
    x = jax.random.normal(k1, (N, C, Din, Hin, Win), dtype=jnp.float32)

    out = jax.block_until_ready(disp_forward(x, maxdisp))
    assert out.shape == (N, 3 * Hin, 3 * Win) and out.dtype == jnp.float32
    ref = jax.block_until_ready(disp_reference(x, maxdisp))
    np.testing.assert_allclose(np.asarray(out), np.asarray(ref), rtol=1e-3, atol=1e-3)

    # Secondary test: non-128-multiple Wout (pad + crop) on both the fused and
    # the separable-fallback kernel.
    N2, Din2, Hin2, Win2, maxdisp2 = 1, 10, 8, 96, 32
    x2 = jax.random.normal(k2, (N2, 1, Din2, Hin2, Win2), dtype=jnp.float32)
    ref2 = jax.block_until_ready(disp_reference(x2, maxdisp2))
    out2k = jax.block_until_ready(disp_forward(x2, maxdisp2))
    out2s = jax.block_until_ready(disp_forward(x2, maxdisp2, force_separable=True))
    assert out2k.shape == (N2, 3 * Hin2, 3 * Win2)
    np.testing.assert_allclose(np.asarray(out2k), np.asarray(ref2), rtol=1e-3, atol=1e-3)
    np.testing.assert_allclose(np.asarray(out2s), np.asarray(ref2), rtol=1e-3, atol=1e-3)

    print("KERNEL_OK")
</pallas_src>

<mosaic_0001>
module attributes {stable_mosaic.version = 11 : i64} {
  func.func @_disp_kernel_kron(%arg0: i32, %arg1: i32, %arg2: memref<1x96x128xf32, #tpu.memory_space<vmem>>, %arg3: memref<128x384xf32, #tpu.memory_space<vmem>>, %arg4: memref<1152x96xf32, #tpu.memory_space<vmem>>, %arg5: memref<1x24x384xf32, #tpu.memory_space<vmem>>) attributes {dimension_semantics = [#tpu.dimension_semantics<parallel>, #tpu.dimension_semantics<arbitrary>], iteration_bounds = array<i64: 2, 1>, scalar_prefetch = 0 : i64, scratch_operands = 0 : i64, tpu.core_type = #tpu.core_type<tc>, window_params = [{transform_indices = @transform_0, window_bounds = array<i64: 1, 96, 128>}, {transform_indices = @transform_1, window_bounds = array<i64: 128, 384>}, {pipeline_mode = #tpu.pipeline_mode<synchronous>, transform_indices = @transform_2, window_bounds = array<i64: 1152, 96>}, {transform_indices = @transform_3, window_bounds = array<i64: 1, 24, 384>}]} {
    %c0 = arith.constant 0 : index
    %c0_0 = arith.constant 0 : index
    %c0_1 = arith.constant 0 : index
    %0 = vector.load %arg2[%c0, %c0_0, %c0_1] : memref<1x96x128xf32, #tpu.memory_space<vmem>>, vector<1x96x128xf32>
    %1 = vector.shape_cast %0 : vector<1x96x128xf32> to vector<96x128xf32>
    %c0_2 = arith.constant 0 : index
    %c0_3 = arith.constant 0 : index
    %2 = vector.load %arg3[%c0_2, %c0_3] : memref<128x384xf32, #tpu.memory_space<vmem>>, vector<128x384xf32>
    %cst = arith.constant dense<0.000000e+00> : vector<96x384xf32>
    %3 = tpu.matmul %1, %2, %cst {dimension_numbers = #tpu.dot_dimension_numbers<[1], [0], [0], [1], [0, 0, 1, 1], [], []>} : vector<96x128xf32>, vector<128x384xf32>, vector<96x384xf32> -> vector<96x384xf32>
    %c0_4 = arith.constant 0 : index
    %c0_5 = arith.constant 0 : index
    %4 = vector.load %arg4[%c0_4, %c0_5] : memref<1152x96xf32, #tpu.memory_space<vmem>>, vector<1152x96xf32>
    %cst_6 = arith.constant dense<0.000000e+00> : vector<1152x384xf32>
    %5 = tpu.matmul %4, %3, %cst_6 {dimension_numbers = #tpu.dot_dimension_numbers<[1], [0], [0], [1], [0, 0, 1, 1], [], []>} : vector<1152x96xf32>, vector<96x384xf32>, vector<1152x384xf32> -> vector<1152x384xf32>
    %6 = vector.shape_cast %5 : vector<1152x384xf32> to vector<48x24x384xf32>
    %cst_7 = arith.constant dense<0x7F800000> : vector<24x384xf32>
    %7 = vector.multi_reduction <minimumf>, %6, %cst_7 [0] : vector<48x24x384xf32> to vector<24x384xf32>
    %8 = vector.shape_cast %7 : vector<24x384xf32> to vector<1x24x384xf32>
    %9 = vector.broadcast %8 : vector<1x24x384xf32> to vector<48x24x384xf32>
    %10 = arith.subf %9, %6 : vector<48x24x384xf32>
    %11 = math.exp %10 : vector<48x24x384xf32>
    %12 = tpu.iota {dimensions = array<i32: 0>} : vector<48x1x384xi32>
    %13 = arith.sitofp %12 : vector<48x1x384xi32> to vector<48x1x384xf32>
    %cst_8 = arith.constant dense<0.000000e+00> : vector<24x384xf32>
    %14 = vector.multi_reduction <add>, %11, %cst_8 [0] : vector<48x24x384xf32> to vector<24x384xf32>
    %15 = vector.broadcast %13 : vector<48x1x384xf32> to vector<48x24x384xf32>
    %16 = arith.mulf %11, %15 : vector<48x24x384xf32>
    %cst_9 = arith.constant dense<0.000000e+00> : vector<24x384xf32>
    %17 = vector.multi_reduction <add>, %16, %cst_9 [0] : vector<48x24x384xf32> to vector<24x384xf32>
    %18 = arith.divf %17, %14 : vector<24x384xf32>
    %c0_10 = arith.constant 0 : index
    %c0_11 = arith.constant 0 : index
    %c0_12 = arith.constant 0 : index
    %19 = vector.load %arg5[%c0_10, %c0_11, %c0_12] : memref<1x24x384xf32, #tpu.memory_space<vmem>>, vector<1x24x384xf32>
    %20 = vector.shape_cast %19 : vector<1x24x384xf32> to vector<24x384xf32>
    %21 = vector.shape_cast %18 : vector<24x384xf32> to vector<1x24x384xf32>
    tpu.vector_store %arg5[%c0_10, %c0_11, %c0_12], %21 {strides = array<i32>} : memref<1x24x384xf32, #tpu.memory_space<vmem>>, vector<1x24x384xf32>,
    return
  }
  func.func @transform_0(%arg0: i32, %arg1: i32) -> (i32, i32, i32) {
    %c0_i32 = arith.constant 0 : i32
    %c0_i32_0 = arith.constant 0 : i32
    %c0_i32_1 = arith.constant 0 : i32
    return %arg0, %c0_i32, %c0_i32_0 : i32, i32, i32
  }
  func.func @transform_1(%arg0: i32, %arg1: i32) -> (i32, i32) {
    %c0_i32 = arith.constant 0 : i32
    %c0_i32_0 = arith.constant 0 : i32
    return %c0_i32, %arg1 : i32, i32
  }
  func.func @transform_2(%arg0: i32, %arg1: i32) -> (i32, i32) {
    %c0_i32 = arith.constant 0 : i32
    %c0_i32_0 = arith.constant 0 : i32
    %c0_i32_1 = arith.constant 0 : i32
    return %c0_i32, %c0_i32_0 : i32, i32
  }
  func.func @transform_3(%arg0: i32, %arg1: i32) -> (i32, i32, i32) {
    %c0_i32 = arith.constant 0 : i32
    %c0_i32_0 = arith.constant 0 : i32
    return %arg0, %c0_i32, %arg1 : i32, i32, i32
  }
}

</mosaic_0001>

<llo_original>
// kernel: tpu_custom_call.1
$region0: #{tpu_custom_call.1}
  #allocation0 [shape = 'u32[]', space=smem, size = 0x4, offset = 0x4, fixed_abs, tag = 'smem constant byte address 0x4 - core index']
  #allocation1 [shape = 'u32[144,128]{1,0:T(1,128)}', space=vmem, size = 0x12000, scoped, tag = 'internal scratch']
  %s0 = inlined_call_operand.vmem [shape: f32[2,96,128], index: 0, kind: input, shape index: {}]
  %s1 = inlined_call_operand.vmem [shape: f32[128,384], index: 1, kind: input, shape index: {}]
  %s2 = inlined_call_operand.vmem [shape: f32[1152,96], index: 2, kind: input, shape index: {}]
  %s3 = inlined_call_operand.hbm [shape: f32[2,24,384], index: 3, kind: output, shape index: {}]
  %s4 = sld [smem:[#allocation0]]
  $region45: #{tpu_custom_call.1} parent=0
    _
  %s6 = ssub.s32 1, %s4
  %s7 = scalar_select 0, %s6, %s4
  $region1: #{tpu_custom_call.1} parent=0
    #allocation2 [shape = 'u8[73728]{0}', space=vmem, size = 0x12000, scoped, tag = 'output window, operand 0']
    #allocation3 [shape = 's32[2]{0}', space=sflag, size = 0x8, scoped, tag = 'scoped memory for tpu_custom_call.1']
    %8 = vsyncpa [#allocation3], 0
    %s9 = scalar_lea.sflag [#allocation3], 1
    %10 = vsyncpa %s9, 0
    loop: start=0, step=1, limit=4
    $region2: #{tpu_custom_call.1} parent=1 // loop_pre_header
      _
    $region3: #{tpu_custom_call.1} parent=1 // loop_header
      %s12 = sphi 0, %s16
      %p13 = scmp.ge.s32.totalorder %s12, 4
      %s19 = sphi 0, %s31
      %s20 = sphi 0, %s27
      %s21 = sphi 0, %s19
      %s22 = sphi 0, %s20
      %s23 = sphi 0, %s21
      %s24 = sphi 0, %s22
      %s34 = sphi 0, %s36
      %s37 = sphi 0, %s34
      %s38 = sphi 0, %s37
      %s54 = sphi 0, %s38
      %s60 = sphi 0, %s62
      %s63 = sphi 0, %s60
      %s64 = sphi 0, %s63
      %s80 = sphi 0, %s64
      %s84 = sphi 0, %s84
      %s86 = sphi 0, %s84
      %s87 = sphi 0, %s86
      %s101 = sphi 0, %s87
      %s109 = sphi 0, %s111
      %s112 = sphi 0, %s109
      %s113 = sphi 0, %s112
      %s129 = sphi 0, %s113
    $region4: #{tpu_custom_call.1} parent=1 // loop_header_branch
      %15 = sbr.rel (%p13) target = $region8
    $region5: #{tpu_custom_call.1} parent=1 // loop_body
      %s17 = ssub.s32 %s12, 1
      %s18 = ssub.s32 %s12, 2
      %s25 = sadd.s32 1, %s20
      %p26 = scmp.ge.s32.totalorder %s25, 1
      %s27 = scalar_select %p26, 0, %s25
      %s28 = sadd.s32 1, %s19
      %s29 = scalar_select %p26, %s28, %s19
      %p30 = scmp.ge.s32.totalorder %s29, 2
      %s31 = scalar_select %p30, 0, %s29
      %s32 = ssub.s32 %s19, %s31
      %p33 = scmp.eq.s32.totalorder %s32, 0
      %s35 = sadd.s32 %s34, 1
      %s36 = scalar_select %p33, %s34, %s35
      %p39 = pneg %p33
      %p40 = scmp.eq.s32.totalorder %s12, 1
      %p41 = por %p39, %p40
      %p42 = scmp.ne.s32.totalorder %s34, %s37
      %p43 = scmp.eq.s32.totalorder %s12, 0
      %p44 = por %p42, %p43
      %p45 = scmp.ne.s32.totalorder %s34, %s37
      %p46 = scmp.eq.s32.totalorder %s17, 1
      %p47 = por %p45, %p46
      %p48 = scmp.ne.s32.totalorder %s37, %s38
      %p49 = scmp.eq.s32.totalorder %s17, 0
      %p50 = por %p48, %p49
      %p51 = scmp.ne.s32.totalorder %s37, %s38
      %p52 = scmp.eq.s32.totalorder %s18, 1
      %p53 = por %p51, %p52
      %p55 = scmp.ne.s32.totalorder %s38, %s54
      %p56 = scmp.eq.s32.totalorder %s18, 0
      %p57 = por %p55, %p56
      %s58 = ssub.s32 %s20, %s27
      %p59 = scmp.eq.s32.totalorder %s58, 0
      %s61 = sadd.s32 %s60, 1
      %s62 = scalar_select %p59, %s60, %s61
      %p65 = pneg %p59
      %p66 = scmp.eq.s32.totalorder %s12, 1
      %p67 = por %p65, %p66
      %p68 = scmp.ne.s32.totalorder %s60, %s63
      %p69 = scmp.eq.s32.totalorder %s12, 0
      %p70 = por %p68, %p69
      %p71 = scmp.ne.s32.totalorder %s60, %s63
      %p72 = scmp.eq.s32.totalorder %s17, 1
      %p73 = por %p71, %p72
      %p74 = scmp.ne.s32.totalorder %s63, %s64
      %p75 = scmp.eq.s32.totalorder %s17, 0
      %p76 = por %p74, %p75
      %p77 = scmp.ne.s32.totalorder %s63, %s64
      %p78 = scmp.eq.s32.totalorder %s18, 1
      %p79 = por %p77, %p78
      %p81 = scmp.ne.s32.totalorder %s64, %s80
      %p82 = scmp.eq.s32.totalorder %s18, 0
      %p83 = por %p81, %p82
      %s85 = sadd.s32 %s84, 1
      %p88 = scmp.eq.s32.totalorder %s12, 1
      %p89 = scmp.ne.s32.totalorder %s84, %s86
      %p90 = scmp.eq.s32.totalorder %s12, 0
      %p91 = por %p89, %p90
      %p92 = scmp.ne.s32.totalorder %s84, %s86
      %p93 = scmp.eq.s32.totalorder %s17, 1
      %p94 = por %p92, %p93
      %p95 = scmp.ne.s32.totalorder %s86, %s87
      %p96 = scmp.eq.s32.totalorder %s17, 0
      %p97 = por %p95, %p96
      %p98 = scmp.ne.s32.totalorder %s86, %s87
      %p99 = scmp.eq.s32.totalorder %s18, 1
      %p100 = por %p98, %p99
      %p102 = scmp.ne.s32.totalorder %s87, %s101
      %p103 = scmp.eq.s32.totalorder %s18, 0
      %p104 = por %p102, %p103
      %s105 = ssub.s32 %s19, %s31
      %s106 = ssub.s32 %s20, %s27
      %s107 = sor.u32 %s105, %s106
      %p108 = scmp.eq.s32.totalorder %s107, 0
      %s110 = sadd.s32 %s109, 1
      %s111 = scalar_select %p108, %s109, %s110
      %p114 = pneg %p108
      %p115 = scmp.eq.s32.totalorder %s12, 1
      %p116 = por %p114, %p115
      %p117 = scmp.ne.s32.totalorder %s109, %s112
      %p118 = scmp.eq.s32.totalorder %s12, 0
      %p119 = por %p117, %p118
      %p120 = scmp.ne.s32.totalorder %s109, %s112
      %p121 = scmp.eq.s32.totalorder %s17, 1
      %p122 = por %p120, %p121
      %p123 = scmp.ne.s32.totalorder %s112, %s113
      %p124 = scmp.eq.s32.totalorder %s17, 0
      %p125 = por %p123, %p124
      %p126 = scmp.ne.s32.totalorder %s112, %s113
      %p127 = scmp.eq.s32.totalorder %s18, 1
      %p128 = por %p126, %p127
      %p130 = scmp.ne.s32.totalorder %s113, %s129
      %p131 = scmp.eq.s32.totalorder %s18, 0
      %p132 = por %p130, %p131
      %p133 = scmp.le.s32.totalorder 1, %s12
      %p134 = scmp.lt.s32.totalorder %s12, 3
      %p135 = pnand %p133, %p134
      %p136 = pneg %p135
      // Predicated region
      $region9: #{tpu_custom_call.1} parent=5 // pred_check
        _
      $region10: #{tpu_custom_call.1} parent=5 // pred_check_branch
        %138 = sbr.rel (%p135) target = $region12
      $region11: #{tpu_custom_call.1} parent=5 // pred_region
        %s139 = ssub.s32 %s12, 1
        // Predicated region
        $region13: #{tpu_custom_call.1} parent=11 // pred_check
          %p140 = pneg %p76
        $region14: #{tpu_custom_call.1} parent=11 // pred_check_branch
          %142 = sbr.rel (%p140) target = $region16
        $region15: #{tpu_custom_call.1} parent=11 // pred_region
          %s143 = smul.u32 3, %s22
          %p144 = scmp.lt.s32.totalorder %s143, 2
          %s145 = scalar_select %p144, %s143, 2
          %s146 = smul.addr %s145, 8
          %s147 = scalar_lea.vmem %s1, %s146
          %s148 = smul.u32 3, %s22
        $region16: #{tpu_custom_call.1} parent=11 // pred_fallthru
          _
        // Predicated region
        $region17: #{tpu_custom_call.1} parent=11 // pred_check
          %p149 = pneg %p97
        $region18: #{tpu_custom_call.1} parent=11 // pred_check_branch
          %151 = sbr.rel (%p149) target = $region20
        $region19: #{tpu_custom_call.1} parent=11 // pred_region
          _
        $region20: #{tpu_custom_call.1} parent=11 // pred_fallthru
          _
      $region12: #{tpu_custom_call.1} parent=5 // pred_fallthru
        _
      %p152 = scmp.lt.s32.totalorder %s12, 2
      // Predicated region
      $region21: #{tpu_custom_call.1} parent=5 // pred_check
        %p153 = pneg %p152
      $region22: #{tpu_custom_call.1} parent=5 // pred_check_branch
        %155 = sbr.rel (%p153) target = $region24
      $region23: #{tpu_custom_call.1} parent=5 // pred_region
        // Predicated region
        $region25: #{tpu_custom_call.1} parent=23 // pred_check
          %p156 = pneg %p44
        $region26: #{tpu_custom_call.1} parent=23 // pred_check_branch
          %158 = sbr.rel (%p156) target = $region28
        $region27: #{tpu_custom_call.1} parent=23 // pred_region
          %p159 = scmp.lt.s32.totalorder %s19, 1
          %s160 = scalar_select %p159, %s19, 1
          %s161 = smul.addr %s160, 12
          %s162 = smul.addr %s161, 8
          %s163 = scalar_lea.vmem %s0, %s162
        $region28: #{tpu_custom_call.1} parent=23 // pred_fallthru
          _
      $region24: #{tpu_custom_call.1} parent=5 // pred_fallthru
        _
      %p164 = scmp.le.s32.totalorder 1, %s12
      %p165 = scmp.lt.s32.totalorder %s12, 3
      %p166 = pnand %p164, %p165
      %p167 = pneg %p166
      // Predicated region
      $region29: #{tpu_custom_call.1} parent=5 // pred_check
        _
      $region30: #{tpu_custom_call.1} parent=5 // pred_check_branch
        %169 = sbr.rel (%p166) target = $region32
      $region31: #{tpu_custom_call.1} parent=5 // pred_region
        %s170 = ssub.s32 %s12, 1
        %p171 = scmp.lt.s32.totalorder %s21, 1
        %s172 = scalar_select %p171, %s21, 1
        %s173 = smul.addr %s172, 12
        %s174 = smul.addr %s173, 8
        %s175 = scalar_lea.vmem %s0, %s174
        %p176 = pneg %p50
        %p177 = pneg %p47
        %s178 = smul.u32 3, %s22
        %p179 = scmp.lt.s32.totalorder %s178, 2
        %s180 = scalar_select %p179, %s178, 2
        %s181 = smul.addr %s180, 8
        %s182 = scalar_lea.vmem %s1, %s181
        %p183 = pneg %p76
        %p184 = pneg %p73
        %p185 = pneg %p97
        %p186 = pneg %p94
        %p187 = pneg %p125
        %p188 = pneg %p122
        %s189 = sand.u32 %s112, 1
        %s190 = scalar_lea.sflag [#allocation3], %s189
        %s191 = sand.u32 %s112, 1
        %s192 = smul.addr %s191, 72
        %s193 = scalar_lea.vmem [#allocation2], %s192
        %p194 = scmp.lt.s32.totalorder %s21, 1
        %s195 = scalar_select %p194, %s21, 1
        %s196 = smul.addr %s195, 12
        %s197 = smul.addr %s196, 8
        %s198 = scalar_lea.vmem %s0, %s197
        %s199 = smul.u32 3, %s22
        %p200 = scmp.lt.s32.totalorder %s199, 2
        %s201 = scalar_select %p200, %s199, 2
        %s202 = smul.addr %s201, 8
        %s203 = scalar_lea.vmem %s1, %s202
        %s204 = smul.u32 3, %s22
        %s205 = smul.u32 3, %s22
        %v206 = vld [vmem:[%s198] sm:$0xff]
        %v207 = vld [vmem:[%s198 + $0x8] sm:$0xff]
        %v208 = vld [vmem:[%s198 + $0x10] sm:$0xff]
        %v209 = vld [vmem:[%s198 + $0x18] sm:$0xff]
        %v210 = vld [vmem:[%s198 + $0x20] sm:$0xff]
        %v211 = vld [vmem:[%s198 + $0x28] sm:$0xff]
        %v212 = vld [vmem:[%s198 + $0x30] sm:$0xff]
        %v213 = vld [vmem:[%s198 + $0x38] sm:$0xff]
        %v214 = vld [vmem:[%s198 + $0x40] sm:$0xff]
        %v215 = vld [vmem:[%s198 + $0x48] sm:$0xff]
        %v216 = vld [vmem:[%s198 + $0x50] sm:$0xff]
        %v217 = vld [vmem:[%s198 + $0x58] sm:$0xff]
        %v218 = vld [vmem:[%s203] sm:$0xff]
        %v219 = vld [vmem:[%s203 + $0x8] sm:$0xff]
        %v220 = vld [vmem:[%s203 + $0x10] sm:$0xff]
        %v221 = vld [vmem:[%s203 + $0x18] sm:$0xff]
        %v222 = vld [vmem:[%s203 + $0x20] sm:$0xff]
        %v223 = vld [vmem:[%s203 + $0x28] sm:$0xff]
        %v224 = vld [vmem:[%s203 + $0x30] sm:$0xff]
        %v225 = vld [vmem:[%s203 + $0x38] sm:$0xff]
        %v226 = vld [vmem:[%s203 + $0x40] sm:$0xff]
        %v227 = vld [vmem:[%s203 + $0x48] sm:$0xff]
        %v228 = vld [vmem:[%s203 + $0x50] sm:$0xff]
        %v229 = vld [vmem:[%s203 + $0x58] sm:$0xff]
        %v230 = vld [vmem:[%s203 + $0x60] sm:$0xff]
        %v231 = vld [vmem:[%s203 + $0x68] sm:$0xff]
        %v232 = vld [vmem:[%s203 + $0x70] sm:$0xff]
        %v233 = vld [vmem:[%s203 + $0x78] sm:$0xff]
        %v234 = vld [vmem:[%s203 + $0x80] sm:$0xff]
        %v235 = vld [vmem:[%s203 + $0x88] sm:$0xff]
        %v236 = vld [vmem:[%s203 + $0x90] sm:$0xff]
        %v237 = vld [vmem:[%s203 + $0x98] sm:$0xff]
        %v238 = vld [vmem:[%s203 + $0xa0] sm:$0xff]
        %v239 = vld [vmem:[%s203 + $0xa8] sm:$0xff]
        %v240 = vld [vmem:[%s203 + $0xb0] sm:$0xff]
        %v241 = vld [vmem:[%s203 + $0xb8] sm:$0xff]
        %v242 = vld [vmem:[%s203 + $0xc0] sm:$0xff]
        %v243 = vld [vmem:[%s203 + $0xc8] sm:$0xff]
        %v244 = vld [vmem:[%s203 + $0xd0] sm:$0xff]
        %v245 = vld [vmem:[%s203 + $0xd8] sm:$0xff]
        %v246 = vld [vmem:[%s203 + $0xe0] sm:$0xff]
        %v247 = vld [vmem:[%s203 + $0xe8] sm:$0xff]
        %v248 = vld [vmem:[%s203 + $0xf0] sm:$0xff]
        %v249 = vld [vmem:[%s203 + $0xf8] sm:$0xff]
        %v250 = vld [vmem:[%s203 + $0x100] sm:$0xff]
        %v251 = vld [vmem:[%s203 + $0x108] sm:$0xff]
        %v252 = vld [vmem:[%s203 + $0x110] sm:$0xff]
        %v253 = vld [vmem:[%s203 + $0x118] sm:$0xff]
        %v254 = vld [vmem:[%s203 + $0x120] sm:$0xff]
        %v255 = vld [vmem:[%s203 + $0x128] sm:$0xff]
        %v256 = vld [vmem:[%s203 + $0x130] sm:$0xff]
        %v257 = vld [vmem:[%s203 + $0x138] sm:$0xff]
        %v258 = vld [vmem:[%s203 + $0x140] sm:$0xff]
        %v259 = vld [vmem:[%s203 + $0x148] sm:$0xff]
        %v260 = vld [vmem:[%s203 + $0x150] sm:$0xff]
        %v261 = vld [vmem:[%s203 + $0x158] sm:$0xff]
        %v262 = vld [vmem:[%s203 + $0x160] sm:$0xff]
        %v263 = vld [vmem:[%s203 + $0x168] sm:$0xff]
        %v264 = vld [vmem:[%s203 + $0x170] sm:$0xff]
        %v265 = vld [vmem:[%s203 + $0x178] sm:$0xff]
        %266 = vmatprep.subr.mxu0 %v219
        %267 = vmatpush1.msra.mxu0 %v218
        %268 = vmatprep.subr.mxu0 %v222
        %269 = vmatpush1.msra.mxu0 %v221
        %270 = vmatprep.subr.mxu0 %v225
        %271 = vmatpush1.msra.mxu0 %v224
        %272 = vmatprep.subr.mxu0 %v228
        %273 = vmatpush1.msra.mxu0 %v227
        %274 = vmatprep.subr.mxu0 %v231
        %275 = vmatpush1.msra.mxu0 %v230
        %276 = vmatprep.subr.mxu0 %v234
        %277 = vmatpush1.msra.mxu0 %v233
        %278 = vmatprep.subr.mxu0 %v237
        %279 = vmatpush1.msra.mxu0 %v236
        %280 = vmatprep.subr.mxu0 %v240
        %281 = vmatpush1.msra.mxu0 %v239
        %282 = vmatprep.subr.mxu0 %v243
        %283 = vmatpush1.msra.mxu0 %v242
        %284 = vmatprep.subr.mxu0 %v246
        %285 = vmatpush1.msra.mxu0 %v245
        %286 = vmatprep.subr.mxu0 %v249
        %287 = vmatpush1.msra.mxu0 %v248
        %288 = vmatprep.subr.mxu0 %v252
        %289 = vmatpush1.msra.mxu0 %v251
        %290 = vmatprep.subr.mxu0 %v255
        %291 = vmatpush1.msra.mxu0 %v254
        %292 = vmatprep.subr.mxu0 %v258
        %293 = vmatpush1.msra.mxu0 %v257
        %294 = vmatprep.subr.mxu0 %v261
        %295 = vmatpush1.msra.mxu0 %v260
        %296 = vmatprep.subr.mxu0 %v264
        %297 = vmatpush1.msra.mxu0 %v263
        %298 = vmatprep.subr.mxu0 0.0
        %299 = vmatpush1.msra.mxu0 0.0
        %300 = vmatprep.subr.mxu0 0.0
        %301 = vmatpush1.msra.mxu0 0.0
        %302 = vmatprep.subr.mxu0 0.0
        %303 = vmatpush1.msra.mxu0 0.0
        %304 = vmatprep.subr.mxu0 0.0
        %305 = vmatpush1.msra.mxu0 0.0
        %306 = vmatprep.subr.mxu0 0.0
        %307 = vmatpush1.msra.mxu0 0.0
        %308 = vmatprep.subr.mxu0 0.0
        %309 = vmatpush1.msra.mxu0 0.0
        %310 = vmatprep.subr.mxu0 0.0
        %311 = vmatpush1.msra.mxu0 0.0
        %312 = vmatprep.subr.mxu0 0.0
        %313 = vmatpush1.msra.mxu0 0.0
        %314 = vmatprep.subr.mxu0 0.0
        %315 = vmatpush1.msra.mxu0 0.0
        %316 = vmatprep.subr.mxu0 0.0
        %317 = vmatpush1.msra.mxu0 0.0
        %318 = vmatprep.subr.mxu0 0.0
        %319 = vmatpush1.msra.mxu0 0.0
        %320 = vmatprep.subr.mxu0 0.0
        %321 = vmatpush1.msra.mxu0 0.0
        %322 = vmatprep.subr.mxu0 0.0
        %323 = vmatpush1.msra.mxu0 0.0
        %324 = vmatprep.subr.mxu0 0.0
        %325 = vmatpush1.msra.mxu0 0.0
        %326 = vmatprep.subr.mxu0 0.0
        %327 = vmatpush1.msra.mxu0 0.0
        %328 = vmatprep.subr.mxu0 0.0
        %329 = vmatpush1.msra.mxu0 0.0
        %330 = vmatprep.mubr.f32.mxu0 0.0
        %331 = vmatmul.mubr.f32.gmra.mrb[0].mxu0 %v206
        %v332 = vpop.f32.mrb[0].mxu0
        %v333 = vadd.f32 0.0, %v332
        %v334 = vpop.f32.mrb[0].mxu0
        %v335 = vadd.f32 0.0, %v334
        %336 = vmatprep.mubr.f32.mxu0 0.0
        %337 = vmatmul.mubr.f32.gmra.mrb[0].mxu0 %v207
        %v338 = vpop.f32.mrb[0].mxu0
        %v339 = vadd.f32 0.0, %v338
        %v340 = vpop.f32.mrb[0].mxu0
        %v341 = vadd.f32 0.0, %v340
        %342 = vmatprep.mubr.f32.mxu0 0.0
        %343 = vmatmul.mubr.f32.gmra.mrb[0].mxu0 %v208
        %v344 = vpop.f32.mrb[0].mxu0
        %v345 = vadd.f32 0.0, %v344
        %v346 = vpop.f32.mrb[0].mxu0
        %v347 = vadd.f32 0.0, %v346
        %348 = vmatprep.mubr.f32.mxu0 0.0
        %349 = vmatmul.mubr.f32.gmra.mrb[0].mxu0 %v209
        %v350 = vpop.f32.mrb[0].mxu0
        %v351 = vadd.f32 0.0, %v350
        %v352 = vpop.f32.mrb[0].mxu0
        %v353 = vadd.f32 0.0, %v352
        %354 = vmatprep.mubr.f32.mxu0 0.0
        %355 = vmatmul.mubr.f32.gmra.mrb[0].mxu0 %v210
        %v356 = vpop.f32.mrb[0].mxu0
        %v357 = vadd.f32 0.0, %v356
        %v358 = vpop.f32.mrb[0].mxu0
        %v359 = vadd.f32 0.0, %v358
        %360 = vmatprep.mubr.f32.mxu0 0.0
        %361 = vmatmul.mubr.f32.gmra.mrb[0].mxu0 %v211
        %v362 = vpop.f32.mrb[0].mxu0
        %v363 = vadd.f32 0.0, %v362
        %v364 = vpop.f32.mrb[0].mxu0
        %v365 = vadd.f32 0.0, %v364
        %366 = vmatprep.mubr.f32.mxu0 0.0
        %367 = vmatmul.mubr.f32.gmra.mrb[0].mxu0 %v212
        %v368 = vpop.f32.mrb[0].mxu0
        %v369 = vadd.f32 0.0, %v368
        %v370 = vpop.f32.mrb[0].mxu0
        %v371 = vadd.f32 0.0, %v370
        %372 = vmatprep.mubr.f32.mxu0 0.0
        %373 = vmatmul.mubr.f32.gmra.mrb[0].mxu0 %v213
        %v374 = vpop.f32.mrb[0].mxu0
        %v375 = vadd.f32 0.0, %v374
        %v376 = vpop.f32.mrb[0].mxu0
        %v377 = vadd.f32 0.0, %v376
        %378 = vmatprep.mubr.f32.mxu0 0.0
        %379 = vmatmul.mubr.f32.gmra.mrb[0].mxu0 %v214
        %v380 = vpop.f32.mrb[0].mxu0
        %v381 = vadd.f32 0.0, %v380
        %v382 = vpop.f32.mrb[0].mxu0
        %v383 = vadd.f32 0.0, %v382
        %384 = vmatprep.mubr.f32.mxu0 0.0
        %385 = vmatmul.mubr.f32.gmra.mrb[0].mxu0 %v215
        %v386 = vpop.f32.mrb[0].mxu0
        %v387 = vadd.f32 0.0, %v386
        %v388 = vpop.f32.mrb[0].mxu0
        %v389 = vadd.f32 0.0, %v388
        %390 = vmatprep.mubr.f32.mxu0 0.0
        %391 = vmatmul.mubr.f32.gmra.mrb[0].mxu0 %v216
        %v392 = vpop.f32.mrb[0].mxu0
        %v393 = vadd.f32 0.0, %v392
        %v394 = vpop.f32.mrb[0].mxu0
        %v395 = vadd.f32 0.0, %v394
        %396 = vmatprep.mubr.f32.mxu0 0.0
        %397 = vmatmul.mubr.f32.gmra.mrb[0].mxu0 %v217
        %v398 = vpop.f32.mrb[0].mxu0
        %v399 = vadd.f32 0.0, %v398
        %v400 = vpop.f32.mrb[0].mxu0
        %v401 = vadd.f32 0.0, %v400
        %402 = vdwg.mxu0
        %403 = vmatprep.subr.mxu0 0.0
        %404 = vmatpush1.msra.mxu0 %v220
        %405 = vmatprep.subr.mxu0 0.0
        %406 = vmatpush1.msra.mxu0 %v223
        %407 = vmatprep.subr.mxu0 0.0
        %408 = vmatpush1.msra.mxu0 %v226
        %409 = vmatprep.subr.mxu0 0.0
        %410 = vmatpush1.msra.mxu0 %v229
        %411 = vmatprep.subr.mxu0 0.0
        %412 = vmatpush1.msra.mxu0 %v232
        %413 = vmatprep.subr.mxu0 0.0
        %414 = vmatpush1.msra.mxu0 %v235
        %415 = vmatprep.subr.mxu0 0.0
        %416 = vmatpush1.msra.mxu0 %v238
        %417 = vmatprep.subr.mxu0 0.0
        %418 = vmatpush1.msra.mxu0 %v241
        %419 = vmatprep.subr.mxu0 0.0
        %420 = vmatpush1.msra.mxu0 %v244
        %421 = vmatprep.subr.mxu0 0.0
        %422 = vmatpush1.msra.mxu0 %v247
        %423 = vmatprep.subr.mxu0 0.0
        %424 = vmatpush1.msra.mxu0 %v250
        %425 = vmatprep.subr.mxu0 0.0
        %426 = vmatpush1.msra.mxu0 %v253
        %427 = vmatprep.subr.mxu0 0.0
        %428 = vmatpush1.msra.mxu0 %v256
        %429 = vmatprep.subr.mxu0 0.0
        %430 = vmatpush1.msra.mxu0 %v259
        %431 = vmatprep.subr.mxu0 0.0
        %432 = vmatpush1.msra.mxu0 %v262
        %433 = vmatprep.subr.mxu0 0.0
        %434 = vmatpush1.msra.mxu0 %v265
        %435 = vmatprep.subr.mxu0 0.0
        %436 = vmatpush1.msra.mxu0 0.0
        %437 = vmatprep.subr.mxu0 0.0
        %438 = vmatpush1.msra.mxu0 0.0
        %439 = vmatprep.subr.mxu0 0.0
        %440 = vmatpush1.msra.mxu0 0.0
        %441 = vmatprep.subr.mxu0 0.0
        %442 = vmatpush1.msra.mxu0 0.0
        %443 = vmatprep.subr.mxu0 0.0
        %444 = vmatpush1.msra.mxu0 0.0
        %445 = vmatprep.subr.mxu0 0.0
        %446 = vmatpush1.msra.mxu0 0.0
        %447 = vmatprep.subr.mxu0 0.0
        %448 = vmatpush1.msra.mxu0 0.0
        %449 = vmatprep.subr.mxu0 0.0
        %450 = vmatpush1.msra.mxu0 0.0
        %451 = vmatprep.subr.mxu0 0.0
        %452 = vmatpush1.msra.mxu0 0.0
        %453 = vmatprep.subr.mxu0 0.0
        %454 = vmatpush1.msra.mxu0 0.0
        %455 = vmatprep.subr.mxu0 0.0
        %456 = vmatpush1.msra.mxu0 0.0
        %457 = vmatprep.subr.mxu0 0.0
        %458 = vmatpush1.msra.mxu0 0.0
        %459 = vmatprep.subr.mxu0 0.0
        %460 = vmatpush1.msra.mxu0 0.0
        %461 = vmatprep.subr.mxu0 0.0
        %462 = vmatpush1.msra.mxu0 0.0
        %463 = vmatprep.subr.mxu0 0.0
        %464 = vmatpush1.msra.mxu0 0.0
        %465 = vmatprep.subr.mxu0 0.0
        %466 = vmatpush1.msra.mxu0 0.0
        %467 = vmatprep.mubr.f32.mxu0 0.0
        %468 = vmatmul.mubr.f32.gmra.mrb[0].mxu0 %v206
        %v469 = vpop.f32.mrb[0].mxu0
        %v470 = vadd.f32 0.0, %v469
        %v471 = vpop.f32.mrb[0].mxu0
        %472 = vmatprep.mubr.f32.mxu0 0.0
        %473 = vmatmul.mubr.f32.gmra.mrb[0].mxu0 %v207
        %v474 = vpop.f32.mrb[0].mxu0
        %v475 = vadd.f32 0.0, %v474
        %v476 = vpop.f32.mrb[0].mxu0
        %477 = vmatprep.mubr.f32.mxu0 0.0
        %478 = vmatmul.mubr.f32.gmra.mrb[0].mxu0 %v208
        %v479 = vpop.f32.mrb[0].mxu0
        %v480 = vadd.f32 0.0, %v479
        %v481 = vpop.f32.mrb[0].mxu0
        %482 = vmatprep.mubr.f32.mxu0 0.0
        %483 = vmatmul.mubr.f32.gmra.mrb[0].mxu0 %v209
        %v484 = vpop.f32.mrb[0].mxu0
        %v485 = vadd.f32 0.0, %v484
        %v486 = vpop.f32.mrb[0].mxu0
        %487 = vmatprep.mubr.f32.mxu0 0.0
        %488 = vmatmul.mubr.f32.gmra.mrb[0].mxu0 %v210
        %v489 = vpop.f32.mrb[0].mxu0
        %v490 = vadd.f32 0.0, %v489
        %v491 = vpop.f32.mrb[0].mxu0
        %492 = vmatprep.mubr.f32.mxu0 0.0
        %493 = vmatmul.mubr.f32.gmra.mrb[0].mxu0 %v211
        %v494 = vpop.f32.mrb[0].mxu0
        %v495 = vadd.f32 0.0, %v494
        %v496 = vpop.f32.mrb[0].mxu0
        %497 = vmatprep.mubr.f32.mxu0 0.0
        %498 = vmatmul.mubr.f32.gmra.mrb[0].mxu0 %v212
        %v499 = vpop.f32.mrb[0].mxu0
        %v500 = vadd.f32 0.0, %v499
        %v501 = vpop.f32.mrb[0].mxu0
        %502 = vmatprep.mubr.f32.mxu0 0.0
        %503 = vmatmul.mubr.f32.gmra.mrb[0].mxu0 %v213
        %v504 = vpop.f32.mrb[0].mxu0
        %v505 = vadd.f32 0.0, %v504
        %v506 = vpop.f32.mrb[0].mxu0
        %507 = vmatprep.mubr.f32.mxu0 0.0
        %508 = vmatmul.mubr.f32.gmra.mrb[0].mxu0 %v214
        %v509 = vpop.f32.mrb[0].mxu0
        %v510 = vadd.f32 0.0, %v509
        %v511 = vpop.f32.mrb[0].mxu0
        %512 = vmatprep.mubr.f32.mxu0 0.0
        %513 = vmatmul.mubr.f32.gmra.mrb[0].mxu0 %v215
        %v514 = vpop.f32.mrb[0].mxu0
        %v515 = vadd.f32 0.0, %v514
        %v516 = vpop.f32.mrb[0].mxu0
        %517 = vmatprep.mubr.f32.mxu0 0.0
        %518 = vmatmul.mubr.f32.gmra.mrb[0].mxu0 %v216
        %v519 = vpop.f32.mrb[0].mxu0
        %v520 = vadd.f32 0.0, %v519
        %v521 = vpop.f32.mrb[0].mxu0
        %522 = vmatprep.mubr.f32.mxu0 0.0
        %523 = vmatmul.mubr.f32.gmra.mrb[0].mxu0 %v217
        %v524 = vpop.f32.mrb[0].mxu0
        %v525 = vadd.f32 0.0, %v524
        %v526 = vpop.f32.mrb[0].mxu0
        %527 = vdwg.mxu0
        %v528 = vld [vmem:[%s2] sm:$0xff]
        %v529 = vld [vmem:[%s2 + $0x8] sm:$0xff]
        %v530 = vld [vmem:[%s2 + $0x10] sm:$0xff]
        %v531 = vld [vmem:[%s2 + $0x18] sm:$0xff]
        %v532 = vld [vmem:[%s2 + $0x20] sm:$0xff]
        %v533 = vld [vmem:[%s2 + $0x28] sm:$0xff]
        %v534 = vld [vmem:[%s2 + $0x30] sm:$0xff]
        %v535 = vld [vmem:[%s2 + $0x38] sm:$0xff]
        %v536 = vld [vmem:[%s2 + $0x40] sm:$0xff]
        %v537 = vld [vmem:[%s2 + $0x48] sm:$0xff]
        %v538 = vld [vmem:[%s2 + $0x50] sm:$0xff]
        %v539 = vld [vmem:[%s2 + $0x58] sm:$0xff]
        %v540 = vld [vmem:[%s2 + $0x60] sm:$0xff]
        %v541 = vld [vmem:[%s2 + $0x68] sm:$0xff]
        %v542 = vld [vmem:[%s2 + $0x70] sm:$0xff]
        %v543 = vld [vmem:[%s2 + $0x78] sm:$0xff]
        %v544 = vld [vmem:[%s2 + $0x80] sm:$0xff]
        %v545 = vld [vmem:[%s2 + $0x88] sm:$0xff]
        %v546 = vld [vmem:[%s2 + $0x90] sm:$0xff]
        %v547 = vld [vmem:[%s2 + $0x98] sm:$0xff]
        %v548 = vld [vmem:[%s2 + $0xa0] sm:$0xff]
        %v549 = vld [vmem:[%s2 + $0xa8] sm:$0xff]
        %v550 = vld [vmem:[%s2 + $0xb0] sm:$0xff]
        %v551 = vld [vmem:[%s2 + $0xb8] sm:$0xff]
        %v552 = vld [vmem:[%s2 + $0xc0] sm:$0xff]
        %v553 = vld [vmem:[%s2 + $0xc8] sm:$0xff]
        %v554 = vld [vmem:[%s2 + $0xd0] sm:$0xff]
        %v555 = vld [vmem:[%s2 + $0xd8] sm:$0xff]
        %v556 = vld [vmem:[%s2 + $0xe0] sm:$0xff]
        %v557 = vld [vmem:[%s2 + $0xe8] sm:$0xff]
        %v558 = vld [vmem:[%s2 + $0xf0] sm:$0xff]
        %v559 = vld [vmem:[%s2 + $0xf8] sm:$0xff]
        %v560 = vld [vmem:[%s2 + $0x100] sm:$0xff]
        %v561 = vld [vmem:[%s2 + $0x108] sm:$0xff]
        %v562 = vld [vmem:[%s2 + $0x110] sm:$0xff]
        %v563 = vld [vmem:[%s2 + $0x118] sm:$0xff]
        %v564 = vld [vmem:[%s2 + $0x120] sm:$0xff]
        %v565 = vld [vmem:[%s2 + $0x128] sm:$0xff]
        %v566 = vld [vmem:[%s2 + $0x130] sm:$0xff]
        %v567 = vld [vmem:[%s2 + $0x138] sm:$0xff]
        %v568 = vld [vmem:[%s2 + $0x140] sm:$0xff]
        %v569 = vld [vmem:[%s2 + $0x148] sm:$0xff]
        %v570 = vld [vmem:[%s2 + $0x150] sm:$0xff]
        %v571 = vld [vmem:[%s2 + $0x158] sm:$0xff]
        %v572 = vld [vmem:[%s2 + $0x160] sm:$0xff]
        %v573 = vld [vmem:[%s2 + $0x168] sm:$0xff]
        %v574 = vld [vmem:[%s2 + $0x170] sm:$0xff]
        %v575 = vld [vmem:[%s2 + $0x178] sm:$0xff]
        %v576 = vld [vmem:[%s2 + $0x180] sm:$0xff]
        %v577 = vld [vmem:[%s2 + $0x188] sm:$0xff]
        %v578 = vld [vmem:[%s2 + $0x190] sm:$0xff]
        %v579 = vld [vmem:[%s2 + $0x198] sm:$0xff]
        %v580 = vld [vmem:[%s2 + $0x1a0] sm:$0xff]
        %v581 = vld [vmem:[%s2 + $0x1a8] sm:$0xff]
        %v582 = vld [vmem:[%s2 + $0x1b0] sm:$0xff]
        %v583 = vld [vmem:[%s2 + $0x1b8] sm:$0xff]
        %v584 = vld [vmem:[%s2 + $0x1c0] sm:$0xff]
        %v585 = vld [vmem:[%s2 + $0x1c8] sm:$0xff]
        %v586 = vld [vmem:[%s2 + $0x1d0] sm:$0xff]
        %v587 = vld [vmem:[%s2 + $0x1d8] sm:$0xff]
        %v588 = vld [vmem:[%s2 + $0x1e0] sm:$0xff]
        %v589 = vld [vmem:[%s2 + $0x1e8] sm:$0xff]
        %v590 = vld [vmem:[%s2 + $0x1f0] sm:$0xff]
        %v591 = vld [vmem:[%s2 + $0x1f8] sm:$0xff]
        %v592 = vld [vmem:[%s2 + $0x200] sm:$0xff]
        %v593 = vld [vmem:[%s2 + $0x208] sm:$0xff]
        %v594 = vld [vmem:[%s2 + $0x210] sm:$0xff]
        %v595 = vld [vmem:[%s2 + $0x218] sm:$0xff]
        %v596 = vld [vmem:[%s2 + $0x220] sm:$0xff]
        %v597 = vld [vmem:[%s2 + $0x228] sm:$0xff]
        %v598 = vld [vmem:[%s2 + $0x230] sm:$0xff]
        %v599 = vld [vmem:[%s2 + $0x238] sm:$0xff]
        %v600 = vld [vmem:[%s2 + $0x240] sm:$0xff]
        %v601 = vld [vmem:[%s2 + $0x248] sm:$0xff]
        %v602 = vld [vmem:[%s2 + $0x250] sm:$0xff]
        %v603 = vld [vmem:[%s2 + $0x258] sm:$0xff]
        %v604 = vld [vmem:[%s2 + $0x260] sm:$0xff]
        %v605 = vld [vmem:[%s2 + $0x268] sm:$0xff]
        %v606 = vld [vmem:[%s2 + $0x270] sm:$0xff]
        %v607 = vld [vmem:[%s2 + $0x278] sm:$0xff]
        %v608 = vld [vmem:[%s2 + $0x280] sm:$0xff]
        %v609 = vld [vmem:[%s2 + $0x288] sm:$0xff]
        %v610 = vld [vmem:[%s2 + $0x290] sm:$0xff]
        %v611 = vld [vmem:[%s2 + $0x298] sm:$0xff]
        %v612 = vld [vmem:[%s2 + $0x2a0] sm:$0xff]
        %v613 = vld [vmem:[%s2 + $0x2a8] sm:$0xff]
        %v614 = vld [vmem:[%s2 + $0x2b0] sm:$0xff]
        %v615 = vld [vmem:[%s2 + $0x2b8] sm:$0xff]
        %v616 = vld [vmem:[%s2 + $0x2c0] sm:$0xff]
        %v617 = vld [vmem:[%s2 + $0x2c8] sm:$0xff]
        %v618 = vld [vmem:[%s2 + $0x2d0] sm:$0xff]
        %v619 = vld [vmem:[%s2 + $0x2d8] sm:$0xff]
        %v620 = vld [vmem:[%s2 + $0x2e0] sm:$0xff]
        %v621 = vld [vmem:[%s2 + $0x2e8] sm:$0xff]
        %v622 = vld [vmem:[%s2 + $0x2f0] sm:$0xff]
        %v623 = vld [vmem:[%s2 + $0x2f8] sm:$0xff]
        %v624 = vld [vmem:[%s2 + $0x300] sm:$0xff]
        %v625 = vld [vmem:[%s2 + $0x308] sm:$0xff]
        %v626 = vld [vmem:[%s2 + $0x310] sm:$0xff]
        %v627 = vld [vmem:[%s2 + $0x318] sm:$0xff]
        %v628 = vld [vmem:[%s2 + $0x320] sm:$0xff]
        %v629 = vld [vmem:[%s2 + $0x328] sm:$0xff]
        %v630 = vld [vmem:[%s2 + $0x330] sm:$0xff]
        %v631 = vld [vmem:[%s2 + $0x338] sm:$0xff]
        %v632 = vld [vmem:[%s2 + $0x340] sm:$0xff]
        %v633 = vld [vmem:[%s2 + $0x348] sm:$0xff]
        %v634 = vld [vmem:[%s2 + $0x350] sm:$0xff]
        %v635 = vld [vmem:[%s2 + $0x358] sm:$0xff]
        %v636 = vld [vmem:[%s2 + $0x360] sm:$0xff]
        %v637 = vld [vmem:[%s2 + $0x368] sm:$0xff]
        %v638 = vld [vmem:[%s2 + $0x370] sm:$0xff]
        %v639 = vld [vmem:[%s2 + $0x378] sm:$0xff]
        %v640 = vld [vmem:[%s2 + $0x380] sm:$0xff]
        %v641 = vld [vmem:[%s2 + $0x388] sm:$0xff]
        %v642 = vld [vmem:[%s2 + $0x390] sm:$0xff]
        %v643 = vld [vmem:[%s2 + $0x398] sm:$0xff]
        %v644 = vld [vmem:[%s2 + $0x3a0] sm:$0xff]
        %v645 = vld [vmem:[%s2 + $0x3a8] sm:$0xff]
        %v646 = vld [vmem:[%s2 + $0x3b0] sm:$0xff]
        %v647 = vld [vmem:[%s2 + $0x3b8] sm:$0xff]
        %v648 = vld [vmem:[%s2 + $0x3c0] sm:$0xff]
        %v649 = vld [vmem:[%s2 + $0x3c8] sm:$0xff]
        %v650 = vld [vmem:[%s2 + $0x3d0] sm:$0xff]
        %v651 = vld [vmem:[%s2 + $0x3d8] sm:$0xff]
        %v652 = vld [vmem:[%s2 + $0x3e0] sm:$0xff]
        %v653 = vld [vmem:[%s2 + $0x3e8] sm:$0xff]
        %v654 = vld [vmem:[%s2 + $0x3f0] sm:$0xff]
        %v655 = vld [vmem:[%s2 + $0x3f8] sm:$0xff]
        %v656 = vld [vmem:[%s2 + $0x400] sm:$0xff]
        %v657 = vld [vmem:[%s2 + $0x408] sm:$0xff]
        %v658 = vld [vmem:[%s2 + $0x410] sm:$0xff]
        %v659 = vld [vmem:[%s2 + $0x418] sm:$0xff]
        %v660 = vld [vmem:[%s2 + $0x420] sm:$0xff]
        %v661 = vld [vmem:[%s2 + $0x428] sm:$0xff]
        %v662 = vld [vmem:[%s2 + $0x430] sm:$0xff]
        %v663 = vld [vmem:[%s2 + $0x438] sm:$0xff]
        %v664 = vld [vmem:[%s2 + $0x440] sm:$0xff]
        %v665 = vld [vmem:[%s2 + $0x448] sm:$0xff]
        %v666 = vld [vmem:[%s2 + $0x450] sm:$0xff]
        %v667 = vld [vmem:[%s2 + $0x458] sm:$0xff]
        %v668 = vld [vmem:[%s2 + $0x460] sm:$0xff]
        %v669 = vld [vmem:[%s2 + $0x468] sm:$0xff]
        %v670 = vld [vmem:[%s2 + $0x470] sm:$0xff]
        %v671 = vld [vmem:[%s2 + $0x478] sm:$0xff]
        %vm672 = vcmask 785408
        %v674 = vsel %vm672, %v528, 0
        %v677 = vsel %vm672, %v529, 0
        %v680 = vsel %vm672, %v530, 0
        %v683 = vsel %vm672, %v531, 0
        %v686 = vsel %vm672, %v532, 0
        %v689 = vsel %vm672, %v533, 0
        %v692 = vsel %vm672, %v534, 0
        %v695 = vsel %vm672, %v535, 0
        %v698 = vsel %vm672, %v536, 0
        %v701 = vsel %vm672, %v537, 0
        %v704 = vsel %vm672, %v538, 0
        %v707 = vsel %vm672, %v539, 0
        %v710 = vsel %vm672, %v540, 0
        %v713 = vsel %vm672, %v541, 0
        %v716 = vsel %vm672, %v542, 0
        %v719 = vsel %vm672, %v543, 0
        %v722 = vsel %vm672, %v544, 0
        %v725 = vsel %vm672, %v545, 0
        %v728 = vsel %vm672, %v546, 0
        %v731 = vsel %vm672, %v547, 0
        %v734 = vsel %vm672, %v548, 0
        %v737 = vsel %vm672, %v549, 0
        %v740 = vsel %vm672, %v550, 0
        %v743 = vsel %vm672, %v551, 0
        %v746 = vsel %vm672, %v552, 0
        %v749 = vsel %vm672, %v553, 0
        %v752 = vsel %vm672, %v554, 0
        %v755 = vsel %vm672, %v555, 0
        %v758 = vsel %vm672, %v556, 0
        %v761 = vsel %vm672, %v557, 0
        %v764 = vsel %vm672, %v558, 0
        %v767 = vsel %vm672, %v559, 0
        %v770 = vsel %vm672, %v560, 0
        %v773 = vsel %vm672, %v561, 0
        %v776 = vsel %vm672, %v562, 0
        %v779 = vsel %vm672, %v563, 0
        %v782 = vsel %vm672, %v564, 0
        %v785 = vsel %vm672, %v565, 0
        %v788 = vsel %vm672, %v566, 0
        %v791 = vsel %vm672, %v567, 0
        %v794 = vsel %vm672, %v568, 0
        %v797 = vsel %vm672, %v569, 0
        %v800 = vsel %vm672, %v570, 0
        %v803 = vsel %vm672, %v571, 0
        %v806 = vsel %vm672, %v572, 0
        %v809 = vsel %vm672, %v573, 0
        %v812 = vsel %vm672, %v574, 0
        %v815 = vsel %vm672, %v575, 0
        %v818 = vsel %vm672, %v576, 0
        %v821 = vsel %vm672, %v577, 0
        %v824 = vsel %vm672, %v578, 0
        %v827 = vsel %vm672, %v579, 0
        %v830 = vsel %vm672, %v580, 0
        %v833 = vsel %vm672, %v581, 0
        %v836 = vsel %vm672, %v582, 0
        %v839 = vsel %vm672, %v583, 0
        %v842 = vsel %vm672, %v584, 0
        %v845 = vsel %vm672, %v585, 0
        %v848 = vsel %vm672, %v586, 0
        %v851 = vsel %vm672, %v587, 0
        %v854 = vsel %vm672, %v588, 0
        %v857 = vsel %vm672, %v589, 0
        %v860 = vsel %vm672, %v590, 0
        %v863 = vsel %vm672, %v591, 0
        %v866 = vsel %vm672, %v592, 0
        %v869 = vsel %vm672, %v593, 0
        %v872 = vsel %vm672, %v594, 0
        %v875 = vsel %vm672, %v595, 0
        %v878 = vsel %vm672, %v596, 0
        %v881 = vsel %vm672, %v597, 0
        %v884 = vsel %vm672, %v598, 0
        %v887 = vsel %vm672, %v599, 0
        %v890 = vsel %vm672, %v600, 0
        %v893 = vsel %vm672, %v601, 0
        %v896 = vsel %vm672, %v602, 0
        %v899 = vsel %vm672, %v603, 0
        %v902 = vsel %vm672, %v604, 0
        %v905 = vsel %vm672, %v605, 0
        %v908 = vsel %vm672, %v606, 0
        %v911 = vsel %vm672, %v607, 0
        %v914 = vsel %vm672, %v608, 0
        %v917 = vsel %vm672, %v609, 0
        %v920 = vsel %vm672, %v610, 0
        %v923 = vsel %vm672, %v611, 0
        %v926 = vsel %vm672, %v612, 0
        %v929 = vsel %vm672, %v613, 0
        %v932 = vsel %vm672, %v614, 0
        %v935 = vsel %vm672, %v615, 0
        %v938 = vsel %vm672, %v616, 0
        %v941 = vsel %vm672, %v617, 0
        %v944 = vsel %vm672, %v618, 0
        %v947 = vsel %vm672, %v619, 0
        %v950 = vsel %vm672, %v620, 0
        %v953 = vsel %vm672, %v621, 0
        %v956 = vsel %vm672, %v622, 0
        %v959 = vsel %vm672, %v623, 0
        %v962 = vsel %vm672, %v624, 0
        %v965 = vsel %vm672, %v625, 0
        %v968 = vsel %vm672, %v626, 0
        %v971 = vsel %vm672, %v627, 0
        %v974 = vsel %vm672, %v628, 0
        %v977 = vsel %vm672, %v629, 0
        %v980 = vsel %vm672, %v630, 0
        %v983 = vsel %vm672, %v631, 0
        %v986 = vsel %vm672, %v632, 0
        %v989 = vsel %vm672, %v633, 0
        %v992 = vsel %vm672, %v634, 0
        %v995 = vsel %vm672, %v635, 0
        %v998 = vsel %vm672, %v636, 0
        %v1001 = vsel %vm672, %v637, 0
        %v1004 = vsel %vm672, %v638, 0
        %v1007 = vsel %vm672, %v639, 0
        %v1010 = vsel %vm672, %v640, 0
        %v1013 = vsel %vm672, %v641, 0
        %v1016 = vsel %vm672, %v642, 0
        %v1019 = vsel %vm672, %v643, 0
        %v1022 = vsel %vm672, %v644, 0
        %v1025 = vsel %vm672, %v645, 0
        %v1028 = vsel %vm672, %v646, 0
        %v1031 = vsel %vm672, %v647, 0
        %v1034 = vsel %vm672, %v648, 0
        %v1037 = vsel %vm672, %v649, 0
        %v1040 = vsel %vm672, %v650, 0
        %v1043 = vsel %vm672, %v651, 0
        %v1046 = vsel %vm672, %v652, 0
        %v1049 = vsel %vm672, %v653, 0
        %v1052 = vsel %vm672, %v654, 0
        %v1055 = vsel %vm672, %v655, 0
        %v1058 = vsel %vm672, %v656, 0
        %v1061 = vsel %vm672, %v657, 0
        %v1064 = vsel %vm672, %v658, 0
        %v1067 = vsel %vm672, %v659, 0
        %v1070 = vsel %vm672, %v660, 0
        %v1073 = vsel %vm672, %v661, 0
        %v1076 = vsel %vm672, %v662, 0
        %v1079 = vsel %vm672, %v663, 0
        %v1082 = vsel %vm672, %v664, 0
        %v1085 = vsel %vm672, %v665, 0
        %v1088 = vsel %vm672, %v666, 0
        %v1091 = vsel %vm672, %v667, 0
        %v1094 = vsel %vm672, %v668, 0
        %v1097 = vsel %vm672, %v669, 0
        %v1100 = vsel %vm672, %v670, 0
        %v1103 = vsel %vm672, %v671, 0
        %1105 = vmatprep.subr.mxu0 %v335
        %1106 = vmatpush1.msra.mxu0 %v333
        %1107 = vmatprep.subr.mxu0 %v341
        %1108 = vmatpush1.msra.mxu0 %v339
        %1109 = vmatprep.subr.mxu0 %v347
        %1110 = vmatpush1.msra.mxu0 %v345
        %1111 = vmatprep.subr.mxu0 %v353
        %1112 = vmatpush1.msra.mxu0 %v351
        %1113 = vmatprep.subr.mxu0 %v359
        %1114 = vmatpush1.msra.mxu0 %v357
        %1115 = vmatprep.subr.mxu0 %v365
        %1116 = vmatpush1.msra.mxu0 %v363
        %1117 = vmatprep.subr.mxu0 %v371
        %1118 = vmatpush1.msra.mxu0 %v369
        %1119 = vmatprep.subr.mxu0 %v377
        %1120 = vmatpush1.msra.mxu0 %v375
        %1121 = vmatprep.subr.mxu0 %v383
        %1122 = vmatpush1.msra.mxu0 %v381
        %1123 = vmatprep.subr.mxu0 %v389
        %1124 = vmatpush1.msra.mxu0 %v387
        %1125 = vmatprep.subr.mxu0 %v395
        %1126 = vmatpush1.msra.mxu0 %v393
        %1127 = vmatprep.subr.mxu0 %v401
        %1128 = vmatpush1.msra.mxu0 %v399
        %1129 = vmatprep.subr.mxu0 0.0
        %1130 = vmatpush1.msra.mxu0 0.0
        %1131 = vmatprep.subr.mxu0 0.0
        %1132 = vmatpush1.msra.mxu0 0.0
        %1133 = vmatprep.subr.mxu0 0.0
        %1134 = vmatpush1.msra.mxu0 0.0
        %1135 = vmatprep.subr.mxu0 0.0
        %1136 = vmatpush1.msra.mxu0 0.0
        %1137 = vmatprep.subr.mxu0 0.0
        %1138 = vmatpush1.msra.mxu0 0.0
        %1139 = vmatprep.subr.mxu0 0.0
        %1140 = vmatpush1.msra.mxu0 0.0
        %1141 = vmatprep.subr.mxu0 0.0
        %1142 = vmatpush1.msra.mxu0 0.0
        %1143 = vmatprep.subr.mxu0 0.0
        %1144 = vmatpush1.msra.mxu0 0.0
        %1145 = vmatprep.subr.mxu0 0.0
        %1146 = vmatpush1.msra.mxu0 0.0
        %1147 = vmatprep.subr.mxu0 0.0
        %1148 = vmatpush1.msra.mxu0 0.0
        %1149 = vmatprep.subr.mxu0 0.0
        %1150 = vmatpush1.msra.mxu0 0.0
        %1151 = vmatprep.subr.mxu0 0.0
        %1152 = vmatpush1.msra.mxu0 0.0
        %1153 = vmatprep.subr.mxu0 0.0
        %1154 = vmatpush1.msra.mxu0 0.0
        %1155 = vmatprep.subr.mxu0 0.0
        %1156 = vmatpush1.msra.mxu0 0.0
        %1157 = vmatprep.subr.mxu0 0.0
        %1158 = vmatpush1.msra.mxu0 0.0
        %1159 = vmatprep.subr.mxu0 0.0
        %1160 = vmatpush1.msra.mxu0 0.0
        %1161 = vmatprep.subr.mxu0 0.0
        %1162 = vmatpush1.msra.mxu0 0.0
        %1163 = vmatprep.subr.mxu0 0.0
        %1164 = vmatpush1.msra.mxu0 0.0
        %1165 = vmatprep.subr.mxu0 0.0
        %1166 = vmatpush1.msra.mxu0 0.0
        %1167 = vmatprep.subr.mxu0 0.0
        %1168 = vmatpush1.msra.mxu0 0.0
        %1169 = vmatprep.mubr.f32.mxu0 0.0
        %1170 = vmatmul.mubr.f32.gmra.mrb[0].mxu0 %v674
        %v1171 = vpop.f32.mrb[0].mxu0
        %v1172 = vadd.f32 0.0, %v1171
        %v1173 = vpop.f32.mrb[0].mxu0
        %v1174 = vadd.f32 0.0, %v1173
        %1175 = vmatprep.mubr.f32.mxu0 0.0
        %1176 = vmatmul.mubr.f32.gmra.mrb[0].mxu0 %v677
        %v1177 = vpop.f32.mrb[0].mxu0
        %v1178 = vadd.f32 0.0, %v1177
        %v1179 = vpop.f32.mrb[0].mxu0
        %v1180 = vadd.f32 0.0, %v1179
        %1181 = vmatprep.mubr.f32.mxu0 0.0
        %1182 = vmatmul.mubr.f32.gmra.mrb[0].mxu0 %v680
        %v1183 = vpop.f32.mrb[0].mxu0
        %v1184 = vadd.f32 0.0, %v1183
        %v1185 = vpop.f32.mrb[0].mxu0
        %v1186 = vadd.f32 0.0, %v1185
        %1187 = vmatprep.mubr.f32.mxu0 0.0
        %1188 = vmatmul.mubr.f32.gmra.mrb[0].mxu0 %v683
        %v1189 = vpop.f32.mrb[0].mxu0
        %v1190 = vadd.f32 0.0, %v1189
        %v1191 = vpop.f32.mrb[0].mxu0
        %v1192 = vadd.f32 0.0, %v1191
        %1193 = vmatprep.mubr.f32.mxu0 0.0
        %1194 = vmatmul.mubr.f32.gmra.mrb[0].mxu0 %v686
        %v1195 = vpop.f32.mrb[0].mxu0
        %v1196 = vadd.f32 0.0, %v1195
        %v1197 = vpop.f32.mrb[0].mxu0
        %v1198 = vadd.f32 0.0, %v1197
        %1199 = vmatprep.mubr.f32.mxu0 0.0
        %1200 = vmatmul.mubr.f32.gmra.mrb[0].mxu0 %v689
        %v1201 = vpop.f32.mrb[0].mxu0
        %v1202 = vadd.f32 0.0, %v1201
        %v1203 = vpop.f32.mrb[0].mxu0
        %v1204 = vadd.f32 0.0, %v1203
        %1205 = vmatprep.mubr.f32.mxu0 0.0
        %1206 = vmatmul.mubr.f32.gmra.mrb[0].mxu0 %v692
        %v1207 = vpop.f32.mrb[0].mxu0
        %v1208 = vadd.f32 0.0, %v1207
        %v1209 = vpop.f32.mrb[0].mxu0
        %v1210 = vadd.f32 0.0, %v1209
        %1211 = vmatprep.mubr.f32.mxu0 0.0
        %1212 = vmatmul.mubr.f32.gmra.mrb[0].mxu0 %v695
        %v1213 = vpop.f32.mrb[0].mxu0
        %v1214 = vadd.f32 0.0, %v1213
        %v1215 = vpop.f32.mrb[0].mxu0
        %v1216 = vadd.f32 0.0, %v1215
        %1217 = vmatprep.mubr.f32.mxu0 0.0
        %1218 = vmatmul.mubr.f32.gmra.mrb[0].mxu0 %v698
        %v1219 = vpop.f32.mrb[0].mxu0
        %v1220 = vadd.f32 0.0, %v1219
        %v1221 = vpop.f32.mrb[0].mxu0
        %v1222 = vadd.f32 0.0, %v1221
        %1223 = vmatprep.mubr.f32.mxu0 0.0
        %1224 = vmatmul.mubr.f32.gmra.mrb[0].mxu0 %v701
        %v1225 = vpop.f32.mrb[0].mxu0
        %v1226 = vadd.f32 0.0, %v1225
        %v1227 = vpop.f32.mrb[0].mxu0
        %v1228 = vadd.f32 0.0, %v1227
        %1229 = vmatprep.mubr.f32.mxu0 0.0
        %1230 = vmatmul.mubr.f32.gmra.mrb[0].mxu0 %v704
        %v1231 = vpop.f32.mrb[0].mxu0
        %v1232 = vadd.f32 0.0, %v1231
        %v1233 = vpop.f32.mrb[0].mxu0
        %v1234 = vadd.f32 0.0, %v1233
        %1235 = vmatprep.mubr.f32.mxu0 0.0
        %1236 = vmatmul.mubr.f32.gmra.mrb[0].mxu0 %v707
        %v1237 = vpop.f32.mrb[0].mxu0
        %v1238 = vadd.f32 0.0, %v1237
        %v1239 = vpop.f32.mrb[0].mxu0
        %v1240 = vadd.f32 0.0, %v1239
        %1241 = vmatprep.mubr.f32.mxu0 0.0
        %1242 = vmatmul.mubr.f32.gmra.mrb[0].mxu0 %v710
        %v1243 = vpop.f32.mrb[0].mxu0
        %v1244 = vadd.f32 0.0, %v1243
        %v1245 = vpop.f32.mrb[0].mxu0
        %v1246 = vadd.f32 0.0, %v1245
        %1247 = vmatprep.mubr.f32.mxu0 0.0
        %1248 = vmatmul.mubr.f32.gmra.mrb[0].mxu0 %v713
        %v1249 = vpop.f32.mrb[0].mxu0
        %v1250 = vadd.f32 0.0, %v1249
        %v1251 = vpop.f32.mrb[0].mxu0
        %v1252 = vadd.f32 0.0, %v1251
        %1253 = vmatprep.mubr.f32.mxu0 0.0
        %1254 = vmatmul.mubr.f32.gmra.mrb[0].mxu0 %v716
        %v1255 = vpop.f32.mrb[0].mxu0
        %v1256 = vadd.f32 0.0, %v1255
        %v1257 = vpop.f32.mrb[0].mxu0
        %v1258 = vadd.f32 0.0, %v1257
        %1259 = vmatprep.mubr.f32.mxu0 0.0
        %1260 = vmatmul.mubr.f32.gmra.mrb[0].mxu0 %v719
        %v1261 = vpop.f32.mrb[0].mxu0
        %v1262 = vadd.f32 0.0, %v1261
        %v1263 = vpop.f32.mrb[0].mxu0
        %v1264 = vadd.f32 0.0, %v1263
        %1265 = vmatprep.mubr.f32.mxu0 0.0
        %1266 = vmatmul.mubr.f32.gmra.mrb[0].mxu0 %v722
        %v1267 = vpop.f32.mrb[0].mxu0
        %v1268 = vadd.f32 0.0, %v1267
        %v1269 = vpop.f32.mrb[0].mxu0
        %v1270 = vadd.f32 0.0, %v1269
        %1271 = vmatprep.mubr.f32.mxu0 0.0
        %1272 = vmatmul.mubr.f32.gmra.mrb[0].mxu0 %v725
        %v1273 = vpop.f32.mrb[0].mxu0
        %v1274 = vadd.f32 0.0, %v1273
        %v1275 = vpop.f32.mrb[0].mxu0
        %v1276 = vadd.f32 0.0, %v1275
        %1277 = vmatprep.mubr.f32.mxu0 0.0
        %1278 = vmatmul.mubr.f32.gmra.mrb[0].mxu0 %v728
        %v1279 = vpop.f32.mrb[0].mxu0
        %v1280 = vadd.f32 0.0, %v1279
        %v1281 = vpop.f32.mrb[0].mxu0
        %v1282 = vadd.f32 0.0, %v1281
        %1283 = vmatprep.mubr.f32.mxu0 0.0
        %1284 = vmatmul.mubr.f32.gmra.mrb[0].mxu0 %v731
        %v1285 = vpop.f32.mrb[0].mxu0
        %v1286 = vadd.f32 0.0, %v1285
        %v1287 = vpop.f32.mrb[0].mxu0
        %v1288 = vadd.f32 0.0, %v1287
        %1289 = vmatprep.mubr.f32.mxu0 0.0
        %1290 = vmatmul.mubr.f32.gmra.mrb[0].mxu0 %v734
        %v1291 = vpop.f32.mrb[0].mxu0
        %v1292 = vadd.f32 0.0, %v1291
        %v1293 = vpop.f32.mrb[0].mxu0
        %v1294 = vadd.f32 0.0, %v1293
        %1295 = vmatprep.mubr.f32.mxu0 0.0
        %1296 = vmatmul.mubr.f32.gmra.mrb[0].mxu0 %v737
        %v1297 = vpop.f32.mrb[0].mxu0
        %v1298 = vadd.f32 0.0, %v1297
        %v1299 = vpop.f32.mrb[0].mxu0
        %v1300 = vadd.f32 0.0, %v1299
        %1301 = vmatprep.mubr.f32.mxu0 0.0
        %1302 = vmatmul.mubr.f32.gmra.mrb[0].mxu0 %v740
        %v1303 = vpop.f32.mrb[0].mxu0
        %v1304 = vadd.f32 0.0, %v1303
        %v1305 = vpop.f32.mrb[0].mxu0
        %v1306 = vadd.f32 0.0, %v1305
        %1307 = vmatprep.mubr.f32.mxu0 0.0
        %1308 = vmatmul.mubr.f32.gmra.mrb[0].mxu0 %v743
        %v1309 = vpop.f32.mrb[0].mxu0
        %v1310 = vadd.f32 0.0, %v1309
        %v1311 = vpop.f32.mrb[0].mxu0
        %v1312 = vadd.f32 0.0, %v1311
        %1313 = vmatprep.mubr.f32.mxu0 0.0
        %1314 = vmatmul.mubr.f32.gmra.mrb[0].mxu0 %v746
        %v1315 = vpop.f32.mrb[0].mxu0
        %v1316 = vadd.f32 0.0, %v1315
        %v1317 = vpop.f32.mrb[0].mxu0
        %v1318 = vadd.f32 0.0, %v1317
        %1319 = vmatprep.mubr.f32.mxu0 0.0
        %1320 = vmatmul.mubr.f32.gmra.mrb[0].mxu0 %v749
        %v1321 = vpop.f32.mrb[0].mxu0
        %v1322 = vadd.f32 0.0, %v1321
        %v1323 = vpop.f32.mrb[0].mxu0
        %v1324 = vadd.f32 0.0, %v1323
        %1325 = vmatprep.mubr.f32.mxu0 0.0
        %1326 = vmatmul.mubr.f32.gmra.mrb[0].mxu0 %v752
        %v1327 = vpop.f32.mrb[0].mxu0
        %v1328 = vadd.f32 0.0, %v1327
        %v1329 = vpop.f32.mrb[0].mxu0
        %v1330 = vadd.f32 0.0, %v1329
        %1331 = vmatprep.mubr.f32.mxu0 0.0
        %1332 = vmatmul.mubr.f32.gmra.mrb[0].mxu0 %v755
        %v1333 = vpop.f32.mrb[0].mxu0
        %v1334 = vadd.f32 0.0, %v1333
        %v1335 = vpop.f32.mrb[0].mxu0
        %v1336 = vadd.f32 0.0, %v1335
        %1337 = vmatprep.mubr.f32.mxu0 0.0
        %1338 = vmatmul.mubr.f32.gmra.mrb[0].mxu0 %v758
        %v1339 = vpop.f32.mrb[0].mxu0
        %v1340 = vadd.f32 0.0, %v1339
        %v1341 = vpop.f32.mrb[0].mxu0
        %v1342 = vadd.f32 0.0, %v1341
        %1343 = vmatprep.mubr.f32.mxu0 0.0
        %1344 = vmatmul.mubr.f32.gmra.mrb[0].mxu0 %v761
        %v1345 = vpop.f32.mrb[0].mxu0
        %v1346 = vadd.f32 0.0, %v1345
        %v1347 = vpop.f32.mrb[0].mxu0
        %v1348 = vadd.f32 0.0, %v1347
        %1349 = vmatprep.mubr.f32.mxu0 0.0
        %1350 = vmatmul.mubr.f32.gmra.mrb[0].mxu0 %v764
        %v1351 = vpop.f32.mrb[0].mxu0
        %v1352 = vadd.f32 0.0, %v1351
        %v1353 = vpop.f32.mrb[0].mxu0
        %v1354 = vadd.f32 0.0, %v1353
        %1355 = vmatprep.mubr.f32.mxu0 0.0
        %1356 = vmatmul.mubr.f32.gmra.mrb[0].mxu0 %v767
        %v1357 = vpop.f32.mrb[0].mxu0
        %v1358 = vadd.f32 0.0, %v1357
        %v1359 = vpop.f32.mrb[0].mxu0
        %v1360 = vadd.f32 0.0, %v1359
        %1361 = vmatprep.mubr.f32.mxu0 0.0
        %1362 = vmatmul.mubr.f32.gmra.mrb[0].mxu0 %v770
        %v1363 = vpop.f32.mrb[0].mxu0
        %v1364 = vadd.f32 0.0, %v1363
        %v1365 = vpop.f32.mrb[0].mxu0
        %v1366 = vadd.f32 0.0, %v1365
        %1367 = vmatprep.mubr.f32.mxu0 0.0
        %1368 = vmatmul.mubr.f32.gmra.mrb[0].mxu0 %v773
        %v1369 = vpop.f32.mrb[0].mxu0
        %v1370 = vadd.f32 0.0, %v1369
        %v1371 = vpop.f32.mrb[0].mxu0
        %v1372 = vadd.f32 0.0, %v1371
        %1373 = vmatprep.mubr.f32.mxu0 0.0
        %1374 = vmatmul.mubr.f32.gmra.mrb[0].mxu0 %v776
        %v1375 = vpop.f32.mrb[0].mxu0
        %v1376 = vadd.f32 0.0, %v1375
        %v1377 = vpop.f32.mrb[0].mxu0
        %v1378 = vadd.f32 0.0, %v1377
        %1379 = vmatprep.mubr.f32.mxu0 0.0
        %1380 = vmatmul.mubr.f32.gmra.mrb[0].mxu0 %v779
        %v1381 = vpop.f32.mrb[0].mxu0
        %v1382 = vadd.f32 0.0, %v1381
        %v1383 = vpop.f32.mrb[0].mxu0
        %v1384 = vadd.f32 0.0, %v1383
        %1385 = vmatprep.mubr.f32.mxu0 0.0
        %1386 = vmatmul.mubr.f32.gmra.mrb[0].mxu0 %v782
        %v1387 = vpop.f32.mrb[0].mxu0
        %v1388 = vadd.f32 0.0, %v1387
        %v1389 = vpop.f32.mrb[0].mxu0
        %v1390 = vadd.f32 0.0, %v1389
        %1391 = vmatprep.mubr.f32.mxu0 0.0
        %1392 = vmatmul.mubr.f32.gmra.mrb[0].mxu0 %v785
        %v1393 = vpop.f32.mrb[0].mxu0
        %v1394 = vadd.f32 0.0, %v1393
        %v1395 = vpop.f32.mrb[0].mxu0
        %v1396 = vadd.f32 0.0, %v1395
        %1397 = vmatprep.mubr.f32.mxu0 0.0
        %1398 = vmatmul.mubr.f32.gmra.mrb[0].mxu0 %v788
        %v1399 = vpop.f32.mrb[0].mxu0
        %v1400 = vadd.f32 0.0, %v1399
        %v1401 = vpop.f32.mrb[0].mxu0
        %v1402 = vadd.f32 0.0, %v1401
        %1403 = vmatprep.mubr.f32.mxu0 0.0
        %1404 = vmatmul.mubr.f32.gmra.mrb[0].mxu0 %v791
        %v1405 = vpop.f32.mrb[0].mxu0
        %v1406 = vadd.f32 0.0, %v1405
        %v1407 = vpop.f32.mrb[0].mxu0
        %v1408 = vadd.f32 0.0, %v1407
        %1409 = vmatprep.mubr.f32.mxu0 0.0
        %1410 = vmatmul.mubr.f32.gmra.mrb[0].mxu0 %v794
        %v1411 = vpop.f32.mrb[0].mxu0
        %v1412 = vadd.f32 0.0, %v1411
        %v1413 = vpop.f32.mrb[0].mxu0
        %v1414 = vadd.f32 0.0, %v1413
        %1415 = vmatprep.mubr.f32.mxu0 0.0
        %1416 = vmatmul.mubr.f32.gmra.mrb[0].mxu0 %v797
        %v1417 = vpop.f32.mrb[0].mxu0
        %v1418 = vadd.f32 0.0, %v1417
        %v1419 = vpop.f32.mrb[0].mxu0
        %v1420 = vadd.f32 0.0, %v1419
        %1421 = vmatprep.mubr.f32.mxu0 0.0
        %1422 = vmatmul.mubr.f32.gmra.mrb[0].mxu0 %v800
        %v1423 = vpop.f32.mrb[0].mxu0
        %v1424 = vadd.f32 0.0, %v1423
        %v1425 = vpop.f32.mrb[0].mxu0
        %v1426 = vadd.f32 0.0, %v1425
        %1427 = vmatprep.mubr.f32.mxu0 0.0
        %1428 = vmatmul.mubr.f32.gmra.mrb[0].mxu0 %v803
        %v1429 = vpop.f32.mrb[0].mxu0
        %v1430 = vadd.f32 0.0, %v1429
        %v1431 = vpop.f32.mrb[0].mxu0
        %v1432 = vadd.f32 0.0, %v1431
        %1433 = vmatprep.mubr.f32.mxu0 0.0
        %1434 = vmatmul.mubr.f32.gmra.mrb[0].mxu0 %v806
        %v1435 = vpop.f32.mrb[0].mxu0
        %v1436 = vadd.f32 0.0, %v1435
        %v1437 = vpop.f32.mrb[0].mxu0
        %v1438 = vadd.f32 0.0, %v1437
        %1439 = vmatprep.mubr.f32.mxu0 0.0
        %1440 = vmatmul.mubr.f32.gmra.mrb[0].mxu0 %v809
        %v1441 = vpop.f32.mrb[0].mxu0
        %v1442 = vadd.f32 0.0, %v1441
        %v1443 = vpop.f32.mrb[0].mxu0
        %v1444 = vadd.f32 0.0, %v1443
        %1445 = vmatprep.mubr.f32.mxu0 0.0
        %1446 = vmatmul.mubr.f32.gmra.mrb[0].mxu0 %v812
        %v1447 = vpop.f32.mrb[0].mxu0
        %v1448 = vadd.f32 0.0, %v1447
        %v1449 = vpop.f32.mrb[0].mxu0
        %v1450 = vadd.f32 0.0, %v1449
        %1451 = vmatprep.mubr.f32.mxu0 0.0
        %1452 = vmatmul.mubr.f32.gmra.mrb[0].mxu0 %v815
        %v1453 = vpop.f32.mrb[0].mxu0
        %v1454 = vadd.f32 0.0, %v1453
        %v1455 = vpop.f32.mrb[0].mxu0
        %v1456 = vadd.f32 0.0, %v1455
        %1457 = vmatprep.mubr.f32.mxu0 0.0
        %1458 = vmatmul.mubr.f32.gmra.mrb[0].mxu0 %v818
        %v1459 = vpop.f32.mrb[0].mxu0
        %v1460 = vadd.f32 0.0, %v1459
        %v1461 = vpop.f32.mrb[0].mxu0
        %v1462 = vadd.f32 0.0, %v1461
        %1463 = vmatprep.mubr.f32.mxu0 0.0
        %1464 = vmatmul.mubr.f32.gmra.mrb[0].mxu0 %v821
        %v1465 = vpop.f32.mrb[0].mxu0
        %v1466 = vadd.f32 0.0, %v1465
        %v1467 = vpop.f32.mrb[0].mxu0
        %v1468 = vadd.f32 0.0, %v1467
        %1469 = vmatprep.mubr.f32.mxu0 0.0
        %1470 = vmatmul.mubr.f32.gmra.mrb[0].mxu0 %v824
        %v1471 = vpop.f32.mrb[0].mxu0
        %v1472 = vadd.f32 0.0, %v1471
        %v1473 = vpop.f32.mrb[0].mxu0
        %v1474 = vadd.f32 0.0, %v1473
        %1475 = vmatprep.mubr.f32.mxu0 0.0
        %1476 = vmatmul.mubr.f32.gmra.mrb[0].mxu0 %v827
        %v1477 = vpop.f32.mrb[0].mxu0
        %v1478 = vadd.f32 0.0, %v1477
        %v1479 = vpop.f32.mrb[0].mxu0
        %v1480 = vadd.f32 0.0, %v1479
        %1481 = vmatprep.mubr.f32.mxu0 0.0
        %1482 = vmatmul.mubr.f32.gmra.mrb[0].mxu0 %v830
        %v1483 = vpop.f32.mrb[0].mxu0
        %v1484 = vadd.f32 0.0, %v1483
        %v1485 = vpop.f32.mrb[0].mxu0
        %v1486 = vadd.f32 0.0, %v1485
        %1487 = vmatprep.mubr.f32.mxu0 0.0
        %1488 = vmatmul.mubr.f32.gmra.mrb[0].mxu0 %v833
        %v1489 = vpop.f32.mrb[0].mxu0
        %v1490 = vadd.f32 0.0, %v1489
        %v1491 = vpop.f32.mrb[0].mxu0
        %v1492 = vadd.f32 0.0, %v1491
        %1493 = vmatprep.mubr.f32.mxu0 0.0
        %1494 = vmatmul.mubr.f32.gmra.mrb[0].mxu0 %v836
        %v1495 = vpop.f32.mrb[0].mxu0
        %v1496 = vadd.f32 0.0, %v1495
        %v1497 = vpop.f32.mrb[0].mxu0
        %v1498 = vadd.f32 0.0, %v1497
        %1499 = vmatprep.mubr.f32.mxu0 0.0
        %1500 = vmatmul.mubr.f32.gmra.mrb[0].mxu0 %v839
        %v1501 = vpop.f32.mrb[0].mxu0
        %v1502 = vadd.f32 0.0, %v1501
        %v1503 = vpop.f32.mrb[0].mxu0
        %v1504 = vadd.f32 0.0, %v1503
        %1505 = vmatprep.mubr.f32.mxu0 0.0
        %1506 = vmatmul.mubr.f32.gmra.mrb[0].mxu0 %v842
        %v1507 = vpop.f32.mrb[0].mxu0
        %v1508 = vadd.f32 0.0, %v1507
        %v1509 = vpop.f32.mrb[0].mxu0
        %v1510 = vadd.f32 0.0, %v1509
        %1511 = vmatprep.mubr.f32.mxu0 0.0
        %1512 = vmatmul.mubr.f32.gmra.mrb[0].mxu0 %v845
        %v1513 = vpop.f32.mrb[0].mxu0
        %v1514 = vadd.f32 0.0, %v1513
        %v1515 = vpop.f32.mrb[0].mxu0
        %v1516 = vadd.f32 0.0, %v1515
        %1517 = vmatprep.mubr.f32.mxu0 0.0
        %1518 = vmatmul.mubr.f32.gmra.mrb[0].mxu0 %v848
        %v1519 = vpop.f32.mrb[0].mxu0
        %v1520 = vadd.f32 0.0, %v1519
        %v1521 = vpop.f32.mrb[0].mxu0
        %v1522 = vadd.f32 0.0, %v1521
        %1523 = vmatprep.mubr.f32.mxu0 0.0
        %1524 = vmatmul.mubr.f32.gmra.mrb[0].mxu0 %v851
        %v1525 = vpop.f32.mrb[0].mxu0
        %v1526 = vadd.f32 0.0, %v1525
        %v1527 = vpop.f32.mrb[0].mxu0
        %v1528 = vadd.f32 0.0, %v1527
        %1529 = vmatprep.mubr.f32.mxu0 0.0
        %1530 = vmatmul.mubr.f32.gmra.mrb[0].mxu0 %v854
        %v1531 = vpop.f32.mrb[0].mxu0
        %v1532 = vadd.f32 0.0, %v1531
        %v1533 = vpop.f32.mrb[0].mxu0
        %v1534 = vadd.f32 0.0, %v1533
        %1535 = vmatprep.mubr.f32.mxu0 0.0
        %1536 = vmatmul.mubr.f32.gmra.mrb[0].mxu0 %v857
        %v1537 = vpop.f32.mrb[0].mxu0
        %v1538 = vadd.f32 0.0, %v1537
        %v1539 = vpop.f32.mrb[0].mxu0
        %v1540 = vadd.f32 0.0, %v1539
        %1541 = vmatprep.mubr.f32.mxu0 0.0
        %1542 = vmatmul.mubr.f32.gmra.mrb[0].mxu0 %v860
        %v1543 = vpop.f32.mrb[0].mxu0
        %v1544 = vadd.f32 0.0, %v1543
        %v1545 = vpop.f32.mrb[0].mxu0
        %v1546 = vadd.f32 0.0, %v1545
        %1547 = vmatprep.mubr.f32.mxu0 0.0
        %1548 = vmatmul.mubr.f32.gmra.mrb[0].mxu0 %v863
        %v1549 = vpop.f32.mrb[0].mxu0
        %v1550 = vadd.f32 0.0, %v1549
        %v1551 = vpop.f32.mrb[0].mxu0
        %v1552 = vadd.f32 0.0, %v1551
        %1553 = vmatprep.mubr.f32.mxu0 0.0
        %1554 = vmatmul.mubr.f32.gmra.mrb[0].mxu0 %v866
        %v1555 = vpop.f32.mrb[0].mxu0
        %v1556 = vadd.f32 0.0, %v1555
        %v1557 = vpop.f32.mrb[0].mxu0
        %v1558 = vadd.f32 0.0, %v1557
        %1559 = vmatprep.mubr.f32.mxu0 0.0
        %1560 = vmatmul.mubr.f32.gmra.mrb[0].mxu0 %v869
        %v1561 = vpop.f32.mrb[0].mxu0
        %v1562 = vadd.f32 0.0, %v1561
        %v1563 = vpop.f32.mrb[0].mxu0
        %v1564 = vadd.f32 0.0, %v1563
        %1565 = vmatprep.mubr.f32.mxu0 0.0
        %1566 = vmatmul.mubr.f32.gmra.mrb[0].mxu0 %v872
        %v1567 = vpop.f32.mrb[0].mxu0
        %v1568 = vadd.f32 0.0, %v1567
        %v1569 = vpop.f32.mrb[0].mxu0
        %v1570 = vadd.f32 0.0, %v1569
        %1571 = vmatprep.mubr.f32.mxu0 0.0
        %1572 = vmatmul.mubr.f32.gmra.mrb[0].mxu0 %v875
        %v1573 = vpop.f32.mrb[0].mxu0
        %v1574 = vadd.f32 0.0, %v1573
        %v1575 = vpop.f32.mrb[0].mxu0
        %v1576 = vadd.f32 0.0, %v1575
        %1577 = vmatprep.mubr.f32.mxu0 0.0
        %1578 = vmatmul.mubr.f32.gmra.mrb[0].mxu0 %v878
        %v1579 = vpop.f32.mrb[0].mxu0
        %v1580 = vadd.f32 0.0, %v1579
        %v1581 = vpop.f32.mrb[0].mxu0
        %v1582 = vadd.f32 0.0, %v1581
        %1583 = vmatprep.mubr.f32.mxu0 0.0
        %1584 = vmatmul.mubr.f32.gmra.mrb[0].mxu0 %v881
        %v1585 = vpop.f32.mrb[0].mxu0
        %v1586 = vadd.f32 0.0, %v1585
        %v1587 = vpop.f32.mrb[0].mxu0
        %v1588 = vadd.f32 0.0, %v1587
        %1589 = vmatprep.mubr.f32.mxu0 0.0
        %1590 = vmatmul.mubr.f32.gmra.mrb[0].mxu0 %v884
        %v1591 = vpop.f32.mrb[0].mxu0
        %v1592 = vadd.f32 0.0, %v1591
        %v1593 = vpop.f32.mrb[0].mxu0
        %v1594 = vadd.f32 0.0, %v1593
        %1595 = vmatprep.mubr.f32.mxu0 0.0
        %1596 = vmatmul.mubr.f32.gmra.mrb[0].mxu0 %v887
        %v1597 = vpop.f32.mrb[0].mxu0
        %v1598 = vadd.f32 0.0, %v1597
        %v1599 = vpop.f32.mrb[0].mxu0
        %v1600 = vadd.f32 0.0, %v1599
        %1601 = vmatprep.mubr.f32.mxu0 0.0
        %1602 = vmatmul.mubr.f32.gmra.mrb[0].mxu0 %v890
        %v1603 = vpop.f32.mrb[0].mxu0
        %v1604 = vadd.f32 0.0, %v1603
        %v1605 = vpop.f32.mrb[0].mxu0
        %v1606 = vadd.f32 0.0, %v1605
        %1607 = vmatprep.mubr.f32.mxu0 0.0
        %1608 = vmatmul.mubr.f32.gmra.mrb[0].mxu0 %v893
        %v1609 = vpop.f32.mrb[0].mxu0
        %v1610 = vadd.f32 0.0, %v1609
        %v1611 = vpop.f32.mrb[0].mxu0
        %v1612 = vadd.f32 0.0, %v1611
        %1613 = vmatprep.mubr.f32.mxu0 0.0
        %1614 = vmatmul.mubr.f32.gmra.mrb[0].mxu0 %v896
        %v1615 = vpop.f32.mrb[0].mxu0
        %v1616 = vadd.f32 0.0, %v1615
        %v1617 = vpop.f32.mrb[0].mxu0
        %v1618 = vadd.f32 0.0, %v1617
        %1619 = vmatprep.mubr.f32.mxu0 0.0
        %1620 = vmatmul.mubr.f32.gmra.mrb[0].mxu0 %v899
        %v1621 = vpop.f32.mrb[0].mxu0
        %v1622 = vadd.f32 0.0, %v1621
        %v1623 = vpop.f32.mrb[0].mxu0
        %v1624 = vadd.f32 0.0, %v1623
        %1625 = vmatprep.mubr.f32.mxu0 0.0
        %1626 = vmatmul.mubr.f32.gmra.mrb[0].mxu0 %v902
        %v1627 = vpop.f32.mrb[0].mxu0
        %v1628 = vadd.f32 0.0, %v1627
        %v1629 = vpop.f32.mrb[0].mxu0
        %v1630 = vadd.f32 0.0, %v1629
        %1631 = vmatprep.mubr.f32.mxu0 0.0
        %1632 = vmatmul.mubr.f32.gmra.mrb[0].mxu0 %v905
        %v1633 = vpop.f32.mrb[0].mxu0
        %v1634 = vadd.f32 0.0, %v1633
        %v1635 = vpop.f32.mrb[0].mxu0
        %v1636 = vadd.f32 0.0, %v1635
        %1637 = vmatprep.mubr.f32.mxu0 0.0
        %1638 = vmatmul.mubr.f32.gmra.mrb[0].mxu0 %v908
        %v1639 = vpop.f32.mrb[0].mxu0
        %v1640 = vadd.f32 0.0, %v1639
        %v1641 = vpop.f32.mrb[0].mxu0
        %v1642 = vadd.f32 0.0, %v1641
        %1643 = vmatprep.mubr.f32.mxu0 0.0
        %1644 = vmatmul.mubr.f32.gmra.mrb[0].mxu0 %v911
        %v1645 = vpop.f32.mrb[0].mxu0
        %v1646 = vadd.f32 0.0, %v1645
        %v1647 = vpop.f32.mrb[0].mxu0
        %v1648 = vadd.f32 0.0, %v1647
        %1649 = vmatprep.mubr.f32.mxu0 0.0
        %1650 = vmatmul.mubr.f32.gmra.mrb[0].mxu0 %v914
        %v1651 = vpop.f32.mrb[0].mxu0
        %v1652 = vadd.f32 0.0, %v1651
        %v1653 = vpop.f32.mrb[0].mxu0
        %v1654 = vadd.f32 0.0, %v1653
        %1655 = vmatprep.mubr.f32.mxu0 0.0
        %1656 = vmatmul.mubr.f32.gmra.mrb[0].mxu0 %v917
        %v1657 = vpop.f32.mrb[0].mxu0
        %v1658 = vadd.f32 0.0, %v1657
        %v1659 = vpop.f32.mrb[0].mxu0
        %v1660 = vadd.f32 0.0, %v1659
        %1661 = vmatprep.mubr.f32.mxu0 0.0
        %1662 = vmatmul.mubr.f32.gmra.mrb[0].mxu0 %v920
        %v1663 = vpop.f32.mrb[0].mxu0
        %v1664 = vadd.f32 0.0, %v1663
        %v1665 = vpop.f32.mrb[0].mxu0
        %v1666 = vadd.f32 0.0, %v1665
        %1667 = vmatprep.mubr.f32.mxu0 0.0
        %1668 = vmatmul.mubr.f32.gmra.mrb[0].mxu0 %v923
        %v1669 = vpop.f32.mrb[0].mxu0
        %v1670 = vadd.f32 0.0, %v1669
        %v1671 = vpop.f32.mrb[0].mxu0
        %v1672 = vadd.f32 0.0, %v1671
        %1673 = vmatprep.mubr.f32.mxu0 0.0
        %1674 = vmatmul.mubr.f32.gmra.mrb[0].mxu0 %v926
        %v1675 = vpop.f32.mrb[0].mxu0
        %v1676 = vadd.f32 0.0, %v1675
        %v1677 = vpop.f32.mrb[0].mxu0
        %v1678 = vadd.f32 0.0, %v1677
        %1679 = vmatprep.mubr.f32.mxu0 0.0
        %1680 = vmatmul.mubr.f32.gmra.mrb[0].mxu0 %v929
        %v1681 = vpop.f32.mrb[0].mxu0
        %v1682 = vadd.f32 0.0, %v1681
        %v1683 = vpop.f32.mrb[0].mxu0
        %v1684 = vadd.f32 0.0, %v1683
        %1685 = vmatprep.mubr.f32.mxu0 0.0
        %1686 = vmatmul.mubr.f32.gmra.mrb[0].mxu0 %v932
        %v1687 = vpop.f32.mrb[0].mxu0
        %v1688 = vadd.f32 0.0, %v1687
        %v1689 = vpop.f32.mrb[0].mxu0
        %v1690 = vadd.f32 0.0, %v1689
        %1691 = vmatprep.mubr.f32.mxu0 0.0
        %1692 = vmatmul.mubr.f32.gmra.mrb[0].mxu0 %v935
        %v1693 = vpop.f32.mrb[0].mxu0
        %v1694 = vadd.f32 0.0, %v1693
        %v1695 = vpop.f32.mrb[0].mxu0
        %v1696 = vadd.f32 0.0, %v1695
        %1697 = vmatprep.mubr.f32.mxu0 0.0
        %1698 = vmatmul.mubr.f32.gmra.mrb[0].mxu0 %v938
        %v1699 = vpop.f32.mrb[0].mxu0
        %v1700 = vadd.f32 0.0, %v1699
        %v1701 = vpop.f32.mrb[0].mxu0
        %v1702 = vadd.f32 0.0, %v1701
        %1703 = vmatprep.mubr.f32.mxu0 0.0
        %1704 = vmatmul.mubr.f32.gmra.mrb[0].mxu0 %v941
        %v1705 = vpop.f32.mrb[0].mxu0
        %v1706 = vadd.f32 0.0, %v1705
        %v1707 = vpop.f32.mrb[0].mxu0
        %v1708 = vadd.f32 0.0, %v1707
        %1709 = vmatprep.mubr.f32.mxu0 0.0
        %1710 = vmatmul.mubr.f32.gmra.mrb[0].mxu0 %v944
        %v1711 = vpop.f32.mrb[0].mxu0
        %v1712 = vadd.f32 0.0, %v1711
        %v1713 = vpop.f32.mrb[0].mxu0
        %v1714 = vadd.f32 0.0, %v1713
        %1715 = vmatprep.mubr.f32.mxu0 0.0
        %1716 = vmatmul.mubr.f32.gmra.mrb[0].mxu0 %v947
        %v1717 = vpop.f32.mrb[0].mxu0
        %v1718 = vadd.f32 0.0, %v1717
        %v1719 = vpop.f32.mrb[0].mxu0
        %v1720 = vadd.f32 0.0, %v1719
        %1721 = vmatprep.mubr.f32.mxu0 0.0
        %1722 = vmatmul.mubr.f32.gmra.mrb[0].mxu0 %v950
        %v1723 = vpop.f32.mrb[0].mxu0
        %v1724 = vadd.f32 0.0, %v1723
        %v1725 = vpop.f32.mrb[0].mxu0
        %v1726 = vadd.f32 0.0, %v1725
        %1727 = vmatprep.mubr.f32.mxu0 0.0
        %1728 = vmatmul.mubr.f32.gmra.mrb[0].mxu0 %v953
        %v1729 = vpop.f32.mrb[0].mxu0
        %v1730 = vadd.f32 0.0, %v1729
        %v1731 = vpop.f32.mrb[0].mxu0
        %v1732 = vadd.f32 0.0, %v1731
        %1733 = vmatprep.mubr.f32.mxu0 0.0
        %1734 = vmatmul.mubr.f32.gmra.mrb[0].mxu0 %v956
        %v1735 = vpop.f32.mrb[0].mxu0
        %v1736 = vadd.f32 0.0, %v1735
        %v1737 = vpop.f32.mrb[0].mxu0
        %v1738 = vadd.f32 0.0, %v1737
        %1739 = vmatprep.mubr.f32.mxu0 0.0
        %1740 = vmatmul.mubr.f32.gmra.mrb[0].mxu0 %v959
        %v1741 = vpop.f32.mrb[0].mxu0
        %v1742 = vadd.f32 0.0, %v1741
        %v1743 = vpop.f32.mrb[0].mxu0
        %v1744 = vadd.f32 0.0, %v1743
        %1745 = vmatprep.mubr.f32.mxu0 0.0
        %1746 = vmatmul.mubr.f32.gmra.mrb[0].mxu0 %v962
        %v1747 = vpop.f32.mrb[0].mxu0
        %v1748 = vadd.f32 0.0, %v1747
        %v1749 = vpop.f32.mrb[0].mxu0
        %v1750 = vadd.f32 0.0, %v1749
        %1751 = vmatprep.mubr.f32.mxu0 0.0
        %1752 = vmatmul.mubr.f32.gmra.mrb[0].mxu0 %v965
        %v1753 = vpop.f32.mrb[0].mxu0
        %v1754 = vadd.f32 0.0, %v1753
        %v1755 = vpop.f32.mrb[0].mxu0
        %v1756 = vadd.f32 0.0, %v1755
        %1757 = vmatprep.mubr.f32.mxu0 0.0
        %1758 = vmatmul.mubr.f32.gmra.mrb[0].mxu0 %v968
        %v1759 = vpop.f32.mrb[0].mxu0
        %v1760 = vadd.f32 0.0, %v1759
        %v1761 = vpop.f32.mrb[0].mxu0
        %v1762 = vadd.f32 0.0, %v1761
        %1763 = vmatprep.mubr.f32.mxu0 0.0
        %1764 = vmatmul.mubr.f32.gmra.mrb[0].mxu0 %v971
        %v1765 = vpop.f32.mrb[0].mxu0
        %v1766 = vadd.f32 0.0, %v1765
        %v1767 = vpop.f32.mrb[0].mxu0
        %v1768 = vadd.f32 0.0, %v1767
        %1769 = vmatprep.mubr.f32.mxu0 0.0
        %1770 = vmatmul.mubr.f32.gmra.mrb[0].mxu0 %v974
        %v1771 = vpop.f32.mrb[0].mxu0
        %v1772 = vadd.f32 0.0, %v1771
        %v1773 = vpop.f32.mrb[0].mxu0
        %v1774 = vadd.f32 0.0, %v1773
        %1775 = vmatprep.mubr.f32.mxu0 0.0
        %1776 = vmatmul.mubr.f32.gmra.mrb[0].mxu0 %v977
        %v1777 = vpop.f32.mrb[0].mxu0
        %v1778 = vadd.f32 0.0, %v1777
        %v1779 = vpop.f32.mrb[0].mxu0
        %v1780 = vadd.f32 0.0, %v1779
        %1781 = vmatprep.mubr.f32.mxu0 0.0
        %1782 = vmatmul.mubr.f32.gmra.mrb[0].mxu0 %v980
        %v1783 = vpop.f32.mrb[0].mxu0
        %v1784 = vadd.f32 0.0, %v1783
        %v1785 = vpop.f32.mrb[0].mxu0
        %v1786 = vadd.f32 0.0, %v1785
        %1787 = vmatprep.mubr.f32.mxu0 0.0
        %1788 = vmatmul.mubr.f32.gmra.mrb[0].mxu0 %v983
        %v1789 = vpop.f32.mrb[0].mxu0
        %v1790 = vadd.f32 0.0, %v1789
        %v1791 = vpop.f32.mrb[0].mxu0
        %v1792 = vadd.f32 0.0, %v1791
        %1793 = vmatprep.mubr.f32.mxu0 0.0
        %1794 = vmatmul.mubr.f32.gmra.mrb[0].mxu0 %v986
        %v1795 = vpop.f32.mrb[0].mxu0
        %v1796 = vadd.f32 0.0, %v1795
        %v1797 = vpop.f32.mrb[0].mxu0
        %v1798 = vadd.f32 0.0, %v1797
        %1799 = vmatprep.mubr.f32.mxu0 0.0
        %1800 = vmatmul.mubr.f32.gmra.mrb[0].mxu0 %v989
        %v1801 = vpop.f32.mrb[0].mxu0
        %v1802 = vadd.f32 0.0, %v1801
        %v1803 = vpop.f32.mrb[0].mxu0
        %v1804 = vadd.f32 0.0, %v1803
        %1805 = vmatprep.mubr.f32.mxu0 0.0
        %1806 = vmatmul.mubr.f32.gmra.mrb[0].mxu0 %v992
        %v1807 = vpop.f32.mrb[0].mxu0
        %v1808 = vadd.f32 0.0, %v1807
        %v1809 = vpop.f32.mrb[0].mxu0
        %v1810 = vadd.f32 0.0, %v1809
        %1811 = vmatprep.mubr.f32.mxu0 0.0
        %1812 = vmatmul.mubr.f32.gmra.mrb[0].mxu0 %v995
        %v1813 = vpop.f32.mrb[0].mxu0
        %v1814 = vadd.f32 0.0, %v1813
        %v1815 = vpop.f32.mrb[0].mxu0
        %v1816 = vadd.f32 0.0, %v1815
        %1817 = vmatprep.mubr.f32.mxu0 0.0
        %1818 = vmatmul.mubr.f32.gmra.mrb[0].mxu0 %v998
        %v1819 = vpop.f32.mrb[0].mxu0
        %v1820 = vadd.f32 0.0, %v1819
        %v1821 = vpop.f32.mrb[0].mxu0
        %v1822 = vadd.f32 0.0, %v1821
        %1823 = vmatprep.mubr.f32.mxu0 0.0
        %1824 = vmatmul.mubr.f32.gmra.mrb[0].mxu0 %v1001
        %v1825 = vpop.f32.mrb[0].mxu0
        %v1826 = vadd.f32 0.0, %v1825
        %v1827 = vpop.f32.mrb[0].mxu0
        %v1828 = vadd.f32 0.0, %v1827
        %1829 = vmatprep.mubr.f32.mxu0 0.0
        %1830 = vmatmul.mubr.f32.gmra.mrb[0].mxu0 %v1004
        %v1831 = vpop.f32.mrb[0].mxu0
        %v1832 = vadd.f32 0.0, %v1831
        %v1833 = vpop.f32.mrb[0].mxu0
        %v1834 = vadd.f32 0.0, %v1833
        %1835 = vmatprep.mubr.f32.mxu0 0.0
        %1836 = vmatmul.mubr.f32.gmra.mrb[0].mxu0 %v1007
        %v1837 = vpop.f32.mrb[0].mxu0
        %v1838 = vadd.f32 0.0, %v1837
        %v1839 = vpop.f32.mrb[0].mxu0
        %v1840 = vadd.f32 0.0, %v1839
        %1841 = vmatprep.mubr.f32.mxu0 0.0
        %1842 = vmatmul.mubr.f32.gmra.mrb[0].mxu0 %v1010
        %v1843 = vpop.f32.mrb[0].mxu0
        %v1844 = vadd.f32 0.0, %v1843
        %v1845 = vpop.f32.mrb[0].mxu0
        %v1846 = vadd.f32 0.0, %v1845
        %1847 = vmatprep.mubr.f32.mxu0 0.0
        %1848 = vmatmul.mubr.f32.gmra.mrb[0].mxu0 %v1013
        %v1849 = vpop.f32.mrb[0].mxu0
        %v1850 = vadd.f32 0.0, %v1849
        %v1851 = vpop.f32.mrb[0].mxu0
        %v1852 = vadd.f32 0.0, %v1851
        %1853 = vmatprep.mubr.f32.mxu0 0.0
        %1854 = vmatmul.mubr.f32.gmra.mrb[0].mxu0 %v1016
        %v1855 = vpop.f32.mrb[0].mxu0
        %v1856 = vadd.f32 0.0, %v1855
        %v1857 = vpop.f32.mrb[0].mxu0
        %v1858 = vadd.f32 0.0, %v1857
        %1859 = vmatprep.mubr.f32.mxu0 0.0
        %1860 = vmatmul.mubr.f32.gmra.mrb[0].mxu0 %v1019
        %v1861 = vpop.f32.mrb[0].mxu0
        %v1862 = vadd.f32 0.0, %v1861
        %v1863 = vpop.f32.mrb[0].mxu0
        %v1864 = vadd.f32 0.0, %v1863
        %1865 = vmatprep.mubr.f32.mxu0 0.0
        %1866 = vmatmul.mubr.f32.gmra.mrb[0].mxu0 %v1022
        %v1867 = vpop.f32.mrb[0].mxu0
        %v1868 = vadd.f32 0.0, %v1867
        %v1869 = vpop.f32.mrb[0].mxu0
        %v1870 = vadd.f32 0.0, %v1869
        %1871 = vmatprep.mubr.f32.mxu0 0.0
        %1872 = vmatmul.mubr.f32.gmra.mrb[0].mxu0 %v1025
        %v1873 = vpop.f32.mrb[0].mxu0
        %v1874 = vadd.f32 0.0, %v1873
        %v1875 = vpop.f32.mrb[0].mxu0
        %v1876 = vadd.f32 0.0, %v1875
        %1877 = vmatprep.mubr.f32.mxu0 0.0
        %1878 = vmatmul.mubr.f32.gmra.mrb[0].mxu0 %v1028
        %v1879 = vpop.f32.mrb[0].mxu0
        %v1880 = vadd.f32 0.0, %v1879
        %v1881 = vpop.f32.mrb[0].mxu0
        %v1882 = vadd.f32 0.0, %v1881
        %1883 = vmatprep.mubr.f32.mxu0 0.0
        %1884 = vmatmul.mubr.f32.gmra.mrb[0].mxu0 %v1031
        %v1885 = vpop.f32.mrb[0].mxu0
        %v1886 = vadd.f32 0.0, %v1885
        %v1887 = vpop.f32.mrb[0].mxu0
        %v1888 = vadd.f32 0.0, %v1887
        %1889 = vmatprep.mubr.f32.mxu0 0.0
        %1890 = vmatmul.mubr.f32.gmra.mrb[0].mxu0 %v1034
        %v1891 = vpop.f32.mrb[0].mxu0
        %v1892 = vadd.f32 0.0, %v1891
        %v1893 = vpop.f32.mrb[0].mxu0
        %v1894 = vadd.f32 0.0, %v1893
        %1895 = vmatprep.mubr.f32.mxu0 0.0
        %1896 = vmatmul.mubr.f32.gmra.mrb[0].mxu0 %v1037
        %v1897 = vpop.f32.mrb[0].mxu0
        %v1898 = vadd.f32 0.0, %v1897
        %v1899 = vpop.f32.mrb[0].mxu0
        %v1900 = vadd.f32 0.0, %v1899
        %1901 = vmatprep.mubr.f32.mxu0 0.0
        %1902 = vmatmul.mubr.f32.gmra.mrb[0].mxu0 %v1040
        %v1903 = vpop.f32.mrb[0].mxu0
        %v1904 = vadd.f32 0.0, %v1903
        %v1905 = vpop.f32.mrb[0].mxu0
        %v1906 = vadd.f32 0.0, %v1905
        %1907 = vmatprep.mubr.f32.mxu0 0.0
        %1908 = vmatmul.mubr.f32.gmra.mrb[0].mxu0 %v1043
        %v1909 = vpop.f32.mrb[0].mxu0
        %v1910 = vadd.f32 0.0, %v1909
        %v1911 = vpop.f32.mrb[0].mxu0
        %v1912 = vadd.f32 0.0, %v1911
        %1913 = vmatprep.mubr.f32.mxu0 0.0
        %1914 = vmatmul.mubr.f32.gmra.mrb[0].mxu0 %v1046
        %v1915 = vpop.f32.mrb[0].mxu0
        %v1916 = vadd.f32 0.0, %v1915
        %v1917 = vpop.f32.mrb[0].mxu0
        %v1918 = vadd.f32 0.0, %v1917
        %1919 = vmatprep.mubr.f32.mxu0 0.0
        %1920 = vmatmul.mubr.f32.gmra.mrb[0].mxu0 %v1049
        %v1921 = vpop.f32.mrb[0].mxu0
        %v1922 = vadd.f32 0.0, %v1921
        %v1923 = vpop.f32.mrb[0].mxu0
        %v1924 = vadd.f32 0.0, %v1923
        %1925 = vmatprep.mubr.f32.mxu0 0.0
        %1926 = vmatmul.mubr.f32.gmra.mrb[0].mxu0 %v1052
        %v1927 = vpop.f32.mrb[0].mxu0
        %v1928 = vadd.f32 0.0, %v1927
        %v1929 = vpop.f32.mrb[0].mxu0
        %v1930 = vadd.f32 0.0, %v1929
        %1931 = vmatprep.mubr.f32.mxu0 0.0
        %1932 = vmatmul.mubr.f32.gmra.mrb[0].mxu0 %v1055
        %v1933 = vpop.f32.mrb[0].mxu0
        %v1934 = vadd.f32 0.0, %v1933
        %v1935 = vpop.f32.mrb[0].mxu0
        %v1936 = vadd.f32 0.0, %v1935
        %1937 = vmatprep.mubr.f32.mxu0 0.0
        %1938 = vmatmul.mubr.f32.gmra.mrb[0].mxu0 %v1058
        %v1939 = vpop.f32.mrb[0].mxu0
        %v1940 = vadd.f32 0.0, %v1939
        %v1941 = vpop.f32.mrb[0].mxu0
        %v1942 = vadd.f32 0.0, %v1941
        %1943 = vmatprep.mubr.f32.mxu0 0.0
        %1944 = vmatmul.mubr.f32.gmra.mrb[0].mxu0 %v1061
        %v1945 = vpop.f32.mrb[0].mxu0
        %v1946 = vadd.f32 0.0, %v1945
        %v1947 = vpop.f32.mrb[0].mxu0
        %v1948 = vadd.f32 0.0, %v1947
        %1949 = vmatprep.mubr.f32.mxu0 0.0
        %1950 = vmatmul.mubr.f32.gmra.mrb[0].mxu0 %v1064
        %v1951 = vpop.f32.mrb[0].mxu0
        %v1952 = vadd.f32 0.0, %v1951
        %v1953 = vpop.f32.mrb[0].mxu0
        %v1954 = vadd.f32 0.0, %v1953
        %1955 = vmatprep.mubr.f32.mxu0 0.0
        %1956 = vmatmul.mubr.f32.gmra.mrb[0].mxu0 %v1067
        %v1957 = vpop.f32.mrb[0].mxu0
        %v1958 = vadd.f32 0.0, %v1957
        %v1959 = vpop.f32.mrb[0].mxu0
        %v1960 = vadd.f32 0.0, %v1959
        %1961 = vmatprep.mubr.f32.mxu0 0.0
        %1962 = vmatmul.mubr.f32.gmra.mrb[0].mxu0 %v1070
        %v1963 = vpop.f32.mrb[0].mxu0
        %v1964 = vadd.f32 0.0, %v1963
        %v1965 = vpop.f32.mrb[0].mxu0
        %v1966 = vadd.f32 0.0, %v1965
        %1967 = vmatprep.mubr.f32.mxu0 0.0
        %1968 = vmatmul.mubr.f32.gmra.mrb[0].mxu0 %v1073
        %v1969 = vpop.f32.mrb[0].mxu0
        %v1970 = vadd.f32 0.0, %v1969
        %v1971 = vpop.f32.mrb[0].mxu0
        %v1972 = vadd.f32 0.0, %v1971
        %1973 = vmatprep.mubr.f32.mxu0 0.0
        %1974 = vmatmul.mubr.f32.gmra.mrb[0].mxu0 %v1076
        %v1975 = vpop.f32.mrb[0].mxu0
        %v1976 = vadd.f32 0.0, %v1975
        %v1977 = vpop.f32.mrb[0].mxu0
        %v1978 = vadd.f32 0.0, %v1977
        %1979 = vmatprep.mubr.f32.mxu0 0.0
        %1980 = vmatmul.mubr.f32.gmra.mrb[0].mxu0 %v1079
        %v1981 = vpop.f32.mrb[0].mxu0
        %v1982 = vadd.f32 0.0, %v1981
        %v1983 = vpop.f32.mrb[0].mxu0
        %v1984 = vadd.f32 0.0, %v1983
        %1985 = vmatprep.mubr.f32.mxu0 0.0
        %1986 = vmatmul.mubr.f32.gmra.mrb[0].mxu0 %v1082
        %v1987 = vpop.f32.mrb[0].mxu0
        %v1988 = vadd.f32 0.0, %v1987
        %v1989 = vpop.f32.mrb[0].mxu0
        %v1990 = vadd.f32 0.0, %v1989
        %1991 = vmatprep.mubr.f32.mxu0 0.0
        %1992 = vmatmul.mubr.f32.gmra.mrb[0].mxu0 %v1085
        %v1993 = vpop.f32.mrb[0].mxu0
        %v1994 = vadd.f32 0.0, %v1993
        %v1995 = vpop.f32.mrb[0].mxu0
        %v1996 = vadd.f32 0.0, %v1995
        %1997 = vmatprep.mubr.f32.mxu0 0.0
        %1998 = vmatmul.mubr.f32.gmra.mrb[0].mxu0 %v1088
        %v1999 = vpop.f32.mrb[0].mxu0
        %v2000 = vadd.f32 0.0, %v1999
        %v2001 = vpop.f32.mrb[0].mxu0
        %v2002 = vadd.f32 0.0, %v2001
        %2003 = vmatprep.mubr.f32.mxu0 0.0
        %2004 = vmatmul.mubr.f32.gmra.mrb[0].mxu0 %v1091
        %v2005 = vpop.f32.mrb[0].mxu0
        %v2006 = vadd.f32 0.0, %v2005
        %v2007 = vpop.f32.mrb[0].mxu0
        %v2008 = vadd.f32 0.0, %v2007
        %2009 = vmatprep.mubr.f32.mxu0 0.0
        %2010 = vmatmul.mubr.f32.gmra.mrb[0].mxu0 %v1094
        %v2011 = vpop.f32.mrb[0].mxu0
        %v2012 = vadd.f32 0.0, %v2011
        %v2013 = vpop.f32.mrb[0].mxu0
        %v2014 = vadd.f32 0.0, %v2013
        %2015 = vmatprep.mubr.f32.mxu0 0.0
        %2016 = vmatmul.mubr.f32.gmra.mrb[0].mxu0 %v1097
        %v2017 = vpop.f32.mrb[0].mxu0
        %v2018 = vadd.f32 0.0, %v2017
        %v2019 = vpop.f32.mrb[0].mxu0
        %v2020 = vadd.f32 0.0, %v2019
        %2021 = vmatprep.mubr.f32.mxu0 0.0
        %2022 = vmatmul.mubr.f32.gmra.mrb[0].mxu0 %v1100
        %v2023 = vpop.f32.mrb[0].mxu0
        %v2024 = vadd.f32 0.0, %v2023
        %v2025 = vpop.f32.mrb[0].mxu0
        %v2026 = vadd.f32 0.0, %v2025
        %2027 = vmatprep.mubr.f32.mxu0 0.0
        %2028 = vmatmul.mubr.f32.gmra.mrb[0].mxu0 %v1103
        %v2029 = vpop.f32.mrb[0].mxu0
        %v2030 = vadd.f32 0.0, %v2029
        %v2031 = vpop.f32.mrb[0].mxu0
        %v2032 = vadd.f32 0.0, %v2031
        %2033 = vdwg.mxu0
        %2034 = vmatprep.subr.mxu0 0.0
        %2035 = vmatpush1.msra.mxu0 %v470
        %2036 = vmatprep.subr.mxu0 0.0
        %2037 = vmatpush1.msra.mxu0 %v475
        %2038 = vmatprep.subr.mxu0 0.0
        %2039 = vmatpush1.msra.mxu0 %v480
        %2040 = vmatprep.subr.mxu0 0.0
        %2041 = vmatpush1.msra.mxu0 %v485
        %2042 = vmatprep.subr.mxu0 0.0
        %2043 = vmatpush1.msra.mxu0 %v490
        %2044 = vmatprep.subr.mxu0 0.0
        %2045 = vmatpush1.msra.mxu0 %v495
        %2046 = vmatprep.subr.mxu0 0.0
        %2047 = vmatpush1.msra.mxu0 %v500
        %2048 = vmatprep.subr.mxu0 0.0
        %2049 = vmatpush1.msra.mxu0 %v505
        %2050 = vmatprep.subr.mxu0 0.0
        %2051 = vmatpush1.msra.mxu0 %v510
        %2052 = vmatprep.subr.mxu0 0.0
        %2053 = vmatpush1.msra.mxu0 %v515
        %2054 = vmatprep.subr.mxu0 0.0
        %2055 = vmatpush1.msra.mxu0 %v520
        %2056 = vmatprep.subr.mxu0 0.0
        %2057 = vmatpush1.msra.mxu0 %v525
        %2058 = vmatprep.subr.mxu0 0.0
        %2059 = vmatpush1.msra.mxu0 0.0
        %2060 = vmatprep.subr.mxu0 0.0
        %2061 = vmatpush1.msra.mxu0 0.0
        %2062 = vmatprep.subr.mxu0 0.0
        %2063 = vmatpush1.msra.mxu0 0.0
        %2064 = vmatprep.subr.mxu0 0.0
        %2065 = vmatpush1.msra.mxu0 0.0
        %2066 = vmatprep.subr.mxu0 0.0
        %2067 = vmatpush1.msra.mxu0 0.0
        %2068 = vmatprep.subr.mxu0 0.0
        %2069 = vmatpush1.msra.mxu0 0.0
        %2070 = vmatprep.subr.mxu0 0.0
        %2071 = vmatpush1.msra.mxu0 0.0
        %2072 = vmatprep.subr.mxu0 0.0
        %2073 = vmatpush1.msra.mxu0 0.0
        %2074 = vmatprep.subr.mxu0 0.0
        %2075 = vmatpush1.msra.mxu0 0.0
        %2076 = vmatprep.subr.mxu0 0.0
        %2077 = vmatpush1.msra.mxu0 0.0
        %2078 = vmatprep.subr.mxu0 0.0
        %2079 = vmatpush1.msra.mxu0 0.0
        %2080 = vmatprep.subr.mxu0 0.0
        %2081 = vmatpush1.msra.mxu0 0.0
        %2082 = vmatprep.subr.mxu0 0.0
        %2083 = vmatpush1.msra.mxu0 0.0
        %2084 = vmatprep.subr.mxu0 0.0
        %2085 = vmatpush1.msra.mxu0 0.0
        %2086 = vmatprep.subr.mxu0 0.0
        %2087 = vmatpush1.msra.mxu0 0.0
        %2088 = vmatprep.subr.mxu0 0.0
        %2089 = vmatpush1.msra.mxu0 0.0
        %2090 = vmatprep.subr.mxu0 0.0
        %2091 = vmatpush1.msra.mxu0 0.0
        %2092 = vmatprep.subr.mxu0 0.0
        %2093 = vmatpush1.msra.mxu0 0.0
        %2094 = vmatprep.subr.mxu0 0.0
        %2095 = vmatpush1.msra.mxu0 0.0
        %2096 = vmatprep.subr.mxu0 0.0
        %2097 = vmatpush1.msra.mxu0 0.0
        %2098 = vmatprep.mubr.f32.mxu0 0.0
        %2099 = vmatmul.mubr.f32.gmra.mrb[0].mxu0 %v674
        %v2100 = vpop.f32.mrb[0].mxu0
        %v2101 = vadd.f32 0.0, %v2100
        %v2102 = vpop.f32.mrb[0].mxu0
        %2103 = vmatprep.mubr.f32.mxu0 0.0
        %2104 = vmatmul.mubr.f32.gmra.mrb[0].mxu0 %v677
        %v2105 = vpop.f32.mrb[0].mxu0
        %v2106 = vadd.f32 0.0, %v2105
        %v2107 = vpop.f32.mrb[0].mxu0
        %2108 = vmatprep.mubr.f32.mxu0 0.0
        %2109 = vmatmul.mubr.f32.gmra.mrb[0].mxu0 %v680
        %v2110 = vpop.f32.mrb[0].mxu0
        %v2111 = vadd.f32 0.0, %v2110
        %v2112 = vpop.f32.mrb[0].mxu0
        %2113 = vmatprep.mubr.f32.mxu0 0.0
        %2114 = vmatmul.mubr.f32.gmra.mrb[0].mxu0 %v683
        %v2115 = vpop.f32.mrb[0].mxu0
        %v2116 = vadd.f32 0.0, %v2115
        %v2117 = vpop.f32.mrb[0].mxu0
        %2118 = vmatprep.mubr.f32.mxu0 0.0
        %2119 = vmatmul.mubr.f32.gmra.mrb[0].mxu0 %v686
        %v2120 = vpop.f32.mrb[0].mxu0
        %v2121 = vadd.f32 0.0, %v2120
        %v2122 = vpop.f32.mrb[0].mxu0
        %2123 = vmatprep.mubr.f32.mxu0 0.0
        %2124 = vmatmul.mubr.f32.gmra.mrb[0].mxu0 %v689
        %v2125 = vpop.f32.mrb[0].mxu0
        %v2126 = vadd.f32 0.0, %v2125
        %v2127 = vpop.f32.mrb[0].mxu0
        %2128 = vmatprep.mubr.f32.mxu0 0.0
        %2129 = vmatmul.mubr.f32.gmra.mrb[0].mxu0 %v692
        %v2130 = vpop.f32.mrb[0].mxu0
        %v2131 = vadd.f32 0.0, %v2130
        %v2132 = vpop.f32.mrb[0].mxu0
        %2133 = vmatprep.mubr.f32.mxu0 0.0
        %2134 = vmatmul.mubr.f32.gmra.mrb[0].mxu0 %v695
        %v2135 = vpop.f32.mrb[0].mxu0
        %v2136 = vadd.f32 0.0, %v2135
        %v2137 = vpop.f32.mrb[0].mxu0
        %2138 = vmatprep.mubr.f32.mxu0 0.0
        %2139 = vmatmul.mubr.f32.gmra.mrb[0].mxu0 %v698
        %v2140 = vpop.f32.mrb[0].mxu0
        %v2141 = vadd.f32 0.0, %v2140
        %v2142 = vpop.f32.mrb[0].mxu0
        %2143 = vmatprep.mubr.f32.mxu0 0.0
        %2144 = vmatmul.mubr.f32.gmra.mrb[0].mxu0 %v701
        %v2145 = vpop.f32.mrb[0].mxu0
        %v2146 = vadd.f32 0.0, %v2145
        %v2147 = vpop.f32.mrb[0].mxu0
        %2148 = vmatprep.mubr.f32.mxu0 0.0
        %2149 = vmatmul.mubr.f32.gmra.mrb[0].mxu0 %v704
        %v2150 = vpop.f32.mrb[0].mxu0
        %v2151 = vadd.f32 0.0, %v2150
        %v2152 = vpop.f32.mrb[0].mxu0
        %2153 = vmatprep.mubr.f32.mxu0 0.0
        %2154 = vmatmul.mubr.f32.gmra.mrb[0].mxu0 %v707
        %v2155 = vpop.f32.mrb[0].mxu0
        %v2156 = vadd.f32 0.0, %v2155
        %v2157 = vpop.f32.mrb[0].mxu0
        %2158 = vmatprep.mubr.f32.mxu0 0.0
        %2159 = vmatmul.mubr.f32.gmra.mrb[0].mxu0 %v710
        %v2160 = vpop.f32.mrb[0].mxu0
        %v2161 = vadd.f32 0.0, %v2160
        %v2162 = vpop.f32.mrb[0].mxu0
        %2163 = vmatprep.mubr.f32.mxu0 0.0
        %2164 = vmatmul.mubr.f32.gmra.mrb[0].mxu0 %v713
        %v2165 = vpop.f32.mrb[0].mxu0
        %v2166 = vadd.f32 0.0, %v2165
        %v2167 = vpop.f32.mrb[0].mxu0
        %2168 = vmatprep.mubr.f32.mxu0 0.0
        %2169 = vmatmul.mubr.f32.gmra.mrb[0].mxu0 %v716
        %v2170 = vpop.f32.mrb[0].mxu0
        %v2171 = vadd.f32 0.0, %v2170
        %v2172 = vpop.f32.mrb[0].mxu0
        %2173 = vmatprep.mubr.f32.mxu0 0.0
        %2174 = vmatmul.mubr.f32.gmra.mrb[0].mxu0 %v719
        %v2175 = vpop.f32.mrb[0].mxu0
        %v2176 = vadd.f32 0.0, %v2175
        %v2177 = vpop.f32.mrb[0].mxu0
        %2178 = vmatprep.mubr.f32.mxu0 0.0
        %2179 = vmatmul.mubr.f32.gmra.mrb[0].mxu0 %v722
        %v2180 = vpop.f32.mrb[0].mxu0
        %v2181 = vadd.f32 0.0, %v2180
        %v2182 = vpop.f32.mrb[0].mxu0
        %2183 = vmatprep.mubr.f32.mxu0 0.0
        %2184 = vmatmul.mubr.f32.gmra.mrb[0].mxu0 %v725
        %v2185 = vpop.f32.mrb[0].mxu0
        %v2186 = vadd.f32 0.0, %v2185
        %v2187 = vpop.f32.mrb[0].mxu0
        %2188 = vmatprep.mubr.f32.mxu0 0.0
        %2189 = vmatmul.mubr.f32.gmra.mrb[0].mxu0 %v728
        %v2190 = vpop.f32.mrb[0].mxu0
        %v2191 = vadd.f32 0.0, %v2190
        %v2192 = vpop.f32.mrb[0].mxu0
        %2193 = vmatprep.mubr.f32.mxu0 0.0
        %2194 = vmatmul.mubr.f32.gmra.mrb[0].mxu0 %v731
        %v2195 = vpop.f32.mrb[0].mxu0
        %v2196 = vadd.f32 0.0, %v2195
        %v2197 = vpop.f32.mrb[0].mxu0
        %2198 = vmatprep.mubr.f32.mxu0 0.0
        %2199 = vmatmul.mubr.f32.gmra.mrb[0].mxu0 %v734
        %v2200 = vpop.f32.mrb[0].mxu0
        %v2201 = vadd.f32 0.0, %v2200
        %v2202 = vpop.f32.mrb[0].mxu0
        %2203 = vmatprep.mubr.f32.mxu0 0.0
        %2204 = vmatmul.mubr.f32.gmra.mrb[0].mxu0 %v737
        %v2205 = vpop.f32.mrb[0].mxu0
        %v2206 = vadd.f32 0.0, %v2205
        %v2207 = vpop.f32.mrb[0].mxu0
        %2208 = vmatprep.mubr.f32.mxu0 0.0
        %2209 = vmatmul.mubr.f32.gmra.mrb[0].mxu0 %v740
        %v2210 = vpop.f32.mrb[0].mxu0
        %v2211 = vadd.f32 0.0, %v2210
        %v2212 = vpop.f32.mrb[0].mxu0
        %2213 = vmatprep.mubr.f32.mxu0 0.0
        %2214 = vmatmul.mubr.f32.gmra.mrb[0].mxu0 %v743
        %v2215 = vpop.f32.mrb[0].mxu0
        %v2216 = vadd.f32 0.0, %v2215
        %v2217 = vpop.f32.mrb[0].mxu0
        %2218 = vmatprep.mubr.f32.mxu0 0.0
        %2219 = vmatmul.mubr.f32.gmra.mrb[0].mxu0 %v746
        %v2220 = vpop.f32.mrb[0].mxu0
        %v2221 = vadd.f32 0.0, %v2220
        %v2222 = vpop.f32.mrb[0].mxu0
        %2223 = vmatprep.mubr.f32.mxu0 0.0
        %2224 = vmatmul.mubr.f32.gmra.mrb[0].mxu0 %v749
        %v2225 = vpop.f32.mrb[0].mxu0
        %v2226 = vadd.f32 0.0, %v2225
        %v2227 = vpop.f32.mrb[0].mxu0
        %2228 = vmatprep.mubr.f32.mxu0 0.0
        %2229 = vmatmul.mubr.f32.gmra.mrb[0].mxu0 %v752
        %v2230 = vpop.f32.mrb[0].mxu0
        %v2231 = vadd.f32 0.0, %v2230
        %v2232 = vpop.f32.mrb[0].mxu0
        %2233 = vmatprep.mubr.f32.mxu0 0.0
        %2234 = vmatmul.mubr.f32.gmra.mrb[0].mxu0 %v755
        %v2235 = vpop.f32.mrb[0].mxu0
        %v2236 = vadd.f32 0.0, %v2235
        %v2237 = vpop.f32.mrb[0].mxu0
        %2238 = vmatprep.mubr.f32.mxu0 0.0
        %2239 = vmatmul.mubr.f32.gmra.mrb[0].mxu0 %v758
        %v2240 = vpop.f32.mrb[0].mxu0
        %v2241 = vadd.f32 0.0, %v2240
        %v2242 = vpop.f32.mrb[0].mxu0
        %2243 = vmatprep.mubr.f32.mxu0 0.0
        %2244 = vmatmul.mubr.f32.gmra.mrb[0].mxu0 %v761
        %v2245 = vpop.f32.mrb[0].mxu0
        %v2246 = vadd.f32 0.0, %v2245
        %v2247 = vpop.f32.mrb[0].mxu0
        %2248 = vmatprep.mubr.f32.mxu0 0.0
        %2249 = vmatmul.mubr.f32.gmra.mrb[0].mxu0 %v764
        %v2250 = vpop.f32.mrb[0].mxu0
        %v2251 = vadd.f32 0.0, %v2250
        %v2252 = vpop.f32.mrb[0].mxu0
        %2253 = vmatprep.mubr.f32.mxu0 0.0
        %2254 = vmatmul.mubr.f32.gmra.mrb[0].mxu0 %v767
        %v2255 = vpop.f32.mrb[0].mxu0
        %v2256 = vadd.f32 0.0, %v2255
        %v2257 = vpop.f32.mrb[0].mxu0
        %2258 = vmatprep.mubr.f32.mxu0 0.0
        %2259 = vmatmul.mubr.f32.gmra.mrb[0].mxu0 %v770
        %v2260 = vpop.f32.mrb[0].mxu0
        %v2261 = vadd.f32 0.0, %v2260
        %v2262 = vpop.f32.mrb[0].mxu0
        %2263 = vmatprep.mubr.f32.mxu0 0.0
        %2264 = vmatmul.mubr.f32.gmra.mrb[0].mxu0 %v773
        %v2265 = vpop.f32.mrb[0].mxu0
        %v2266 = vadd.f32 0.0, %v2265
        %v2267 = vpop.f32.mrb[0].mxu0
        %2268 = vmatprep.mubr.f32.mxu0 0.0
        %2269 = vmatmul.mubr.f32.gmra.mrb[0].mxu0 %v776
        %v2270 = vpop.f32.mrb[0].mxu0
        %v2271 = vadd.f32 0.0, %v2270
        %v2272 = vpop.f32.mrb[0].mxu0
        %2273 = vmatprep.mubr.f32.mxu0 0.0
        %2274 = vmatmul.mubr.f32.gmra.mrb[0].mxu0 %v779
        %v2275 = vpop.f32.mrb[0].mxu0
        %v2276 = vadd.f32 0.0, %v2275
        %v2277 = vpop.f32.mrb[0].mxu0
        %2278 = vmatprep.mubr.f32.mxu0 0.0
        %2279 = vmatmul.mubr.f32.gmra.mrb[0].mxu0 %v782
        %v2280 = vpop.f32.mrb[0].mxu0
        %v2281 = vadd.f32 0.0, %v2280
        %v2282 = vpop.f32.mrb[0].mxu0
        %2283 = vmatprep.mubr.f32.mxu0 0.0
        %2284 = vmatmul.mubr.f32.gmra.mrb[0].mxu0 %v785
        %v2285 = vpop.f32.mrb[0].mxu0
        %v2286 = vadd.f32 0.0, %v2285
        %v2287 = vpop.f32.mrb[0].mxu0
        %2288 = vmatprep.mubr.f32.mxu0 0.0
        %2289 = vmatmul.mubr.f32.gmra.mrb[0].mxu0 %v788
        %v2290 = vpop.f32.mrb[0].mxu0
        %v2291 = vadd.f32 0.0, %v2290
        %v2292 = vpop.f32.mrb[0].mxu0
        %2293 = vmatprep.mubr.f32.mxu0 0.0
        %2294 = vmatmul.mubr.f32.gmra.mrb[0].mxu0 %v791
        %v2295 = vpop.f32.mrb[0].mxu0
        %v2296 = vadd.f32 0.0, %v2295
        %v2297 = vpop.f32.mrb[0].mxu0
        %2298 = vmatprep.mubr.f32.mxu0 0.0
        %2299 = vmatmul.mubr.f32.gmra.mrb[0].mxu0 %v794
        %v2300 = vpop.f32.mrb[0].mxu0
        %v2301 = vadd.f32 0.0, %v2300
        %v2302 = vpop.f32.mrb[0].mxu0
        %2303 = vmatprep.mubr.f32.mxu0 0.0
        %2304 = vmatmul.mubr.f32.gmra.mrb[0].mxu0 %v797
        %v2305 = vpop.f32.mrb[0].mxu0
        %v2306 = vadd.f32 0.0, %v2305
        %v2307 = vpop.f32.mrb[0].mxu0
        %2308 = vmatprep.mubr.f32.mxu0 0.0
        %2309 = vmatmul.mubr.f32.gmra.mrb[0].mxu0 %v800
        %v2310 = vpop.f32.mrb[0].mxu0
        %v2311 = vadd.f32 0.0, %v2310
        %v2312 = vpop.f32.mrb[0].mxu0
        %2313 = vmatprep.mubr.f32.mxu0 0.0
        %2314 = vmatmul.mubr.f32.gmra.mrb[0].mxu0 %v803
        %v2315 = vpop.f32.mrb[0].mxu0
        %v2316 = vadd.f32 0.0, %v2315
        %v2317 = vpop.f32.mrb[0].mxu0
        %2318 = vmatprep.mubr.f32.mxu0 0.0
        %2319 = vmatmul.mubr.f32.gmra.mrb[0].mxu0 %v806
        %v2320 = vpop.f32.mrb[0].mxu0
        %v2321 = vadd.f32 0.0, %v2320
        %v2322 = vpop.f32.mrb[0].mxu0
        %2323 = vmatprep.mubr.f32.mxu0 0.0
        %2324 = vmatmul.mubr.f32.gmra.mrb[0].mxu0 %v809
        %v2325 = vpop.f32.mrb[0].mxu0
        %v2326 = vadd.f32 0.0, %v2325
        %v2327 = vpop.f32.mrb[0].mxu0
        %2328 = vmatprep.mubr.f32.mxu0 0.0
        %2329 = vmatmul.mubr.f32.gmra.mrb[0].mxu0 %v812
        %v2330 = vpop.f32.mrb[0].mxu0
        %v2331 = vadd.f32 0.0, %v2330
        %v2332 = vpop.f32.mrb[0].mxu0
        %2333 = vmatprep.mubr.f32.mxu0 0.0
        %2334 = vmatmul.mubr.f32.gmra.mrb[0].mxu0 %v815
        %v2335 = vpop.f32.mrb[0].mxu0
        %v2336 = vadd.f32 0.0, %v2335
        %v2337 = vpop.f32.mrb[0].mxu0
        %2338 = vmatprep.mubr.f32.mxu0 0.0
        %2339 = vmatmul.mubr.f32.gmra.mrb[0].mxu0 %v818
        %v2340 = vpop.f32.mrb[0].mxu0
        %v2341 = vadd.f32 0.0, %v2340
        %v2342 = vpop.f32.mrb[0].mxu0
        %2343 = vmatprep.mubr.f32.mxu0 0.0
        %2344 = vmatmul.mubr.f32.gmra.mrb[0].mxu0 %v821
        %v2345 = vpop.f32.mrb[0].mxu0
        %v2346 = vadd.f32 0.0, %v2345
        %v2347 = vpop.f32.mrb[0].mxu0
        %2348 = vmatprep.mubr.f32.mxu0 0.0
        %2349 = vmatmul.mubr.f32.gmra.mrb[0].mxu0 %v824
        %v2350 = vpop.f32.mrb[0].mxu0
        %v2351 = vadd.f32 0.0, %v2350
        %v2352 = vpop.f32.mrb[0].mxu0
        %2353 = vmatprep.mubr.f32.mxu0 0.0
        %2354 = vmatmul.mubr.f32.gmra.mrb[0].mxu0 %v827
        %v2355 = vpop.f32.mrb[0].mxu0
        %v2356 = vadd.f32 0.0, %v2355
        %v2357 = vpop.f32.mrb[0].mxu0
        %2358 = vmatprep.mubr.f32.mxu0 0.0
        %2359 = vmatmul.mubr.f32.gmra.mrb[0].mxu0 %v830
        %v2360 = vpop.f32.mrb[0].mxu0
        %v2361 = vadd.f32 0.0, %v2360
        %v2362 = vpop.f32.mrb[0].mxu0
        %2363 = vmatprep.mubr.f32.mxu0 0.0
        %2364 = vmatmul.mubr.f32.gmra.mrb[0].mxu0 %v833
        %v2365 = vpop.f32.mrb[0].mxu0
        %v2366 = vadd.f32 0.0, %v2365
        %v2367 = vpop.f32.mrb[0].mxu0
        %2368 = vmatprep.mubr.f32.mxu0 0.0
        %2369 = vmatmul.mubr.f32.gmra.mrb[0].mxu0 %v836
        %v2370 = vpop.f32.mrb[0].mxu0
        %v2371 = vadd.f32 0.0, %v2370
        %v2372 = vpop.f32.mrb[0].mxu0
        %2373 = vmatprep.mubr.f32.mxu0 0.0
        %2374 = vmatmul.mubr.f32.gmra.mrb[0].mxu0 %v839
        %v2375 = vpop.f32.mrb[0].mxu0
        %v2376 = vadd.f32 0.0, %v2375
        %v2377 = vpop.f32.mrb[0].mxu0
        %2378 = vmatprep.mubr.f32.mxu0 0.0
        %2379 = vmatmul.mubr.f32.gmra.mrb[0].mxu0 %v842
        %v2380 = vpop.f32.mrb[0].mxu0
        %v2381 = vadd.f32 0.0, %v2380
        %v2382 = vpop.f32.mrb[0].mxu0
        %2383 = vmatprep.mubr.f32.mxu0 0.0
        %2384 = vmatmul.mubr.f32.gmra.mrb[0].mxu0 %v845
        %v2385 = vpop.f32.mrb[0].mxu0
        %v2386 = vadd.f32 0.0, %v2385
        %v2387 = vpop.f32.mrb[0].mxu0
        %2388 = vmatprep.mubr.f32.mxu0 0.0
        %2389 = vmatmul.mubr.f32.gmra.mrb[0].mxu0 %v848
        %v2390 = vpop.f32.mrb[0].mxu0
        %v2391 = vadd.f32 0.0, %v2390
        %v2392 = vpop.f32.mrb[0].mxu0
        %2393 = vmatprep.mubr.f32.mxu0 0.0
        %2394 = vmatmul.mubr.f32.gmra.mrb[0].mxu0 %v851
        %v2395 = vpop.f32.mrb[0].mxu0
        %v2396 = vadd.f32 0.0, %v2395
        %v2397 = vpop.f32.mrb[0].mxu0
        %2398 = vmatprep.mubr.f32.mxu0 0.0
        %2399 = vmatmul.mubr.f32.gmra.mrb[0].mxu0 %v854
        %v2400 = vpop.f32.mrb[0].mxu0
        %v2401 = vadd.f32 0.0, %v2400
        %v2402 = vpop.f32.mrb[0].mxu0
        %2403 = vmatprep.mubr.f32.mxu0 0.0
        %2404 = vmatmul.mubr.f32.gmra.mrb[0].mxu0 %v857
        %v2405 = vpop.f32.mrb[0].mxu0
        %v2406 = vadd.f32 0.0, %v2405
        %v2407 = vpop.f32.mrb[0].mxu0
        %2408 = vmatprep.mubr.f32.mxu0 0.0
        %2409 = vmatmul.mubr.f32.gmra.mrb[0].mxu0 %v860
        %v2410 = vpop.f32.mrb[0].mxu0
        %v2411 = vadd.f32 0.0, %v2410
        %v2412 = vpop.f32.mrb[0].mxu0
        %2413 = vmatprep.mubr.f32.mxu0 0.0
        %2414 = vmatmul.mubr.f32.gmra.mrb[0].mxu0 %v863
        %v2415 = vpop.f32.mrb[0].mxu0
        %v2416 = vadd.f32 0.0, %v2415
        %v2417 = vpop.f32.mrb[0].mxu0
        %2418 = vmatprep.mubr.f32.mxu0 0.0
        %2419 = vmatmul.mubr.f32.gmra.mrb[0].mxu0 %v866
        %v2420 = vpop.f32.mrb[0].mxu0
        %v2421 = vadd.f32 0.0, %v2420
        %v2422 = vpop.f32.mrb[0].mxu0
        %2423 = vmatprep.mubr.f32.mxu0 0.0
        %2424 = vmatmul.mubr.f32.gmra.mrb[0].mxu0 %v869
        %v2425 = vpop.f32.mrb[0].mxu0
        %v2426 = vadd.f32 0.0, %v2425
        %v2427 = vpop.f32.mrb[0].mxu0
        %2428 = vmatprep.mubr.f32.mxu0 0.0
        %2429 = vmatmul.mubr.f32.gmra.mrb[0].mxu0 %v872
        %v2430 = vpop.f32.mrb[0].mxu0
        %v2431 = vadd.f32 0.0, %v2430
        %v2432 = vpop.f32.mrb[0].mxu0
        %2433 = vmatprep.mubr.f32.mxu0 0.0
        %2434 = vmatmul.mubr.f32.gmra.mrb[0].mxu0 %v875
        %v2435 = vpop.f32.mrb[0].mxu0
        %v2436 = vadd.f32 0.0, %v2435
        %v2437 = vpop.f32.mrb[0].mxu0
        %2438 = vmatprep.mubr.f32.mxu0 0.0
        %2439 = vmatmul.mubr.f32.gmra.mrb[0].mxu0 %v878
        %v2440 = vpop.f32.mrb[0].mxu0
        %v2441 = vadd.f32 0.0, %v2440
        %v2442 = vpop.f32.mrb[0].mxu0
        %2443 = vmatprep.mubr.f32.mxu0 0.0
        %2444 = vmatmul.mubr.f32.gmra.mrb[0].mxu0 %v881
        %v2445 = vpop.f32.mrb[0].mxu0
        %v2446 = vadd.f32 0.0, %v2445
        %v2447 = vpop.f32.mrb[0].mxu0
        %2448 = vmatprep.mubr.f32.mxu0 0.0
        %2449 = vmatmul.mubr.f32.gmra.mrb[0].mxu0 %v884
        %v2450 = vpop.f32.mrb[0].mxu0
        %v2451 = vadd.f32 0.0, %v2450
        %v2452 = vpop.f32.mrb[0].mxu0
        %2453 = vmatprep.mubr.f32.mxu0 0.0
        %2454 = vmatmul.mubr.f32.gmra.mrb[0].mxu0 %v887
        %v2455 = vpop.f32.mrb[0].mxu0
        %v2456 = vadd.f32 0.0, %v2455
        %v2457 = vpop.f32.mrb[0].mxu0
        %2458 = vmatprep.mubr.f32.mxu0 0.0
        %2459 = vmatmul.mubr.f32.gmra.mrb[0].mxu0 %v890
        %v2460 = vpop.f32.mrb[0].mxu0
        %v2461 = vadd.f32 0.0, %v2460
        %v2462 = vpop.f32.mrb[0].mxu0
        %2463 = vmatprep.mubr.f32.mxu0 0.0
        %2464 = vmatmul.mubr.f32.gmra.mrb[0].mxu0 %v893
        %v2465 = vpop.f32.mrb[0].mxu0
        %v2466 = vadd.f32 0.0, %v2465
        %v2467 = vpop.f32.mrb[0].mxu0
        %2468 = vmatprep.mubr.f32.mxu0 0.0
        %2469 = vmatmul.mubr.f32.gmra.mrb[0].mxu0 %v896
        %v2470 = vpop.f32.mrb[0].mxu0
        %v2471 = vadd.f32 0.0, %v2470
        %v2472 = vpop.f32.mrb[0].mxu0
        %2473 = vmatprep.mubr.f32.mxu0 0.0
        %2474 = vmatmul.mubr.f32.gmra.mrb[0].mxu0 %v899
        %v2475 = vpop.f32.mrb[0].mxu0
        %v2476 = vadd.f32 0.0, %v2475
        %v2477 = vpop.f32.mrb[0].mxu0
        %2478 = vmatprep.mubr.f32.mxu0 0.0
        %2479 = vmatmul.mubr.f32.gmra.mrb[0].mxu0 %v902
        %v2480 = vpop.f32.mrb[0].mxu0
        %v2481 = vadd.f32 0.0, %v2480
        %v2482 = vpop.f32.mrb[0].mxu0
        %2483 = vmatprep.mubr.f32.mxu0 0.0
        %2484 = vmatmul.mubr.f32.gmra.mrb[0].mxu0 %v905
        %v2485 = vpop.f32.mrb[0].mxu0
        %v2486 = vadd.f32 0.0, %v2485
        %v2487 = vpop.f32.mrb[0].mxu0
        %2488 = vmatprep.mubr.f32.mxu0 0.0
        %2489 = vmatmul.mubr.f32.gmra.mrb[0].mxu0 %v908
        %v2490 = vpop.f32.mrb[0].mxu0
        %v2491 = vadd.f32 0.0, %v2490
        %v2492 = vpop.f32.mrb[0].mxu0
        %2493 = vmatprep.mubr.f32.mxu0 0.0
        %2494 = vmatmul.mubr.f32.gmra.mrb[0].mxu0 %v911
        %v2495 = vpop.f32.mrb[0].mxu0
        %v2496 = vadd.f32 0.0, %v2495
        %v2497 = vpop.f32.mrb[0].mxu0
        %2498 = vmatprep.mubr.f32.mxu0 0.0
        %2499 = vmatmul.mubr.f32.gmra.mrb[0].mxu0 %v914
        %v2500 = vpop.f32.mrb[0].mxu0
        %v2501 = vadd.f32 0.0, %v2500
        %v2502 = vpop.f32.mrb[0].mxu0
        %2503 = vmatprep.mubr.f32.mxu0 0.0
        %2504 = vmatmul.mubr.f32.gmra.mrb[0].mxu0 %v917
        %v2505 = vpop.f32.mrb[0].mxu0
        %v2506 = vadd.f32 0.0, %v2505
        %v2507 = vpop.f32.mrb[0].mxu0
        %2508 = vmatprep.mubr.f32.mxu0 0.0
        %2509 = vmatmul.mubr.f32.gmra.mrb[0].mxu0 %v920
        %v2510 = vpop.f32.mrb[0].mxu0
        %v2511 = vadd.f32 0.0, %v2510
        %v2512 = vpop.f32.mrb[0].mxu0
        %2513 = vmatprep.mubr.f32.mxu0 0.0
        %2514 = vmatmul.mubr.f32.gmra.mrb[0].mxu0 %v923
        %v2515 = vpop.f32.mrb[0].mxu0
        %v2516 = vadd.f32 0.0, %v2515
        %v2517 = vpop.f32.mrb[0].mxu0
        %2518 = vmatprep.mubr.f32.mxu0 0.0
        %2519 = vmatmul.mubr.f32.gmra.mrb[0].mxu0 %v926
        %v2520 = vpop.f32.mrb[0].mxu0
        %v2521 = vadd.f32 0.0, %v2520
        %v2522 = vpop.f32.mrb[0].mxu0
        %2523 = vmatprep.mubr.f32.mxu0 0.0
        %2524 = vmatmul.mubr.f32.gmra.mrb[0].mxu0 %v929
        %v2525 = vpop.f32.mrb[0].mxu0
        %v2526 = vadd.f32 0.0, %v2525
        %v2527 = vpop.f32.mrb[0].mxu0
        %2528 = vmatprep.mubr.f32.mxu0 0.0
        %2529 = vmatmul.mubr.f32.gmra.mrb[0].mxu0 %v932
        %v2530 = vpop.f32.mrb[0].mxu0
        %v2531 = vadd.f32 0.0, %v2530
        %v2532 = vpop.f32.mrb[0].mxu0
        %2533 = vmatprep.mubr.f32.mxu0 0.0
        %2534 = vmatmul.mubr.f32.gmra.mrb[0].mxu0 %v935
        %v2535 = vpop.f32.mrb[0].mxu0
        %v2536 = vadd.f32 0.0, %v2535
        %v2537 = vpop.f32.mrb[0].mxu0
        %2538 = vmatprep.mubr.f32.mxu0 0.0
        %2539 = vmatmul.mubr.f32.gmra.mrb[0].mxu0 %v938
        %v2540 = vpop.f32.mrb[0].mxu0
        %v2541 = vadd.f32 0.0, %v2540
        %v2542 = vpop.f32.mrb[0].mxu0
        %2543 = vmatprep.mubr.f32.mxu0 0.0
        %2544 = vmatmul.mubr.f32.gmra.mrb[0].mxu0 %v941
        %v2545 = vpop.f32.mrb[0].mxu0
        %v2546 = vadd.f32 0.0, %v2545
        %v2547 = vpop.f32.mrb[0].mxu0
        %2548 = vmatprep.mubr.f32.mxu0 0.0
        %2549 = vmatmul.mubr.f32.gmra.mrb[0].mxu0 %v944
        %v2550 = vpop.f32.mrb[0].mxu0
        %v2551 = vadd.f32 0.0, %v2550
        %v2552 = vpop.f32.mrb[0].mxu0
        %2553 = vmatprep.mubr.f32.mxu0 0.0
        %2554 = vmatmul.mubr.f32.gmra.mrb[0].mxu0 %v947
        %v2555 = vpop.f32.mrb[0].mxu0
        %v2556 = vadd.f32 0.0, %v2555
        %v2557 = vpop.f32.mrb[0].mxu0
        %2558 = vmatprep.mubr.f32.mxu0 0.0
        %2559 = vmatmul.mubr.f32.gmra.mrb[0].mxu0 %v950
        %v2560 = vpop.f32.mrb[0].mxu0
        %v2561 = vadd.f32 0.0, %v2560
        %v2562 = vpop.f32.mrb[0].mxu0
        %2563 = vmatprep.mubr.f32.mxu0 0.0
        %2564 = vmatmul.mubr.f32.gmra.mrb[0].mxu0 %v953
        %v2565 = vpop.f32.mrb[0].mxu0
        %v2566 = vadd.f32 0.0, %v2565
        %v2567 = vpop.f32.mrb[0].mxu0
        %2568 = vmatprep.mubr.f32.mxu0 0.0
        %2569 = vmatmul.mubr.f32.gmra.mrb[0].mxu0 %v956
        %v2570 = vpop.f32.mrb[0].mxu0
        %v2571 = vadd.f32 0.0, %v2570
        %v2572 = vpop.f32.mrb[0].mxu0
        %2573 = vmatprep.mubr.f32.mxu0 0.0
        %2574 = vmatmul.mubr.f32.gmra.mrb[0].mxu0 %v959
        %v2575 = vpop.f32.mrb[0].mxu0
        %v2576 = vadd.f32 0.0, %v2575
        %v2577 = vpop.f32.mrb[0].mxu0
        %2578 = vmatprep.mubr.f32.mxu0 0.0
        %2579 = vmatmul.mubr.f32.gmra.mrb[0].mxu0 %v962
        %v2580 = vpop.f32.mrb[0].mxu0
        %v2581 = vadd.f32 0.0, %v2580
        %v2582 = vpop.f32.mrb[0].mxu0
        %2583 = vmatprep.mubr.f32.mxu0 0.0
        %2584 = vmatmul.mubr.f32.gmra.mrb[0].mxu0 %v965
        %v2585 = vpop.f32.mrb[0].mxu0
        %v2586 = vadd.f32 0.0, %v2585
        %v2587 = vpop.f32.mrb[0].mxu0
        %2588 = vmatprep.mubr.f32.mxu0 0.0
        %2589 = vmatmul.mubr.f32.gmra.mrb[0].mxu0 %v968
        %v2590 = vpop.f32.mrb[0].mxu0
        %v2591 = vadd.f32 0.0, %v2590
        %v2592 = vpop.f32.mrb[0].mxu0
        %2593 = vmatprep.mubr.f32.mxu0 0.0
        %2594 = vmatmul.mubr.f32.gmra.mrb[0].mxu0 %v971
        %v2595 = vpop.f32.mrb[0].mxu0
        %v2596 = vadd.f32 0.0, %v2595
        %v2597 = vpop.f32.mrb[0].mxu0
        %2598 = vmatprep.mubr.f32.mxu0 0.0
        %2599 = vmatmul.mubr.f32.gmra.mrb[0].mxu0 %v974
        %v2600 = vpop.f32.mrb[0].mxu0
        %v2601 = vadd.f32 0.0, %v2600
        %v2602 = vpop.f32.mrb[0].mxu0
        %2603 = vmatprep.mubr.f32.mxu0 0.0
        %2604 = vmatmul.mubr.f32.gmra.mrb[0].mxu0 %v977
        %v2605 = vpop.f32.mrb[0].mxu0
        %v2606 = vadd.f32 0.0, %v2605
        %v2607 = vpop.f32.mrb[0].mxu0
        %2608 = vmatprep.mubr.f32.mxu0 0.0
        %2609 = vmatmul.mubr.f32.gmra.mrb[0].mxu0 %v980
        %v2610 = vpop.f32.mrb[0].mxu0
        %v2611 = vadd.f32 0.0, %v2610
        %v2612 = vpop.f32.mrb[0].mxu0
        %2613 = vmatprep.mubr.f32.mxu0 0.0
        %2614 = vmatmul.mubr.f32.gmra.mrb[0].mxu0 %v983
        %v2615 = vpop.f32.mrb[0].mxu0
        %v2616 = vadd.f32 0.0, %v2615
        %v2617 = vpop.f32.mrb[0].mxu0
        %2618 = vmatprep.mubr.f32.mxu0 0.0
        %2619 = vmatmul.mubr.f32.gmra.mrb[0].mxu0 %v986
        %v2620 = vpop.f32.mrb[0].mxu0
        %v2621 = vadd.f32 0.0, %v2620
        %v2622 = vpop.f32.mrb[0].mxu0
        %2623 = vmatprep.mubr.f32.mxu0 0.0
        %2624 = vmatmul.mubr.f32.gmra.mrb[0].mxu0 %v989
        %v2625 = vpop.f32.mrb[0].mxu0
        %v2626 = vadd.f32 0.0, %v2625
        %v2627 = vpop.f32.mrb[0].mxu0
        %2628 = vmatprep.mubr.f32.mxu0 0.0
        %2629 = vmatmul.mubr.f32.gmra.mrb[0].mxu0 %v992
        %v2630 = vpop.f32.mrb[0].mxu0
        %v2631 = vadd.f32 0.0, %v2630
        %v2632 = vpop.f32.mrb[0].mxu0
        %2633 = vmatprep.mubr.f32.mxu0 0.0
        %2634 = vmatmul.mubr.f32.gmra.mrb[0].mxu0 %v995
        %v2635 = vpop.f32.mrb[0].mxu0
        %v2636 = vadd.f32 0.0, %v2635
        %v2637 = vpop.f32.mrb[0].mxu0
        %2638 = vmatprep.mubr.f32.mxu0 0.0
        %2639 = vmatmul.mubr.f32.gmra.mrb[0].mxu0 %v998
        %v2640 = vpop.f32.mrb[0].mxu0
        %v2641 = vadd.f32 0.0, %v2640
        %v2642 = vpop.f32.mrb[0].mxu0
        %2643 = vmatprep.mubr.f32.mxu0 0.0
        %2644 = vmatmul.mubr.f32.gmra.mrb[0].mxu0 %v1001
        %v2645 = vpop.f32.mrb[0].mxu0
        %v2646 = vadd.f32 0.0, %v2645
        %v2647 = vpop.f32.mrb[0].mxu0
        %2648 = vmatprep.mubr.f32.mxu0 0.0
        %2649 = vmatmul.mubr.f32.gmra.mrb[0].mxu0 %v1004
        %v2650 = vpop.f32.mrb[0].mxu0
        %v2651 = vadd.f32 0.0, %v2650
        %v2652 = vpop.f32.mrb[0].mxu0
        %2653 = vmatprep.mubr.f32.mxu0 0.0
        %2654 = vmatmul.mubr.f32.gmra.mrb[0].mxu0 %v1007
        %v2655 = vpop.f32.mrb[0].mxu0
        %v2656 = vadd.f32 0.0, %v2655
        %v2657 = vpop.f32.mrb[0].mxu0
        %2658 = vmatprep.mubr.f32.mxu0 0.0
        %2659 = vmatmul.mubr.f32.gmra.mrb[0].mxu0 %v1010
        %v2660 = vpop.f32.mrb[0].mxu0
        %v2661 = vadd.f32 0.0, %v2660
        %v2662 = vpop.f32.mrb[0].mxu0
        %2663 = vmatprep.mubr.f32.mxu0 0.0
        %2664 = vmatmul.mubr.f32.gmra.mrb[0].mxu0 %v1013
        %v2665 = vpop.f32.mrb[0].mxu0
        %v2666 = vadd.f32 0.0, %v2665
        %v2667 = vpop.f32.mrb[0].mxu0
        %2668 = vmatprep.mubr.f32.mxu0 0.0
        %2669 = vmatmul.mubr.f32.gmra.mrb[0].mxu0 %v1016
        %v2670 = vpop.f32.mrb[0].mxu0
        %v2671 = vadd.f32 0.0, %v2670
        %v2672 = vpop.f32.mrb[0].mxu0
        %2673 = vmatprep.mubr.f32.mxu0 0.0
        %2674 = vmatmul.mubr.f32.gmra.mrb[0].mxu0 %v1019
        %v2675 = vpop.f32.mrb[0].mxu0
        %v2676 = vadd.f32 0.0, %v2675
        %v2677 = vpop.f32.mrb[0].mxu0
        %2678 = vmatprep.mubr.f32.mxu0 0.0
        %2679 = vmatmul.mubr.f32.gmra.mrb[0].mxu0 %v1022
        %v2680 = vpop.f32.mrb[0].mxu0
        %v2681 = vadd.f32 0.0, %v2680
        %v2682 = vpop.f32.mrb[0].mxu0
        %2683 = vmatprep.mubr.f32.mxu0 0.0
        %2684 = vmatmul.mubr.f32.gmra.mrb[0].mxu0 %v1025
        %v2685 = vpop.f32.mrb[0].mxu0
        %v2686 = vadd.f32 0.0, %v2685
        %v2687 = vpop.f32.mrb[0].mxu0
        %2688 = vmatprep.mubr.f32.mxu0 0.0
        %2689 = vmatmul.mubr.f32.gmra.mrb[0].mxu0 %v1028
        %v2690 = vpop.f32.mrb[0].mxu0
        %v2691 = vadd.f32 0.0, %v2690
        %v2692 = vpop.f32.mrb[0].mxu0
        %2693 = vmatprep.mubr.f32.mxu0 0.0
        %2694 = vmatmul.mubr.f32.gmra.mrb[0].mxu0 %v1031
        %v2695 = vpop.f32.mrb[0].mxu0
        %v2696 = vadd.f32 0.0, %v2695
        %v2697 = vpop.f32.mrb[0].mxu0
        %2698 = vmatprep.mubr.f32.mxu0 0.0
        %2699 = vmatmul.mubr.f32.gmra.mrb[0].mxu0 %v1034
        %v2700 = vpop.f32.mrb[0].mxu0
        %v2701 = vadd.f32 0.0, %v2700
        %v2702 = vpop.f32.mrb[0].mxu0
        %2703 = vmatprep.mubr.f32.mxu0 0.0
        %2704 = vmatmul.mubr.f32.gmra.mrb[0].mxu0 %v1037
        %v2705 = vpop.f32.mrb[0].mxu0
        %v2706 = vadd.f32 0.0, %v2705
        %v2707 = vpop.f32.mrb[0].mxu0
        %2708 = vmatprep.mubr.f32.mxu0 0.0
        %2709 = vmatmul.mubr.f32.gmra.mrb[0].mxu0 %v1040
        %v2710 = vpop.f32.mrb[0].mxu0
        %v2711 = vadd.f32 0.0, %v2710
        %v2712 = vpop.f32.mrb[0].mxu0
        %2713 = vmatprep.mubr.f32.mxu0 0.0
        %2714 = vmatmul.mubr.f32.gmra.mrb[0].mxu0 %v1043
        %v2715 = vpop.f32.mrb[0].mxu0
        %v2716 = vadd.f32 0.0, %v2715
        %v2717 = vpop.f32.mrb[0].mxu0
        %2718 = vmatprep.mubr.f32.mxu0 0.0
        %2719 = vmatmul.mubr.f32.gmra.mrb[0].mxu0 %v1046
        %v2720 = vpop.f32.mrb[0].mxu0
        %v2721 = vadd.f32 0.0, %v2720
        %v2722 = vpop.f32.mrb[0].mxu0
        %2723 = vmatprep.mubr.f32.mxu0 0.0
        %2724 = vmatmul.mubr.f32.gmra.mrb[0].mxu0 %v1049
        %v2725 = vpop.f32.mrb[0].mxu0
        %v2726 = vadd.f32 0.0, %v2725
        %v2727 = vpop.f32.mrb[0].mxu0
        %2728 = vmatprep.mubr.f32.mxu0 0.0
        %2729 = vmatmul.mubr.f32.gmra.mrb[0].mxu0 %v1052
        %v2730 = vpop.f32.mrb[0].mxu0
        %v2731 = vadd.f32 0.0, %v2730
        %v2732 = vpop.f32.mrb[0].mxu0
        %2733 = vmatprep.mubr.f32.mxu0 0.0
        %2734 = vmatmul.mubr.f32.gmra.mrb[0].mxu0 %v1055
        %v2735 = vpop.f32.mrb[0].mxu0
        %v2736 = vadd.f32 0.0, %v2735
        %v2737 = vpop.f32.mrb[0].mxu0
        %2738 = vmatprep.mubr.f32.mxu0 0.0
        %2739 = vmatmul.mubr.f32.gmra.mrb[0].mxu0 %v1058
        %v2740 = vpop.f32.mrb[0].mxu0
        %v2741 = vadd.f32 0.0, %v2740
        %v2742 = vpop.f32.mrb[0].mxu0
        %2743 = vmatprep.mubr.f32.mxu0 0.0
        %2744 = vmatmul.mubr.f32.gmra.mrb[0].mxu0 %v1061
        %v2745 = vpop.f32.mrb[0].mxu0
        %v2746 = vadd.f32 0.0, %v2745
        %v2747 = vpop.f32.mrb[0].mxu0
        %2748 = vmatprep.mubr.f32.mxu0 0.0
        %2749 = vmatmul.mubr.f32.gmra.mrb[0].mxu0 %v1064
        %v2750 = vpop.f32.mrb[0].mxu0
        %v2751 = vadd.f32 0.0, %v2750
        %v2752 = vpop.f32.mrb[0].mxu0
        %2753 = vmatprep.mubr.f32.mxu0 0.0
        %2754 = vmatmul.mubr.f32.gmra.mrb[0].mxu0 %v1067
        %v2755 = vpop.f32.mrb[0].mxu0
        %v2756 = vadd.f32 0.0, %v2755
        %v2757 = vpop.f32.mrb[0].mxu0
        %2758 = vmatprep.mubr.f32.mxu0 0.0
        %2759 = vmatmul.mubr.f32.gmra.mrb[0].mxu0 %v1070
        %v2760 = vpop.f32.mrb[0].mxu0
        %v2761 = vadd.f32 0.0, %v2760
        %v2762 = vpop.f32.mrb[0].mxu0
        %2763 = vmatprep.mubr.f32.mxu0 0.0
        %2764 = vmatmul.mubr.f32.gmra.mrb[0].mxu0 %v1073
        %v2765 = vpop.f32.mrb[0].mxu0
        %v2766 = vadd.f32 0.0, %v2765
        %v2767 = vpop.f32.mrb[0].mxu0
        %2768 = vmatprep.mubr.f32.mxu0 0.0
        %2769 = vmatmul.mubr.f32.gmra.mrb[0].mxu0 %v1076
        %v2770 = vpop.f32.mrb[0].mxu0
        %v2771 = vadd.f32 0.0, %v2770
        %v2772 = vpop.f32.mrb[0].mxu0
        %2773 = vmatprep.mubr.f32.mxu0 0.0
        %2774 = vmatmul.mubr.f32.gmra.mrb[0].mxu0 %v1079
        %v2775 = vpop.f32.mrb[0].mxu0
        %v2776 = vadd.f32 0.0, %v2775
        %v2777 = vpop.f32.mrb[0].mxu0
        %2778 = vmatprep.mubr.f32.mxu0 0.0
        %2779 = vmatmul.mubr.f32.gmra.mrb[0].mxu0 %v1082
        %v2780 = vpop.f32.mrb[0].mxu0
        %v2781 = vadd.f32 0.0, %v2780
        %v2782 = vpop.f32.mrb[0].mxu0
        %2783 = vmatprep.mubr.f32.mxu0 0.0
        %2784 = vmatmul.mubr.f32.gmra.mrb[0].mxu0 %v1085
        %v2785 = vpop.f32.mrb[0].mxu0
        %v2786 = vadd.f32 0.0, %v2785
        %v2787 = vpop.f32.mrb[0].mxu0
        %2788 = vmatprep.mubr.f32.mxu0 0.0
        %2789 = vmatmul.mubr.f32.gmra.mrb[0].mxu0 %v1088
        %v2790 = vpop.f32.mrb[0].mxu0
        %v2791 = vadd.f32 0.0, %v2790
        %v2792 = vpop.f32.mrb[0].mxu0
        %2793 = vmatprep.mubr.f32.mxu0 0.0
        %2794 = vmatmul.mubr.f32.gmra.mrb[0].mxu0 %v1091
        %v2795 = vpop.f32.mrb[0].mxu0
        %v2796 = vadd.f32 0.0, %v2795
        %v2797 = vpop.f32.mrb[0].mxu0
        %2798 = vmatprep.mubr.f32.mxu0 0.0
        %2799 = vmatmul.mubr.f32.gmra.mrb[0].mxu0 %v1094
        %v2800 = vpop.f32.mrb[0].mxu0
        %v2801 = vadd.f32 0.0, %v2800
        %v2802 = vpop.f32.mrb[0].mxu0
        %2803 = vmatprep.mubr.f32.mxu0 0.0
        %2804 = vmatmul.mubr.f32.gmra.mrb[0].mxu0 %v1097
        %v2805 = vpop.f32.mrb[0].mxu0
        %v2806 = vadd.f32 0.0, %v2805
        %v2807 = vpop.f32.mrb[0].mxu0
        %2808 = vmatprep.mubr.f32.mxu0 0.0
        %2809 = vmatmul.mubr.f32.gmra.mrb[0].mxu0 %v1100
        %v2810 = vpop.f32.mrb[0].mxu0
        %v2811 = vadd.f32 0.0, %v2810
        %v2812 = vpop.f32.mrb[0].mxu0
        %2813 = vmatprep.mubr.f32.mxu0 0.0
        %2814 = vmatmul.mubr.f32.gmra.mrb[0].mxu0 %v1103
        %v2815 = vpop.f32.mrb[0].mxu0
        %v2816 = vadd.f32 0.0, %v2815
        %v2817 = vpop.f32.mrb[0].mxu0
        %2818 = vdwg.mxu0
        %v2819 = vmin.f32 %v1172, %v1190
        %v2820 = vmin.f32 %v2819, %v1208
        %v2821 = vmin.f32 %v2820, %v1226
        %v2822 = vmin.f32 %v2821, %v1244
        %v2823 = vmin.f32 %v2822, %v1262
        %v2824 = vmin.f32 %v2823, %v1280
        %v2825 = vmin.f32 %v2824, %v1298
        %v2826 = vmin.f32 %v2825, %v1316
        %v2827 = vmin.f32 %v2826, %v1334
        %v2828 = vmin.f32 %v2827, %v1352
        %v2829 = vmin.f32 %v2828, %v1370
        %v2830 = vmin.f32 %v2829, %v1388
        %v2831 = vmin.f32 %v2830, %v1406
        %v2832 = vmin.f32 %v2831, %v1424
        %v2833 = vmin.f32 %v2832, %v1442
        %v2834 = vmin.f32 %v2833, %v1460
        %v2835 = vmin.f32 %v2834, %v1478
        %v2836 = vmin.f32 %v2835, %v1496
        %v2837 = vmin.f32 %v2836, %v1514
        %v2838 = vmin.f32 %v2837, %v1532
        %v2839 = vmin.f32 %v2838, %v1550
        %v2840 = vmin.f32 %v2839, %v1568
        %v2841 = vmin.f32 %v2840, %v1586
        %v2842 = vmin.f32 %v2841, %v1604
        %v2843 = vmin.f32 %v2842, %v1622
        %v2844 = vmin.f32 %v2843, %v1640
        %v2845 = vmin.f32 %v2844, %v1658
        %v2846 = vmin.f32 %v2845, %v1676
        %v2847 = vmin.f32 %v2846, %v1694
        %v2848 = vmin.f32 %v2847, %v1712
        %v2849 = vmin.f32 %v2848, %v1730
        %v2850 = vmin.f32 %v2849, %v1748
        %v2851 = vmin.f32 %v2850, %v1766
        %v2852 = vmin.f32 %v2851, %v1784
        %v2853 = vmin.f32 %v2852, %v1802
        %v2854 = vmin.f32 %v2853, %v1820
        %v2855 = vmin.f32 %v2854, %v1838
        %v2856 = vmin.f32 %v2855, %v1856
        %v2857 = vmin.f32 %v2856, %v1874
        %v2858 = vmin.f32 %v2857, %v1892
        %v2859 = vmin.f32 %v2858, %v1910
        %v2860 = vmin.f32 %v2859, %v1928
        %v2861 = vmin.f32 %v2860, %v1946
        %v2862 = vmin.f32 %v2861, %v1964
        %v2863 = vmin.f32 %v2862, %v1982
        %v2864 = vmin.f32 %v2863, %v2000
        %v2865 = vmin.f32 %v2864, %v2018
        %v2866 = vmin.f32 %v1174, %v1192
        %v2867 = vmin.f32 %v2866, %v1210
        %v2868 = vmin.f32 %v2867, %v1228
        %v2869 = vmin.f32 %v2868, %v1246
        %v2870 = vmin.f32 %v2869, %v1264
        %v2871 = vmin.f32 %v2870, %v1282
        %v2872 = vmin.f32 %v2871, %v1300
        %v2873 = vmin.f32 %v2872, %v1318
        %v2874 = vmin.f32 %v2873, %v1336
        %v2875 = vmin.f32 %v2874, %v1354
        %v2876 = vmin.f32 %v2875, %v1372
        %v2877 = vmin.f32 %v2876, %v1390
        %v2878 = vmin.f32 %v2877, %v1408
        %v2879 = vmin.f32 %v2878, %v1426
        %v2880 = vmin.f32 %v2879, %v1444
        %v2881 = vmin.f32 %v2880, %v1462
        %v2882 = vmin.f32 %v2881, %v1480
        %v2883 = vmin.f32 %v2882, %v1498
        %v2884 = vmin.f32 %v2883, %v1516
        %v2885 = vmin.f32 %v2884, %v1534
        %v2886 = vmin.f32 %v2885, %v1552
        %v2887 = vmin.f32 %v2886, %v1570
        %v2888 = vmin.f32 %v2887, %v1588
        %v2889 = vmin.f32 %v2888, %v1606
        %v2890 = vmin.f32 %v2889, %v1624
        %v2891 = vmin.f32 %v2890, %v1642
        %v2892 = vmin.f32 %v2891, %v1660
        %v2893 = vmin.f32 %v2892, %v1678
        %v2894 = vmin.f32 %v2893, %v1696
        %v2895 = vmin.f32 %v2894, %v1714
        %v2896 = vmin.f32 %v2895, %v1732
        %v2897 = vmin.f32 %v2896, %v1750
        %v2898 = vmin.f32 %v2897, %v1768
        %v2899 = vmin.f32 %v2898, %v1786
        %v2900 = vmin.f32 %v2899, %v1804
        %v2901 = vmin.f32 %v2900, %v1822
        %v2902 = vmin.f32 %v2901, %v1840
        %v2903 = vmin.f32 %v2902, %v1858
        %v2904 = vmin.f32 %v2903, %v1876
        %v2905 = vmin.f32 %v2904, %v1894
        %v2906 = vmin.f32 %v2905, %v1912
        %v2907 = vmin.f32 %v2906, %v1930
        %v2908 = vmin.f32 %v2907, %v1948
        %v2909 = vmin.f32 %v2908, %v1966
        %v2910 = vmin.f32 %v2909, %v1984
        %v2911 = vmin.f32 %v2910, %v2002
        %v2912 = vmin.f32 %v2911, %v2020
        %v2913 = vmin.f32 %v2101, %v2116
        %v2914 = vmin.f32 %v2913, %v2131
        %v2915 = vmin.f32 %v2914, %v2146
        %v2916 = vmin.f32 %v2915, %v2161
        %v2917 = vmin.f32 %v2916, %v2176
        %v2918 = vmin.f32 %v2917, %v2191
        %v2919 = vmin.f32 %v2918, %v2206
        %v2920 = vmin.f32 %v2919, %v2221
        %v2921 = vmin.f32 %v2920, %v2236
        %v2922 = vmin.f32 %v2921, %v2251
        %v2923 = vmin.f32 %v2922, %v2266
        %v2924 = vmin.f32 %v2923, %v2281
        %v2925 = vmin.f32 %v2924, %v2296
        %v2926 = vmin.f32 %v2925, %v2311
        %v2927 = vmin.f32 %v2926, %v2326
        %v2928 = vmin.f32 %v2927, %v2341
        %v2929 = vmin.f32 %v2928, %v2356
        %v2930 = vmin.f32 %v2929, %v2371
        %v2931 = vmin.f32 %v2930, %v2386
        %v2932 = vmin.f32 %v2931, %v2401
        %v2933 = vmin.f32 %v2932, %v2416
        %v2934 = vmin.f32 %v2933, %v2431
        %v2935 = vmin.f32 %v2934, %v2446
        %v2936 = vmin.f32 %v2935, %v2461
        %v2937 = vmin.f32 %v2936, %v2476
        %v2938 = vmin.f32 %v2937, %v2491
        %v2939 = vmin.f32 %v2938, %v2506
        %v2940 = vmin.f32 %v2939, %v2521
        %v2941 = vmin.f32 %v2940, %v2536
        %v2942 = vmin.f32 %v2941, %v2551
        %v2943 = vmin.f32 %v2942, %v2566
        %v2944 = vmin.f32 %v2943, %v2581
        %v2945 = vmin.f32 %v2944, %v2596
        %v2946 = vmin.f32 %v2945, %v2611
        %v2947 = vmin.f32 %v2946, %v2626
        %v2948 = vmin.f32 %v2947, %v2641
        %v2949 = vmin.f32 %v2948, %v2656
        %v2950 = vmin.f32 %v2949, %v2671
        %v2951 = vmin.f32 %v2950, %v2686
        %v2952 = vmin.f32 %v2951, %v2701
        %v2953 = vmin.f32 %v2952, %v2716
        %v2954 = vmin.f32 %v2953, %v2731
        %v2955 = vmin.f32 %v2954, %v2746
        %v2956 = vmin.f32 %v2955, %v2761
        %v2957 = vmin.f32 %v2956, %v2776
        %v2958 = vmin.f32 %v2957, %v2791
        %v2959 = vmin.f32 %v2958, %v2806
        %v2960 = vmin.f32 %v1178, %v1196
        %v2961 = vmin.f32 %v2960, %v1214
        %v2962 = vmin.f32 %v2961, %v1232
        %v2963 = vmin.f32 %v2962, %v1250
        %v2964 = vmin.f32 %v2963, %v1268
        %v2965 = vmin.f32 %v2964, %v1286
        %v2966 = vmin.f32 %v2965, %v1304
        %v2967 = vmin.f32 %v2966, %v1322
        %v2968 = vmin.f32 %v2967, %v1340
        %v2969 = vmin.f32 %v2968, %v1358
        %v2970 = vmin.f32 %v2969, %v1376
        %v2971 = vmin.f32 %v2970, %v1394
        %v2972 = vmin.f32 %v2971, %v1412
        %v2973 = vmin.f32 %v2972, %v1430
        %v2974 = vmin.f32 %v2973, %v1448
        %v2975 = vmin.f32 %v2974, %v1466
        %v2976 = vmin.f32 %v2975, %v1484
        %v2977 = vmin.f32 %v2976, %v1502
        %v2978 = vmin.f32 %v2977, %v1520
        %v2979 = vmin.f32 %v2978, %v1538
        %v2980 = vmin.f32 %v2979, %v1556
        %v2981 = vmin.f32 %v2980, %v1574
        %v2982 = vmin.f32 %v2981, %v1592
        %v2983 = vmin.f32 %v2982, %v1610
        %v2984 = vmin.f32 %v2983, %v1628
        %v2985 = vmin.f32 %v2984, %v1646
        %v2986 = vmin.f32 %v2985, %v1664
        %v2987 = vmin.f32 %v2986, %v1682
        %v2988 = vmin.f32 %v2987, %v1700
        %v2989 = vmin.f32 %v2988, %v1718
        %v2990 = vmin.f32 %v2989, %v1736
        %v2991 = vmin.f32 %v2990, %v1754
        %v2992 = vmin.f32 %v2991, %v1772
        %v2993 = vmin.f32 %v2992, %v1790
        %v2994 = vmin.f32 %v2993, %v1808
        %v2995 = vmin.f32 %v2994, %v1826
        %v2996 = vmin.f32 %v2995, %v1844
        %v2997 = vmin.f32 %v2996, %v1862
        %v2998 = vmin.f32 %v2997, %v1880
        %v2999 = vmin.f32 %v2998, %v1898
        %v3000 = vmin.f32 %v2999, %v1916
        %v3001 = vmin.f32 %v3000, %v1934
        %v3002 = vmin.f32 %v3001, %v1952
        %v3003 = vmin.f32 %v3002, %v1970
        %v3004 = vmin.f32 %v3003, %v1988
        %v3005 = vmin.f32 %v3004, %v2006
        %v3006 = vmin.f32 %v3005, %v2024
        %v3007 = vmin.f32 %v1180, %v1198
        %v3008 = vmin.f32 %v3007, %v1216
        %v3009 = vmin.f32 %v3008, %v1234
        %v3010 = vmin.f32 %v3009, %v1252
        %v3011 = vmin.f32 %v3010, %v1270
        %v3012 = vmin.f32 %v3011, %v1288
        %v3013 = vmin.f32 %v3012, %v1306
        %v3014 = vmin.f32 %v3013, %v1324
        %v3015 = vmin.f32 %v3014, %v1342
        %v3016 = vmin.f32 %v3015, %v1360
        %v3017 = vmin.f32 %v3016, %v1378
        %v3018 = vmin.f32 %v3017, %v1396
        %v3019 = vmin.f32 %v3018, %v1414
        %v3020 = vmin.f32 %v3019, %v1432
        %v3021 = vmin.f32 %v3020, %v1450
        %v3022 = vmin.f32 %v3021, %v1468
        %v3023 = vmin.f32 %v3022, %v1486
        %v3024 = vmin.f32 %v3023, %v1504
        %v3025 = vmin.f32 %v3024, %v1522
        %v3026 = vmin.f32 %v3025, %v1540
        %v3027 = vmin.f32 %v3026, %v1558
        %v3028 = vmin.f32 %v3027, %v1576
        %v3029 = vmin.f32 %v3028, %v1594
        %v3030 = vmin.f32 %v3029, %v1612
        %v3031 = vmin.f32 %v3030, %v1630
        %v3032 = vmin.f32 %v3031, %v1648
        %v3033 = vmin.f32 %v3032, %v1666
        %v3034 = vmin.f32 %v3033, %v1684
        %v3035 = vmin.f32 %v3034, %v1702
        %v3036 = vmin.f32 %v3035, %v1720
        %v3037 = vmin.f32 %v3036, %v1738
        %v3038 = vmin.f32 %v3037, %v1756
        %v3039 = vmin.f32 %v3038, %v1774
        %v3040 = vmin.f32 %v3039, %v1792
        %v3041 = vmin.f32 %v3040, %v1810
        %v3042 = vmin.f32 %v3041, %v1828
        %v3043 = vmin.f32 %v3042, %v1846
        %v3044 = vmin.f32 %v3043, %v1864
        %v3045 = vmin.f32 %v3044, %v1882
        %v3046 = vmin.f32 %v3045, %v1900
        %v3047 = vmin.f32 %v3046, %v1918
        %v3048 = vmin.f32 %v3047, %v1936
        %v3049 = vmin.f32 %v3048, %v1954
        %v3050 = vmin.f32 %v3049, %v1972
        %v3051 = vmin.f32 %v3050, %v1990
        %v3052 = vmin.f32 %v3051, %v2008
        %v3053 = vmin.f32 %v3052, %v2026
        %v3054 = vmin.f32 %v2106, %v2121
        %v3055 = vmin.f32 %v3054, %v2136
        %v3056 = vmin.f32 %v3055, %v2151
        %v3057 = vmin.f32 %v3056, %v2166
        %v3058 = vmin.f32 %v3057, %v2181
        %v3059 = vmin.f32 %v3058, %v2196
        %v3060 = vmin.f32 %v3059, %v2211
        %v3061 = vmin.f32 %v3060, %v2226
        %v3062 = vmin.f32 %v3061, %v2241
        %v3063 = vmin.f32 %v3062, %v2256
        %v3064 = vmin.f32 %v3063, %v2271
        %v3065 = vmin.f32 %v3064, %v2286
        %v3066 = vmin.f32 %v3065, %v2301
        %v3067 = vmin.f32 %v3066, %v2316
        %v3068 = vmin.f32 %v3067, %v2331
        %v3069 = vmin.f32 %v3068, %v2346
        %v3070 = vmin.f32 %v3069, %v2361
        %v3071 = vmin.f32 %v3070, %v2376
        %v3072 = vmin.f32 %v3071, %v2391
        %v3073 = vmin.f32 %v3072, %v2406
        %v3074 = vmin.f32 %v3073, %v2421
        %v3075 = vmin.f32 %v3074, %v2436
        %v3076 = vmin.f32 %v3075, %v2451
        %v3077 = vmin.f32 %v3076, %v2466
        %v3078 = vmin.f32 %v3077, %v2481
        %v3079 = vmin.f32 %v3078, %v2496
        %v3080 = vmin.f32 %v3079, %v2511
        %v3081 = vmin.f32 %v3080, %v2526
        %v3082 = vmin.f32 %v3081, %v2541
        %v3083 = vmin.f32 %v3082, %v2556
        %v3084 = vmin.f32 %v3083, %v2571
        %v3085 = vmin.f32 %v3084, %v2586
        %v3086 = vmin.f32 %v3085, %v2601
        %v3087 = vmin.f32 %v3086, %v2616
        %v3088 = vmin.f32 %v3087, %v2631
        %v3089 = vmin.f32 %v3088, %v2646
        %v3090 = vmin.f32 %v3089, %v2661
        %v3091 = vmin.f32 %v3090, %v2676
        %v3092 = vmin.f32 %v3091, %v2691
        %v3093 = vmin.f32 %v3092, %v2706
        %v3094 = vmin.f32 %v3093, %v2721
        %v3095 = vmin.f32 %v3094, %v2736
        %v3096 = vmin.f32 %v3095, %v2751
        %v3097 = vmin.f32 %v3096, %v2766
        %v3098 = vmin.f32 %v3097, %v2781
        %v3099 = vmin.f32 %v3098, %v2796
        %v3100 = vmin.f32 %v3099, %v2811
        %v3101 = vmin.f32 %v1184, %v1202
        %v3102 = vmin.f32 %v3101, %v1220
        %v3103 = vmin.f32 %v3102, %v1238
        %v3104 = vmin.f32 %v3103, %v1256
        %v3105 = vmin.f32 %v3104, %v1274
        %v3106 = vmin.f32 %v3105, %v1292
        %v3107 = vmin.f32 %v3106, %v1310
        %v3108 = vmin.f32 %v3107, %v1328
        %v3109 = vmin.f32 %v3108, %v1346
        %v3110 = vmin.f32 %v3109, %v1364
        %v3111 = vmin.f32 %v3110, %v1382
        %v3112 = vmin.f32 %v3111, %v1400
        %v3113 = vmin.f32 %v3112, %v1418
        %v3114 = vmin.f32 %v3113, %v1436
        %v3115 = vmin.f32 %v3114, %v1454
        %v3116 = vmin.f32 %v3115, %v1472
        %v3117 = vmin.f32 %v3116, %v1490
        %v3118 = vmin.f32 %v3117, %v1508
        %v3119 = vmin.f32 %v3118, %v1526
        %v3120 = vmin.f32 %v3119, %v1544
        %v3121 = vmin.f32 %v3120, %v1562
        %v3122 = vmin.f32 %v3121, %v1580
        %v3123 = vmin.f32 %v3122, %v1598
        %v3124 = vmin.f32 %v3123, %v1616
        %v3125 = vmin.f32 %v3124, %v1634
        %v3126 = vmin.f32 %v3125, %v1652
        %v3127 = vmin.f32 %v3126, %v1670
        %v3128 = vmin.f32 %v3127, %v1688
        %v3129 = vmin.f32 %v3128, %v1706
        %v3130 = vmin.f32 %v3129, %v1724
        %v3131 = vmin.f32 %v3130, %v1742
        %v3132 = vmin.f32 %v3131, %v1760
        %v3133 = vmin.f32 %v3132, %v1778
        %v3134 = vmin.f32 %v3133, %v1796
        %v3135 = vmin.f32 %v3134, %v1814
        %v3136 = vmin.f32 %v3135, %v1832
        %v3137 = vmin.f32 %v3136, %v1850
        %v3138 = vmin.f32 %v3137, %v1868
        %v3139 = vmin.f32 %v3138, %v1886
        %v3140 = vmin.f32 %v3139, %v1904
        %v3141 = vmin.f32 %v3140, %v1922
        %v3142 = vmin.f32 %v3141, %v1940
        %v3143 = vmin.f32 %v3142, %v1958
        %v3144 = vmin.f32 %v3143, %v1976
        %v3145 = vmin.f32 %v3144, %v1994
        %v3146 = vmin.f32 %v3145, %v2012
        %v3147 = vmin.f32 %v3146, %v2030
        %v3148 = vmin.f32 %v1186, %v1204
        %v3149 = vmin.f32 %v3148, %v1222
        %v3150 = vmin.f32 %v3149, %v1240
        %v3151 = vmin.f32 %v3150, %v1258
        %v3152 = vmin.f32 %v3151, %v1276
        %v3153 = vmin.f32 %v3152, %v1294
        %v3154 = vmin.f32 %v3153, %v1312
        %v3155 = vmin.f32 %v3154, %v1330
        %v3156 = vmin.f32 %v3155, %v1348
        %v3157 = vmin.f32 %v3156, %v1366
        %v3158 = vmin.f32 %v3157, %v1384
        %v3159 = vmin.f32 %v3158, %v1402
        %v3160 = vmin.f32 %v3159, %v1420
        %v3161 = vmin.f32 %v3160, %v1438
        %v3162 = vmin.f32 %v3161, %v1456
        %v3163 = vmin.f32 %v3162, %v1474
        %v3164 = vmin.f32 %v3163, %v1492
        %v3165 = vmin.f32 %v3164, %v1510
        %v3166 = vmin.f32 %v3165, %v1528
        %v3167 = vmin.f32 %v3166, %v1546
        %v3168 = vmin.f32 %v3167, %v1564
        %v3169 = vmin.f32 %v3168, %v1582
        %v3170 = vmin.f32 %v3169, %v1600
        %v3171 = vmin.f32 %v3170, %v1618
        %v3172 = vmin.f32 %v3171, %v1636
        %v3173 = vmin.f32 %v3172, %v1654
        %v3174 = vmin.f32 %v3173, %v1672
        %v3175 = vmin.f32 %v3174, %v1690
        %v3176 = vmin.f32 %v3175, %v1708
        %v3177 = vmin.f32 %v3176, %v1726
        %v3178 = vmin.f32 %v3177, %v1744
        %v3179 = vmin.f32 %v3178, %v1762
        %v3180 = vmin.f32 %v3179, %v1780
        %v3181 = vmin.f32 %v3180, %v1798
        %v3182 = vmin.f32 %v3181, %v1816
        %v3183 = vmin.f32 %v3182, %v1834
        %v3184 = vmin.f32 %v3183, %v1852
        %v3185 = vmin.f32 %v3184, %v1870
        %v3186 = vmin.f32 %v3185, %v1888
        %v3187 = vmin.f32 %v3186, %v1906
        %v3188 = vmin.f32 %v3187, %v1924
        %v3189 = vmin.f32 %v3188, %v1942
        %v3190 = vmin.f32 %v3189, %v1960
        %v3191 = vmin.f32 %v3190, %v1978
        %v3192 = vmin.f32 %v3191, %v1996
        %v3193 = vmin.f32 %v3192, %v2014
        %v3194 = vmin.f32 %v3193, %v2032
        %v3195 = vmin.f32 %v2111, %v2126
        %v3196 = vmin.f32 %v3195, %v2141
        %v3197 = vmin.f32 %v3196, %v2156
        %v3198 = vmin.f32 %v3197, %v2171
        %v3199 = vmin.f32 %v3198, %v2186
        %v3200 = vmin.f32 %v3199, %v2201
        %v3201 = vmin.f32 %v3200, %v2216
        %v3202 = vmin.f32 %v3201, %v2231
        %v3203 = vmin.f32 %v3202, %v2246
        %v3204 = vmin.f32 %v3203, %v2261
        %v3205 = vmin.f32 %v3204, %v2276
        %v3206 = vmin.f32 %v3205, %v2291
        %v3207 = vmin.f32 %v3206, %v2306
        %v3208 = vmin.f32 %v3207, %v2321
        %v3209 = vmin.f32 %v3208, %v2336
        %v3210 = vmin.f32 %v3209, %v2351
        %v3211 = vmin.f32 %v3210, %v2366
        %v3212 = vmin.f32 %v3211, %v2381
        %v3213 = vmin.f32 %v3212, %v2396
        %v3214 = vmin.f32 %v3213, %v2411
        %v3215 = vmin.f32 %v3214, %v2426
        %v3216 = vmin.f32 %v3215, %v2441
        %v3217 = vmin.f32 %v3216, %v2456
        %v3218 = vmin.f32 %v3217, %v2471
        %v3219 = vmin.f32 %v3218, %v2486
        %v3220 = vmin.f32 %v3219, %v2501
        %v3221 = vmin.f32 %v3220, %v2516
        %v3222 = vmin.f32 %v3221, %v2531
        %v3223 = vmin.f32 %v3222, %v2546
        %v3224 = vmin.f32 %v3223, %v2561
        %v3225 = vmin.f32 %v3224, %v2576
        %v3226 = vmin.f32 %v3225, %v2591
        %v3227 = vmin.f32 %v3226, %v2606
        %v3228 = vmin.f32 %v3227, %v2621
        %v3229 = vmin.f32 %v3228, %v2636
        %v3230 = vmin.f32 %v3229, %v2651
        %v3231 = vmin.f32 %v3230, %v2666
        %v3232 = vmin.f32 %v3231, %v2681
        %v3233 = vmin.f32 %v3232, %v2696
        %v3234 = vmin.f32 %v3233, %v2711
        %v3235 = vmin.f32 %v3234, %v2726
        %v3236 = vmin.f32 %v3235, %v2741
        %v3237 = vmin.f32 %v3236, %v2756
        %v3238 = vmin.f32 %v3237, %v2771
        %v3239 = vmin.f32 %v3238, %v2786
        %v3240 = vmin.f32 %v3239, %v2801
        %v3241 = vmin.f32 %v3240, %v2816
        %v3242 = vsub.f32 %v2865, %v1172
        %v3243 = vsub.f32 %v2912, %v1174
        %v3244 = vsub.f32 %v2959, %v2101
        %v3245 = vsub.f32 %v3006, %v1178
        %v3246 = vsub.f32 %v3053, %v1180
        %v3247 = vsub.f32 %v3100, %v2106
        %v3248 = vsub.f32 %v3147, %v1184
        %v3249 = vsub.f32 %v3194, %v1186
        %v3250 = vsub.f32 %v3241, %v2111
        %v3251 = vsub.f32 %v2865, %v1190
        %v3252 = vsub.f32 %v2912, %v1192
        %v3253 = vsub.f32 %v2959, %v2116
        %v3254 = vsub.f32 %v3006, %v1196
        %v3255 = vsub.f32 %v3053, %v1198
        %v3256 = vsub.f32 %v3100, %v2121
        %v3257 = vsub.f32 %v3147, %v1202
        %v3258 = vsub.f32 %v3194, %v1204
        %v3259 = vsub.f32 %v3241, %v2126
        %v3260 = vsub.f32 %v2865, %v1208
        %v3261 = vsub.f32 %v2912, %v1210
        %v3262 = vsub.f32 %v2959, %v2131
        %v3263 = vsub.f32 %v3006, %v1214
        %v3264 = vsub.f32 %v3053, %v1216
        %v3265 = vsub.f32 %v3100, %v2136
        %v3266 = vsub.f32 %v3147, %v1220
        %v3267 = vsub.f32 %v3194, %v1222
        %v3268 = vsub.f32 %v3241, %v2141
        %v3269 = vsub.f32 %v2865, %v1226
        %v3270 = vsub.f32 %v2912, %v1228
        %v3271 = vsub.f32 %v2959, %v2146
        %v3272 = vsub.f32 %v3006, %v1232
        %v3273 = vsub.f32 %v3053, %v1234
        %v3274 = vsub.f32 %v3100, %v2151
        %v3275 = vsub.f32 %v3147, %v1238
        %v3276 = vsub.f32 %v3194, %v1240
        %v3277 = vsub.f32 %v3241, %v2156
        %v3278 = vsub.f32 %v2865, %v1244
        %v3279 = vsub.f32 %v2912, %v1246
        %v3280 = vsub.f32 %v2959, %v2161
        %v3281 = vsub.f32 %v3006, %v1250
        %v3282 = vsub.f32 %v3053, %v1252
        %v3283 = vsub.f32 %v3100, %v2166
        %v3284 = vsub.f32 %v3147, %v1256
        %v3285 = vsub.f32 %v3194, %v1258
        %v3286 = vsub.f32 %v3241, %v2171
        %v3287 = vsub.f32 %v2865, %v1262
        %v3288 = vsub.f32 %v2912, %v1264
        %v3289 = vsub.f32 %v2959, %v2176
        %v3290 = vsub.f32 %v3006, %v1268
        %v3291 = vsub.f32 %v3053, %v1270
        %v3292 = vsub.f32 %v3100, %v2181
        %v3293 = vsub.f32 %v3147, %v1274
        %v3294 = vsub.f32 %v3194, %v1276
        %v3295 = vsub.f32 %v3241, %v2186
        %v3296 = vsub.f32 %v2865, %v1280
        %v3297 = vsub.f32 %v2912, %v1282
        %v3298 = vsub.f32 %v2959, %v2191
        %v3299 = vsub.f32 %v3006, %v1286
        %v3300 = vsub.f32 %v3053, %v1288
        %v3301 = vsub.f32 %v3100, %v2196
        %v3302 = vsub.f32 %v3147, %v1292
        %v3303 = vsub.f32 %v3194, %v1294
        %v3304 = vsub.f32 %v3241, %v2201
        %v3305 = vsub.f32 %v2865, %v1298
        %v3306 = vsub.f32 %v2912, %v1300
        %v3307 = vsub.f32 %v2959, %v2206
        %v3308 = vsub.f32 %v3006, %v1304
        %v3309 = vsub.f32 %v3053, %v1306
        %v3310 = vsub.f32 %v3100, %v2211
        %v3311 = vsub.f32 %v3147, %v1310
        %v3312 = vsub.f32 %v3194, %v1312
        %v3313 = vsub.f32 %v3241, %v2216
        %v3314 = vsub.f32 %v2865, %v1316
        %v3315 = vsub.f32 %v2912, %v1318
        %v3316 = vsub.f32 %v2959, %v2221
        %v3317 = vsub.f32 %v3006, %v1322
        %v3318 = vsub.f32 %v3053, %v1324
        %v3319 = vsub.f32 %v3100, %v2226
        %v3320 = vsub.f32 %v3147, %v1328
        %v3321 = vsub.f32 %v3194, %v1330
        %v3322 = vsub.f32 %v3241, %v2231
        %v3323 = vsub.f32 %v2865, %v1334
        %v3324 = vsub.f32 %v2912, %v1336
        %v3325 = vsub.f32 %v2959, %v2236
        %v3326 = vsub.f32 %v3006, %v1340
        %v3327 = vsub.f32 %v3053, %v1342
        %v3328 = vsub.f32 %v3100, %v2241
        %v3329 = vsub.f32 %v3147, %v1346
        %v3330 = vsub.f32 %v3194, %v1348
        %v3331 = vsub.f32 %v3241, %v2246
        %v3332 = vsub.f32 %v2865, %v1352
        %v3333 = vsub.f32 %v2912, %v1354
        %v3334 = vsub.f32 %v2959, %v2251
        %v3335 = vsub.f32 %v3006, %v1358
        %v3336 = vsub.f32 %v3053, %v1360
        %v3337 = vsub.f32 %v3100, %v2256
        %v3338 = vsub.f32 %v3147, %v1364
        %v3339 = vsub.f32 %v3194, %v1366
        %v3340 = vsub.f32 %v3241, %v2261
        %v3341 = vsub.f32 %v2865, %v1370
        %v3342 = vsub.f32 %v2912, %v1372
        %v3343 = vsub.f32 %v2959, %v2266
        %v3344 = vsub.f32 %v3006, %v1376
        %v3345 = vsub.f32 %v3053, %v1378
        %v3346 = vsub.f32 %v3100, %v2271
        %v3347 = vsub.f32 %v3147, %v1382
        %v3348 = vsub.f32 %v3194, %v1384
        %v3349 = vsub.f32 %v3241, %v2276
        %v3350 = vsub.f32 %v2865, %v1388
        %v3351 = vsub.f32 %v2912, %v1390
        %v3352 = vsub.f32 %v2959, %v2281
        %v3353 = vsub.f32 %v3006, %v1394
        %v3354 = vsub.f32 %v3053, %v1396
        %v3355 = vsub.f32 %v3100, %v2286
        %v3356 = vsub.f32 %v3147, %v1400
        %v3357 = vsub.f32 %v3194, %v1402
        %v3358 = vsub.f32 %v3241, %v2291
        %v3359 = vsub.f32 %v2865, %v1406
        %v3360 = vsub.f32 %v2912, %v1408
        %v3361 = vsub.f32 %v2959, %v2296
        %v3362 = vsub.f32 %v3006, %v1412
        %v3363 = vsub.f32 %v3053, %v1414
        %v3364 = vsub.f32 %v3100, %v2301
        %v3365 = vsub.f32 %v3147, %v1418
        %v3366 = vsub.f32 %v3194, %v1420
        %v3367 = vsub.f32 %v3241, %v2306
        %v3368 = vsub.f32 %v2865, %v1424
        %v3369 = vsub.f32 %v2912, %v1426
        %v3370 = vsub.f32 %v2959, %v2311
        %v3371 = vsub.f32 %v3006, %v1430
        %v3372 = vsub.f32 %v3053, %v1432
        %v3373 = vsub.f32 %v3100, %v2316
        %v3374 = vsub.f32 %v3147, %v1436
        %v3375 = vsub.f32 %v3194, %v1438
        %v3376 = vsub.f32 %v3241, %v2321
        %v3377 = vsub.f32 %v2865, %v1442
        %v3378 = vsub.f32 %v2912, %v1444
        %v3379 = vsub.f32 %v2959, %v2326
        %v3380 = vsub.f32 %v3006, %v1448
        %v3381 = vsub.f32 %v3053, %v1450
        %v3382 = vsub.f32 %v3100, %v2331
        %v3383 = vsub.f32 %v3147, %v1454
        %v3384 = vsub.f32 %v3194, %v1456
        %v3385 = vsub.f32 %v3241, %v2336
        %v3386 = vsub.f32 %v2865, %v1460
        %v3387 = vsub.f32 %v2912, %v1462
        %v3388 = vsub.f32 %v2959, %v2341
        %v3389 = vsub.f32 %v3006, %v1466
        %v3390 = vsub.f32 %v3053, %v1468
        %v3391 = vsub.f32 %v3100, %v2346
        %v3392 = vsub.f32 %v3147, %v1472
        %v3393 = vsub.f32 %v3194, %v1474
        %v3394 = vsub.f32 %v3241, %v2351
        %v3395 = vsub.f32 %v2865, %v1478
        %v3396 = vsub.f32 %v2912, %v1480
        %v3397 = vsub.f32 %v2959, %v2356
        %v3398 = vsub.f32 %v3006, %v1484
        %v3399 = vsub.f32 %v3053, %v1486
        %v3400 = vsub.f32 %v3100, %v2361
        %v3401 = vsub.f32 %v3147, %v1490
        %v3402 = vsub.f32 %v3194, %v1492
        %v3403 = vsub.f32 %v3241, %v2366
        %v3404 = vsub.f32 %v2865, %v1496
        %v3405 = vsub.f32 %v2912, %v1498
        %v3406 = vsub.f32 %v2959, %v2371
        %v3407 = vsub.f32 %v3006, %v1502
        %v3408 = vsub.f32 %v3053, %v1504
        %v3409 = vsub.f32 %v3100, %v2376
        %v3410 = vsub.f32 %v3147, %v1508
        %v3411 = vsub.f32 %v3194, %v1510
        %v3412 = vsub.f32 %v3241, %v2381
        %v3413 = vsub.f32 %v2865, %v1514
        %v3414 = vsub.f32 %v2912, %v1516
        %v3415 = vsub.f32 %v2959, %v2386
        %v3416 = vsub.f32 %v3006, %v1520
        %v3417 = vsub.f32 %v3053, %v1522
        %v3418 = vsub.f32 %v3100, %v2391
        %v3419 = vsub.f32 %v3147, %v1526
        %v3420 = vsub.f32 %v3194, %v1528
        %v3421 = vsub.f32 %v3241, %v2396
        %v3422 = vsub.f32 %v2865, %v1532
        %v3423 = vsub.f32 %v2912, %v1534
        %v3424 = vsub.f32 %v2959, %v2401
        %v3425 = vsub.f32 %v3006, %v1538
        %v3426 = vsub.f32 %v3053, %v1540
        %v3427 = vsub.f32 %v3100, %v2406
        %v3428 = vsub.f32 %v3147, %v1544
        %v3429 = vsub.f32 %v3194, %v1546
        %v3430 = vsub.f32 %v3241, %v2411
        %v3431 = vsub.f32 %v2865, %v1550
        %v3432 = vsub.f32 %v2912, %v1552
        %v3433 = vsub.f32 %v2959, %v2416
        %v3434 = vsub.f32 %v3006, %v1556
        %v3435 = vsub.f32 %v3053, %v1558
        %v3436 = vsub.f32 %v3100, %v2421
        %v3437 = vsub.f32 %v3147, %v1562
        %v3438 = vsub.f32 %v3194, %v1564
        %v3439 = vsub.f32 %v3241, %v2426
        %v3440 = vsub.f32 %v2865, %v1568
        %v3441 = vsub.f32 %v2912, %v1570
        %v3442 = vsub.f32 %v2959, %v2431
        %v3443 = vsub.f32 %v3006, %v1574
        %v3444 = vsub.f32 %v3053, %v1576
        %v3445 = vsub.f32 %v3100, %v2436
        %v3446 = vsub.f32 %v3147, %v1580
        %v3447 = vsub.f32 %v3194, %v1582
        %v3448 = vsub.f32 %v3241, %v2441
        %v3449 = vsub.f32 %v2865, %v1586
        %v3450 = vsub.f32 %v2912, %v1588
        %v3451 = vsub.f32 %v2959, %v2446
        %v3452 = vsub.f32 %v3006, %v1592
        %v3453 = vsub.f32 %v3053, %v1594
        %v3454 = vsub.f32 %v3100, %v2451
        %v3455 = vsub.f32 %v3147, %v1598
        %v3456 = vsub.f32 %v3194, %v1600
        %v3457 = vsub.f32 %v3241, %v2456
        %v3458 = vsub.f32 %v2865, %v1604
        %v3459 = vsub.f32 %v2912, %v1606
        %v3460 = vsub.f32 %v2959, %v2461
        %v3461 = vsub.f32 %v3006, %v1610
        %v3462 = vsub.f32 %v3053, %v1612
        %v3463 = vsub.f32 %v3100, %v2466
        %v3464 = vsub.f32 %v3147, %v1616
        %v3465 = vsub.f32 %v3194, %v1618
        %v3466 = vsub.f32 %v3241, %v2471
        %v3467 = vsub.f32 %v2865, %v1622
        %v3468 = vsub.f32 %v2912, %v1624
        %v3469 = vsub.f32 %v2959, %v2476
        %v3470 = vsub.f32 %v3006, %v1628
        %v3471 = vsub.f32 %v3053, %v1630
        %v3472 = vsub.f32 %v3100, %v2481
        %v3473 = vsub.f32 %v3147, %v1634
        %v3474 = vsub.f32 %v3194, %v1636
        %v3475 = vsub.f32 %v3241, %v2486
        %v3476 = vsub.f32 %v2865, %v1640
        %v3477 = vsub.f32 %v2912, %v1642
        %v3478 = vsub.f32 %v2959, %v2491
        %v3479 = vsub.f32 %v3006, %v1646
        %v3480 = vsub.f32 %v3053, %v1648
        %v3481 = vsub.f32 %v3100, %v2496
        %v3482 = vsub.f32 %v3147, %v1652
        %v3483 = vsub.f32 %v3194, %v1654
        %v3484 = vsub.f32 %v3241, %v2501
        %v3485 = vsub.f32 %v2865, %v1658
        %v3486 = vsub.f32 %v2912, %v1660
        %v3487 = vsub.f32 %v2959, %v2506
        %v3488 = vsub.f32 %v3006, %v1664
        %v3489 = vsub.f32 %v3053, %v1666
        %v3490 = vsub.f32 %v3100, %v2511
        %v3491 = vsub.f32 %v3147, %v1670
        %v3492 = vsub.f32 %v3194, %v1672
        %v3493 = vsub.f32 %v3241, %v2516
        %v3494 = vsub.f32 %v2865, %v1676
        %v3495 = vsub.f32 %v2912, %v1678
        %v3496 = vsub.f32 %v2959, %v2521
        %v3497 = vsub.f32 %v3006, %v1682
        %v3498 = vsub.f32 %v3053, %v1684
        %v3499 = vsub.f32 %v3100, %v2526
        %v3500 = vsub.f32 %v3147, %v1688
        %v3501 = vsub.f32 %v3194, %v1690
        %v3502 = vsub.f32 %v3241, %v2531
        %v3503 = vsub.f32 %v2865, %v1694
        %v3504 = vsub.f32 %v2912, %v1696
        %v3505 = vsub.f32 %v2959, %v2536
        %v3506 = vsub.f32 %v3006, %v1700
        %v3507 = vsub.f32 %v3053, %v1702
        %v3508 = vsub.f32 %v3100, %v2541
        %v3509 = vsub.f32 %v3147, %v1706
        %v3510 = vsub.f32 %v3194, %v1708
        %v3511 = vsub.f32 %v3241, %v2546
        %v3512 = vsub.f32 %v2865, %v1712
        %v3513 = vsub.f32 %v2912, %v1714
        %v3514 = vsub.f32 %v2959, %v2551
        %v3515 = vsub.f32 %v3006, %v1718
        %v3516 = vsub.f32 %v3053, %v1720
        %v3517 = vsub.f32 %v3100, %v2556
        %v3518 = vsub.f32 %v3147, %v1724
        %v3519 = vsub.f32 %v3194, %v1726
        %v3520 = vsub.f32 %v3241, %v2561
        %v3521 = vsub.f32 %v2865, %v1730
        %v3522 = vsub.f32 %v2912, %v1732
        %v3523 = vsub.f32 %v2959, %v2566
        %v3524 = vsub.f32 %v3006, %v1736
        %v3525 = vsub.f32 %v3053, %v1738
        %v3526 = vsub.f32 %v3100, %v2571
        %v3527 = vsub.f32 %v3147, %v1742
        %v3528 = vsub.f32 %v3194, %v1744
        %v3529 = vsub.f32 %v3241, %v2576
        %v3530 = vsub.f32 %v2865, %v1748
        %v3531 = vsub.f32 %v2912, %v1750
        %v3532 = vsub.f32 %v2959, %v2581
        %v3533 = vsub.f32 %v3006, %v1754
        %v3534 = vsub.f32 %v3053, %v1756
        %v3535 = vsub.f32 %v3100, %v2586
        %v3536 = vsub.f32 %v3147, %v1760
        %v3537 = vsub.f32 %v3194, %v1762
        %v3538 = vsub.f32 %v3241, %v2591
        %v3539 = vsub.f32 %v2865, %v1766
        %v3540 = vsub.f32 %v2912, %v1768
        %v3541 = vsub.f32 %v2959, %v2596
        %v3542 = vsub.f32 %v3006, %v1772
        %v3543 = vsub.f32 %v3053, %v1774
        %v3544 = vsub.f32 %v3100, %v2601
        %v3545 = vsub.f32 %v3147, %v1778
        %v3546 = vsub.f32 %v3194, %v1780
        %v3547 = vsub.f32 %v3241, %v2606
        %v3548 = vsub.f32 %v2865, %v1784
        %v3549 = vsub.f32 %v2912, %v1786
        %v3550 = vsub.f32 %v2959, %v2611
        %v3551 = vsub.f32 %v3006, %v1790
        %v3552 = vsub.f32 %v3053, %v1792
        %v3553 = vsub.f32 %v3100, %v2616
        %v3554 = vsub.f32 %v3147, %v1796
        %v3555 = vsub.f32 %v3194, %v1798
        %v3556 = vsub.f32 %v3241, %v2621
        %v3557 = vsub.f32 %v2865, %v1802
        %v3558 = vsub.f32 %v2912, %v1804
        %v3559 = vsub.f32 %v2959, %v2626
        %v3560 = vsub.f32 %v3006, %v1808
        %v3561 = vsub.f32 %v3053, %v1810
        %v3562 = vsub.f32 %v3100, %v2631
        %v3563 = vsub.f32 %v3147, %v1814
        %v3564 = vsub.f32 %v3194, %v1816
        %v3565 = vsub.f32 %v3241, %v2636
        %v3566 = vsub.f32 %v2865, %v1820
        %v3567 = vsub.f32 %v2912, %v1822
        %v3568 = vsub.f32 %v2959, %v2641
        %v3569 = vsub.f32 %v3006, %v1826
        %v3570 = vsub.f32 %v3053, %v1828
        %v3571 = vsub.f32 %v3100, %v2646
        %v3572 = vsub.f32 %v3147, %v1832
        %v3573 = vsub.f32 %v3194, %v1834
        %v3574 = vsub.f32 %v3241, %v2651
        %v3575 = vsub.f32 %v2865, %v1838
        %v3576 = vsub.f32 %v2912, %v1840
        %v3577 = vsub.f32 %v2959, %v2656
        %v3578 = vsub.f32 %v3006, %v1844
        %v3579 = vsub.f32 %v3053, %v1846
        %v3580 = vsub.f32 %v3100, %v2661
        %v3581 = vsub.f32 %v3147, %v1850
        %v3582 = vsub.f32 %v3194, %v1852
        %v3583 = vsub.f32 %v3241, %v2666
        %v3584 = vsub.f32 %v2865, %v1856
        %v3585 = vsub.f32 %v2912, %v1858
        %v3586 = vsub.f32 %v2959, %v2671
        %v3587 = vsub.f32 %v3006, %v1862
        %v3588 = vsub.f32 %v3053, %v1864
        %v3589 = vsub.f32 %v3100, %v2676
        %v3590 = vsub.f32 %v3147, %v1868
        %v3591 = vsub.f32 %v3194, %v1870
        %v3592 = vsub.f32 %v3241, %v2681
        %v3593 = vsub.f32 %v2865, %v1874
        %v3594 = vsub.f32 %v2912, %v1876
        %v3595 = vsub.f32 %v2959, %v2686
        %v3596 = vsub.f32 %v3006, %v1880
        %v3597 = vsub.f32 %v3053, %v1882
        %v3598 = vsub.f32 %v3100, %v2691
        %v3599 = vsub.f32 %v3147, %v1886
        %v3600 = vsub.f32 %v3194, %v1888
        %v3601 = vsub.f32 %v3241, %v2696
        %v3602 = vsub.f32 %v2865, %v1892
        %v3603 = vsub.f32 %v2912, %v1894
        %v3604 = vsub.f32 %v2959, %v2701
        %v3605 = vsub.f32 %v3006, %v1898
        %v3606 = vsub.f32 %v3053, %v1900
        %v3607 = vsub.f32 %v3100, %v2706
        %v3608 = vsub.f32 %v3147, %v1904
        %v3609 = vsub.f32 %v3194, %v1906
        %v3610 = vsub.f32 %v3241, %v2711
        %v3611 = vsub.f32 %v2865, %v1910
        %v3612 = vsub.f32 %v2912, %v1912
        %v3613 = vsub.f32 %v2959, %v2716
        %v3614 = vsub.f32 %v3006, %v1916
        %v3615 = vsub.f32 %v3053, %v1918
        %v3616 = vsub.f32 %v3100, %v2721
        %v3617 = vsub.f32 %v3147, %v1922
        %v3618 = vsub.f32 %v3194, %v1924
        %v3619 = vsub.f32 %v3241, %v2726
        %v3620 = vsub.f32 %v2865, %v1928
        %v3621 = vsub.f32 %v2912, %v1930
        %v3622 = vsub.f32 %v2959, %v2731
        %v3623 = vsub.f32 %v3006, %v1934
        %v3624 = vsub.f32 %v3053, %v1936
        %v3625 = vsub.f32 %v3100, %v2736
        %v3626 = vsub.f32 %v3147, %v1940
        %v3627 = vsub.f32 %v3194, %v1942
        %v3628 = vsub.f32 %v3241, %v2741
        %v3629 = vsub.f32 %v2865, %v1946
        %v3630 = vsub.f32 %v2912, %v1948
        %v3631 = vsub.f32 %v2959, %v2746
        %v3632 = vsub.f32 %v3006, %v1952
        %v3633 = vsub.f32 %v3053, %v1954
        %v3634 = vsub.f32 %v3100, %v2751
        %v3635 = vsub.f32 %v3147, %v1958
        %v3636 = vsub.f32 %v3194, %v1960
        %v3637 = vsub.f32 %v3241, %v2756
        %v3638 = vsub.f32 %v2865, %v1964
        %v3639 = vsub.f32 %v2912, %v1966
        %v3640 = vsub.f32 %v2959, %v2761
        %v3641 = vsub.f32 %v3006, %v1970
        %v3642 = vsub.f32 %v3053, %v1972
        %v3643 = vsub.f32 %v3100, %v2766
        %v3644 = vsub.f32 %v3147, %v1976
        %v3645 = vsub.f32 %v3194, %v1978
        %v3646 = vsub.f32 %v3241, %v2771
        %v3647 = vsub.f32 %v2865, %v1982
        %v3648 = vsub.f32 %v2912, %v1984
        %v3649 = vsub.f32 %v2959, %v2776
        %v3650 = vsub.f32 %v3006, %v1988
        %v3651 = vsub.f32 %v3053, %v1990
        %v3652 = vsub.f32 %v3100, %v2781
        %v3653 = vsub.f32 %v3147, %v1994
        %v3654 = vsub.f32 %v3194, %v1996
        %v3655 = vsub.f32 %v3241, %v2786
        %v3656 = vsub.f32 %v2865, %v2000
        %v3657 = vsub.f32 %v2912, %v2002
        %v3658 = vsub.f32 %v2959, %v2791
        %v3659 = vsub.f32 %v3006, %v2006
        %v3660 = vsub.f32 %v3053, %v2008
        %v3661 = vsub.f32 %v3100, %v2796
        %v3662 = vsub.f32 %v3147, %v2012
        %v3663 = vsub.f32 %v3194, %v2014
        %v3664 = vsub.f32 %v3241, %v2801
        %v3665 = vsub.f32 %v2865, %v2018
        %v3666 = vsub.f32 %v2912, %v2020
        %v3667 = vsub.f32 %v2959, %v2806
        %v3668 = vsub.f32 %v3006, %v2024
        %v3669 = vsub.f32 %v3053, %v2026
        %v3670 = vsub.f32 %v3100, %v2811
        %v3671 = vsub.f32 %v3147, %v2030
        %v3672 = vsub.f32 %v3194, %v2032
        %v3673 = vsub.f32 %v3241, %v2816
        %v3674 = vmul.f32 %v3242, 1.442695
        %v3675 = vpow.pop %v3674
        %v3676 = vmul.f32 %v3243, 1.442695
        %v3677 = vpow.pop %v3676
        %v3678 = vmul.f32 %v3244, 1.442695
        %v3679 = vpow.pop %v3678
        %v3680 = vmul.f32 %v3245, 1.442695
        %v3681 = vpow.pop %v3680
        %v3682 = vmul.f32 %v3246, 1.442695
        %v3683 = vpow.pop %v3682
        %v3684 = vmul.f32 %v3247, 1.442695
        %v3685 = vpow.pop %v3684
        %v3686 = vmul.f32 %v3248, 1.442695
        %v3687 = vpow.pop %v3686
        %v3688 = vmul.f32 %v3249, 1.442695
        %v3689 = vpow.pop %v3688
        %v3690 = vmul.f32 %v3250, 1.442695
        %v3691 = vpow.pop %v3690
        %v3692 = vmul.f32 %v3251, 1.442695
        %v3693 = vpow.pop %v3692
        %v3694 = vmul.f32 %v3252, 1.442695
        %v3695 = vpow.pop %v3694
        %v3696 = vmul.f32 %v3253, 1.442695
        %v3697 = vpow.pop %v3696
        %v3698 = vmul.f32 %v3254, 1.442695
        %v3699 = vpow.pop %v3698
        %v3700 = vmul.f32 %v3255, 1.442695
        %v3701 = vpow.pop %v3700
        %v3702 = vmul.f32 %v3256, 1.442695
        %v3703 = vpow.pop %v3702
        %v3704 = vmul.f32 %v3257, 1.442695
        %v3705 = vpow.pop %v3704
        %v3706 = vmul.f32 %v3258, 1.442695
        %v3707 = vpow.pop %v3706
        %v3708 = vmul.f32 %v3259, 1.442695
        %v3709 = vpow.pop %v3708
        %v3710 = vmul.f32 %v3260, 1.442695
        %v3711 = vpow.pop %v3710
        %v3712 = vmul.f32 %v3261, 1.442695
        %v3713 = vpow.pop %v3712
        %v3714 = vmul.f32 %v3262, 1.442695
        %v3715 = vpow.pop %v3714
        %v3716 = vmul.f32 %v3263, 1.442695
        %v3717 = vpow.pop %v3716
        %v3718 = vmul.f32 %v3264, 1.442695
        %v3719 = vpow.pop %v3718
        %v3720 = vmul.f32 %v3265, 1.442695
        %v3721 = vpow.pop %v3720
        %v3722 = vmul.f32 %v3266, 1.442695
        %v3723 = vpow.pop %v3722
        %v3724 = vmul.f32 %v3267, 1.442695
        %v3725 = vpow.pop %v3724
        %v3726 = vmul.f32 %v3268, 1.442695
        %v3727 = vpow.pop %v3726
        %v3728 = vmul.f32 %v3269, 1.442695
        %v3729 = vpow.pop %v3728
        %v3730 = vmul.f32 %v3270, 1.442695
        %v3731 = vpow.pop %v3730
        %v3732 = vmul.f32 %v3271, 1.442695
        %v3733 = vpow.pop %v3732
        %v3734 = vmul.f32 %v3272, 1.442695
        %v3735 = vpow.pop %v3734
        %v3736 = vmul.f32 %v3273, 1.442695
        %v3737 = vpow.pop %v3736
        %v3738 = vmul.f32 %v3274, 1.442695
        %v3739 = vpow.pop %v3738
        %v3740 = vmul.f32 %v3275, 1.442695
        %v3741 = vpow.pop %v3740
        %v3742 = vmul.f32 %v3276, 1.442695
        %v3743 = vpow.pop %v3742
        %v3744 = vmul.f32 %v3277, 1.442695
        %v3745 = vpow.pop %v3744
        %v3746 = vmul.f32 %v3278, 1.442695
        %v3747 = vpow.pop %v3746
        %v3748 = vmul.f32 %v3279, 1.442695
        %v3749 = vpow.pop %v3748
        %v3750 = vmul.f32 %v3280, 1.442695
        %v3751 = vpow.pop %v3750
        %v3752 = vmul.f32 %v3281, 1.442695
        %v3753 = vpow.pop %v3752
        %v3754 = vmul.f32 %v3282, 1.442695
        %v3755 = vpow.pop %v3754
        %v3756 = vmul.f32 %v3283, 1.442695
        %v3757 = vpow.pop %v3756
        %v3758 = vmul.f32 %v3284, 1.442695
        %v3759 = vpow.pop %v3758
        %v3760 = vmul.f32 %v3285, 1.442695
        %v3761 = vpow.pop %v3760
        %v3762 = vmul.f32 %v3286, 1.442695
        %v3763 = vpow.pop %v3762
        %v3764 = vmul.f32 %v3287, 1.442695
        %v3765 = vpow.pop %v3764
        %v3766 = vmul.f32 %v3288, 1.442695
        %v3767 = vpow.pop %v3766
        %v3768 = vmul.f32 %v3289, 1.442695
        %v3769 = vpow.pop %v3768
        %v3770 = vmul.f32 %v3290, 1.442695
        %v3771 = vpow.pop %v3770
        %v3772 = vmul.f32 %v3291, 1.442695
        %v3773 = vpow.pop %v3772
        %v3774 = vmul.f32 %v3292, 1.442695
        %v3775 = vpow.pop %v3774
        %v3776 = vmul.f32 %v3293, 1.442695
        %v3777 = vpow.pop %v3776
        %v3778 = vmul.f32 %v3294, 1.442695
        %v3779 = vpow.pop %v3778
        %v3780 = vmul.f32 %v3295, 1.442695
        %v3781 = vpow.pop %v3780
        %v3782 = vmul.f32 %v3296, 1.442695
        %v3783 = vpow.pop %v3782
        %v3784 = vmul.f32 %v3297, 1.442695
        %v3785 = vpow.pop %v3784
        %v3786 = vmul.f32 %v3298, 1.442695
        %v3787 = vpow.pop %v3786
        %v3788 = vmul.f32 %v3299, 1.442695
        %v3789 = vpow.pop %v3788
        %v3790 = vmul.f32 %v3300, 1.442695
        %v3791 = vpow.pop %v3790
        %v3792 = vmul.f32 %v3301, 1.442695
        %v3793 = vpow.pop %v3792
        %v3794 = vmul.f32 %v3302, 1.442695
        %v3795 = vpow.pop %v3794
        %v3796 = vmul.f32 %v3303, 1.442695
        %v3797 = vpow.pop %v3796
        %v3798 = vmul.f32 %v3304, 1.442695
        %v3799 = vpow.pop %v3798
        %v3800 = vmul.f32 %v3305, 1.442695
        %v3801 = vpow.pop %v3800
        %v3802 = vmul.f32 %v3306, 1.442695
        %v3803 = vpow.pop %v3802
        %v3804 = vmul.f32 %v3307, 1.442695
        %v3805 = vpow.pop %v3804
        %v3806 = vmul.f32 %v3308, 1.442695
        %v3807 = vpow.pop %v3806
        %v3808 = vmul.f32 %v3309, 1.442695
        %v3809 = vpow.pop %v3808
        %v3810 = vmul.f32 %v3310, 1.442695
        %v3811 = vpow.pop %v3810
        %v3812 = vmul.f32 %v3311, 1.442695
        %v3813 = vpow.pop %v3812
        %v3814 = vmul.f32 %v3312, 1.442695
        %v3815 = vpow.pop %v3814
        %v3816 = vmul.f32 %v3313, 1.442695
        %v3817 = vpow.pop %v3816
        %v3818 = vmul.f32 %v3314, 1.442695
        %v3819 = vpow.pop %v3818
        %v3820 = vmul.f32 %v3315, 1.442695
        %v3821 = vpow.pop %v3820
        %v3822 = vmul.f32 %v3316, 1.442695
        %v3823 = vpow.pop %v3822
        %v3824 = vmul.f32 %v3317, 1.442695
        %v3825 = vpow.pop %v3824
        %v3826 = vmul.f32 %v3318, 1.442695
        %v3827 = vpow.pop %v3826
        %v3828 = vmul.f32 %v3319, 1.442695
        %v3829 = vpow.pop %v3828
        %v3830 = vmul.f32 %v3320, 1.442695
        %v3831 = vpow.pop %v3830
        %v3832 = vmul.f32 %v3321, 1.442695
        %v3833 = vpow.pop %v3832
        %v3834 = vmul.f32 %v3322, 1.442695
        %v3835 = vpow.pop %v3834
        %v3836 = vmul.f32 %v3323, 1.442695
        %v3837 = vpow.pop %v3836
        %v3838 = vmul.f32 %v3324, 1.442695
        %v3839 = vpow.pop %v3838
        %v3840 = vmul.f32 %v3325, 1.442695
        %v3841 = vpow.pop %v3840
        %v3842 = vmul.f32 %v3326, 1.442695
        %v3843 = vpow.pop %v3842
        %v3844 = vmul.f32 %v3327, 1.442695
        %v3845 = vpow.pop %v3844
        %v3846 = vmul.f32 %v3328, 1.442695
        %v3847 = vpow.pop %v3846
        %v3848 = vmul.f32 %v3329, 1.442695
        %v3849 = vpow.pop %v3848
        %v3850 = vmul.f32 %v3330, 1.442695
        %v3851 = vpow.pop %v3850
        %v3852 = vmul.f32 %v3331, 1.442695
        %v3853 = vpow.pop %v3852
        %v3854 = vmul.f32 %v3332, 1.442695
        %v3855 = vpow.pop %v3854
        %v3856 = vmul.f32 %v3333, 1.442695
        %v3857 = vpow.pop %v3856
        %v3858 = vmul.f32 %v3334, 1.442695
        %v3859 = vpow.pop %v3858
        %v3860 = vmul.f32 %v3335, 1.442695
        %v3861 = vpow.pop %v3860
        %v3862 = vmul.f32 %v3336, 1.442695
        %v3863 = vpow.pop %v3862
        %v3864 = vmul.f32 %v3337, 1.442695
        %v3865 = vpow.pop %v3864
        %v3866 = vmul.f32 %v3338, 1.442695
        %v3867 = vpow.pop %v3866
        %v3868 = vmul.f32 %v3339, 1.442695
        %v3869 = vpow.pop %v3868
        %v3870 = vmul.f32 %v3340, 1.442695
        %v3871 = vpow.pop %v3870
        %v3872 = vmul.f32 %v3341, 1.442695
        %v3873 = vpow.pop %v3872
        %v3874 = vmul.f32 %v3342, 1.442695
        %v3875 = vpow.pop %v3874
        %v3876 = vmul.f32 %v3343, 1.442695
        %v3877 = vpow.pop %v3876
        %v3878 = vmul.f32 %v3344, 1.442695
        %v3879 = vpow.pop %v3878
        %v3880 = vmul.f32 %v3345, 1.442695
        %v3881 = vpow.pop %v3880
        %v3882 = vmul.f32 %v3346, 1.442695
        %v3883 = vpow.pop %v3882
        %v3884 = vmul.f32 %v3347, 1.442695
        %v3885 = vpow.pop %v3884
        %v3886 = vmul.f32 %v3348, 1.442695
        %v3887 = vpow.pop %v3886
        %v3888 = vmul.f32 %v3349, 1.442695
        %v3889 = vpow.pop %v3888
        %v3890 = vmul.f32 %v3350, 1.442695
        %v3891 = vpow.pop %v3890
        %v3892 = vmul.f32 %v3351, 1.442695
        %v3893 = vpow.pop %v3892
        %v3894 = vmul.f32 %v3352, 1.442695
        %v3895 = vpow.pop %v3894
        %v3896 = vmul.f32 %v3353, 1.442695
        %v3897 = vpow.pop %v3896
        %v3898 = vmul.f32 %v3354, 1.442695
        %v3899 = vpow.pop %v3898
        %v3900 = vmul.f32 %v3355, 1.442695
        %v3901 = vpow.pop %v3900
        %v3902 = vmul.f32 %v3356, 1.442695
        %v3903 = vpow.pop %v3902
        %v3904 = vmul.f32 %v3357, 1.442695
        %v3905 = vpow.pop %v3904
        %v3906 = vmul.f32 %v3358, 1.442695
        %v3907 = vpow.pop %v3906
        %v3908 = vmul.f32 %v3359, 1.442695
        %v3909 = vpow.pop %v3908
        %v3910 = vmul.f32 %v3360, 1.442695
        %v3911 = vpow.pop %v3910
        %v3912 = vmul.f32 %v3361, 1.442695
        %v3913 = vpow.pop %v3912
        %v3914 = vmul.f32 %v3362, 1.442695
        %v3915 = vpow.pop %v3914
        %v3916 = vmul.f32 %v3363, 1.442695
        %v3917 = vpow.pop %v3916
        %v3918 = vmul.f32 %v3364, 1.442695
        %v3919 = vpow.pop %v3918
        %v3920 = vmul.f32 %v3365, 1.442695
        %v3921 = vpow.pop %v3920
        %v3922 = vmul.f32 %v3366, 1.442695
        %v3923 = vpow.pop %v3922
        %v3924 = vmul.f32 %v3367, 1.442695
        %v3925 = vpow.pop %v3924
        %v3926 = vmul.f32 %v3368, 1.442695
        %v3927 = vpow.pop %v3926
        %v3928 = vmul.f32 %v3369, 1.442695
        %v3929 = vpow.pop %v3928
        %v3930 = vmul.f32 %v3370, 1.442695
        %v3931 = vpow.pop %v3930
        %v3932 = vmul.f32 %v3371, 1.442695
        %v3933 = vpow.pop %v3932
        %v3934 = vmul.f32 %v3372, 1.442695
        %v3935 = vpow.pop %v3934
        %v3936 = vmul.f32 %v3373, 1.442695
        %v3937 = vpow.pop %v3936
        %v3938 = vmul.f32 %v3374, 1.442695
        %v3939 = vpow.pop %v3938
        %v3940 = vmul.f32 %v3375, 1.442695
        %v3941 = vpow.pop %v3940
        %v3942 = vmul.f32 %v3376, 1.442695
        %v3943 = vpow.pop %v3942
        %v3944 = vmul.f32 %v3377, 1.442695
        %v3945 = vpow.pop %v3944
        %v3946 = vmul.f32 %v3378, 1.442695
        %v3947 = vpow.pop %v3946
        %v3948 = vmul.f32 %v3379, 1.442695
        %v3949 = vpow.pop %v3948
        %v3950 = vmul.f32 %v3380, 1.442695
        %v3951 = vpow.pop %v3950
        %v3952 = vmul.f32 %v3381, 1.442695
        %v3953 = vpow.pop %v3952
        %v3954 = vmul.f32 %v3382, 1.442695
        %v3955 = vpow.pop %v3954
        %v3956 = vmul.f32 %v3383, 1.442695
        %v3957 = vpow.pop %v3956
        %v3958 = vmul.f32 %v3384, 1.442695
        %v3959 = vpow.pop %v3958
        %v3960 = vmul.f32 %v3385, 1.442695
        %v3961 = vpow.pop %v3960
        %v3962 = vmul.f32 %v3386, 1.442695
        %v3963 = vpow.pop %v3962
        %v3964 = vmul.f32 %v3387, 1.442695
        %v3965 = vpow.pop %v3964
        %v3966 = vmul.f32 %v3388, 1.442695
        %v3967 = vpow.pop %v3966
        %v3968 = vmul.f32 %v3389, 1.442695
        %v3969 = vpow.pop %v3968
        %v3970 = vmul.f32 %v3390, 1.442695
        %v3971 = vpow.pop %v3970
        %v3972 = vmul.f32 %v3391, 1.442695
        %v3973 = vpow.pop %v3972
        %v3974 = vmul.f32 %v3392, 1.442695
        %v3975 = vpow.pop %v3974
        %v3976 = vmul.f32 %v3393, 1.442695
        %v3977 = vpow.pop %v3976
        %v3978 = vmul.f32 %v3394, 1.442695
        %v3979 = vpow.pop %v3978
        %v3980 = vmul.f32 %v3395, 1.442695
        %v3981 = vpow.pop %v3980
        %v3982 = vmul.f32 %v3396, 1.442695
        %v3983 = vpow.pop %v3982
        %v3984 = vmul.f32 %v3397, 1.442695
        %v3985 = vpow.pop %v3984
        %v3986 = vmul.f32 %v3398, 1.442695
        %v3987 = vpow.pop %v3986
        %v3988 = vmul.f32 %v3399, 1.442695
        %v3989 = vpow.pop %v3988
        %v3990 = vmul.f32 %v3400, 1.442695
        %v3991 = vpow.pop %v3990
        %v3992 = vmul.f32 %v3401, 1.442695
        %v3993 = vpow.pop %v3992
        %v3994 = vmul.f32 %v3402, 1.442695
        %v3995 = vpow.pop %v3994
        %v3996 = vmul.f32 %v3403, 1.442695
        %v3997 = vpow.pop %v3996
        %v3998 = vmul.f32 %v3404, 1.442695
        %v3999 = vpow.pop %v3998
        %v4000 = vmul.f32 %v3405, 1.442695
        %v4001 = vpow.pop %v4000
        %v4002 = vmul.f32 %v3406, 1.442695
        %v4003 = vpow.pop %v4002
        %v4004 = vmul.f32 %v3407, 1.442695
        %v4005 = vpow.pop %v4004
        %v4006 = vmul.f32 %v3408, 1.442695
        %v4007 = vpow.pop %v4006
        %v4008 = vmul.f32 %v3409, 1.442695
        %v4009 = vpow.pop %v4008
        %v4010 = vmul.f32 %v3410, 1.442695
        %v4011 = vpow.pop %v4010
        %v4012 = vmul.f32 %v3411, 1.442695
        %v4013 = vpow.pop %v4012
        %v4014 = vmul.f32 %v3412, 1.442695
        %v4015 = vpow.pop %v4014
        %v4016 = vmul.f32 %v3413, 1.442695
        %v4017 = vpow.pop %v4016
        %v4018 = vmul.f32 %v3414, 1.442695
        %v4019 = vpow.pop %v4018
        %v4020 = vmul.f32 %v3415, 1.442695
        %v4021 = vpow.pop %v4020
        %v4022 = vmul.f32 %v3416, 1.442695
        %v4023 = vpow.pop %v4022
        %v4024 = vmul.f32 %v3417, 1.442695
        %v4025 = vpow.pop %v4024
        %v4026 = vmul.f32 %v3418, 1.442695
        %v4027 = vpow.pop %v4026
        %v4028 = vmul.f32 %v3419, 1.442695
        %v4029 = vpow.pop %v4028
        %v4030 = vmul.f32 %v3420, 1.442695
        %v4031 = vpow.pop %v4030
        %v4032 = vmul.f32 %v3421, 1.442695
        %v4033 = vpow.pop %v4032
        %v4034 = vmul.f32 %v3422, 1.442695
        %v4035 = vpow.pop %v4034
        %v4036 = vmul.f32 %v3423, 1.442695
        %v4037 = vpow.pop %v4036
        %v4038 = vmul.f32 %v3424, 1.442695
        %v4039 = vpow.pop %v4038
        %v4040 = vmul.f32 %v3425, 1.442695
        %v4041 = vpow.pop %v4040
        %v4042 = vmul.f32 %v3426, 1.442695
        %v4043 = vpow.pop %v4042
        %v4044 = vmul.f32 %v3427, 1.442695
        %v4045 = vpow.pop %v4044
        %v4046 = vmul.f32 %v3428, 1.442695
        %v4047 = vpow.pop %v4046
        %v4048 = vmul.f32 %v3429, 1.442695
        %v4049 = vpow.pop %v4048
        %v4050 = vmul.f32 %v3430, 1.442695
        %v4051 = vpow.pop %v4050
        %v4052 = vmul.f32 %v3431, 1.442695
        %v4053 = vpow.pop %v4052
        %v4054 = vmul.f32 %v3432, 1.442695
        %v4055 = vpow.pop %v4054
        %v4056 = vmul.f32 %v3433, 1.442695
        %v4057 = vpow.pop %v4056
        %v4058 = vmul.f32 %v3434, 1.442695
        %v4059 = vpow.pop %v4058
        %v4060 = vmul.f32 %v3435, 1.442695
        %v4061 = vpow.pop %v4060
        %v4062 = vmul.f32 %v3436, 1.442695
        %v4063 = vpow.pop %v4062
        %v4064 = vmul.f32 %v3437, 1.442695
        %v4065 = vpow.pop %v4064
        %v4066 = vmul.f32 %v3438, 1.442695
        %v4067 = vpow.pop %v4066
        %v4068 = vmul.f32 %v3439, 1.442695
        %v4069 = vpow.pop %v4068
        %v4070 = vmul.f32 %v3440, 1.442695
        %v4071 = vpow.pop %v4070
        %v4072 = vmul.f32 %v3441, 1.442695
        %v4073 = vpow.pop %v4072
        %v4074 = vmul.f32 %v3442, 1.442695
        %v4075 = vpow.pop %v4074
        %v4076 = vmul.f32 %v3443, 1.442695
        %v4077 = vpow.pop %v4076
        %v4078 = vmul.f32 %v3444, 1.442695
        %v4079 = vpow.pop %v4078
        %v4080 = vmul.f32 %v3445, 1.442695
        %v4081 = vpow.pop %v4080
        %v4082 = vmul.f32 %v3446, 1.442695
        %v4083 = vpow.pop %v4082
        %v4084 = vmul.f32 %v3447, 1.442695
        %v4085 = vpow.pop %v4084
        %v4086 = vmul.f32 %v3448, 1.442695
        %v4087 = vpow.pop %v4086
        %v4088 = vmul.f32 %v3449, 1.442695
        %v4089 = vpow.pop %v4088
        %v4090 = vmul.f32 %v3450, 1.442695
        %v4091 = vpow.pop %v4090
        %v4092 = vmul.f32 %v3451, 1.442695
        %v4093 = vpow.pop %v4092
        %v4094 = vmul.f32 %v3452, 1.442695
        %v4095 = vpow.pop %v4094
        %v4096 = vmul.f32 %v3453, 1.442695
        %v4097 = vpow.pop %v4096
        %v4098 = vmul.f32 %v3454, 1.442695
        %v4099 = vpow.pop %v4098
        %v4100 = vmul.f32 %v3455, 1.442695
        %v4101 = vpow.pop %v4100
        %v4102 = vmul.f32 %v3456, 1.442695
        %v4103 = vpow.pop %v4102
        %v4104 = vmul.f32 %v3457, 1.442695
        %v4105 = vpow.pop %v4104
        %v4106 = vmul.f32 %v3458, 1.442695
        %v4107 = vpow.pop %v4106
        %v4108 = vmul.f32 %v3459, 1.442695
        %v4109 = vpow.pop %v4108
        %v4110 = vmul.f32 %v3460, 1.442695
        %v4111 = vpow.pop %v4110
        %v4112 = vmul.f32 %v3461, 1.442695
        %v4113 = vpow.pop %v4112
        %v4114 = vmul.f32 %v3462, 1.442695
        %v4115 = vpow.pop %v4114
        %v4116 = vmul.f32 %v3463, 1.442695
        %v4117 = vpow.pop %v4116
        %v4118 = vmul.f32 %v3464, 1.442695
        %v4119 = vpow.pop %v4118
        %v4120 = vmul.f32 %v3465, 1.442695
        %v4121 = vpow.pop %v4120
        %v4122 = vmul.f32 %v3466, 1.442695
        %v4123 = vpow.pop %v4122
        %v4124 = vmul.f32 %v3467, 1.442695
        %v4125 = vpow.pop %v4124
        %v4126 = vmul.f32 %v3468, 1.442695
        %v4127 = vpow.pop %v4126
        %v4128 = vmul.f32 %v3469, 1.442695
        %v4129 = vpow.pop %v4128
        %v4130 = vmul.f32 %v3470, 1.442695
        %v4131 = vpow.pop %v4130
        %v4132 = vmul.f32 %v3471, 1.442695
        %v4133 = vpow.pop %v4132
        %v4134 = vmul.f32 %v3472, 1.442695
        %v4135 = vpow.pop %v4134
        %v4136 = vmul.f32 %v3473, 1.442695
        %v4137 = vpow.pop %v4136
        %v4138 = vmul.f32 %v3474, 1.442695
        %v4139 = vpow.pop %v4138
        %v4140 = vmul.f32 %v3475, 1.442695
        %v4141 = vpow.pop %v4140
        %v4142 = vmul.f32 %v3476, 1.442695
        %v4143 = vpow.pop %v4142
        %v4144 = vmul.f32 %v3477, 1.442695
        %v4145 = vpow.pop %v4144
        %v4146 = vmul.f32 %v3478, 1.442695
        %v4147 = vpow.pop %v4146
        %v4148 = vmul.f32 %v3479, 1.442695
        %v4149 = vpow.pop %v4148
        %v4150 = vmul.f32 %v3480, 1.442695
        %v4151 = vpow.pop %v4150
        %v4152 = vmul.f32 %v3481, 1.442695
        %v4153 = vpow.pop %v4152
        %v4154 = vmul.f32 %v3482, 1.442695
        %v4155 = vpow.pop %v4154
        %v4156 = vmul.f32 %v3483, 1.442695
        %v4157 = vpow.pop %v4156
        %v4158 = vmul.f32 %v3484, 1.442695
        %v4159 = vpow.pop %v4158
        %v4160 = vmul.f32 %v3485, 1.442695
        %v4161 = vpow.pop %v4160
        %v4162 = vmul.f32 %v3486, 1.442695
        %v4163 = vpow.pop %v4162
        %v4164 = vmul.f32 %v3487, 1.442695
        %v4165 = vpow.pop %v4164
        %v4166 = vmul.f32 %v3488, 1.442695
        %v4167 = vpow.pop %v4166
        %v4168 = vmul.f32 %v3489, 1.442695
        %v4169 = vpow.pop %v4168
        %v4170 = vmul.f32 %v3490, 1.442695
        %v4171 = vpow.pop %v4170
        %v4172 = vmul.f32 %v3491, 1.442695
        %v4173 = vpow.pop %v4172
        %v4174 = vmul.f32 %v3492, 1.442695
        %v4175 = vpow.pop %v4174
        %v4176 = vmul.f32 %v3493, 1.442695
        %v4177 = vpow.pop %v4176
        %v4178 = vmul.f32 %v3494, 1.442695
        %v4179 = vpow.pop %v4178
        %v4180 = vmul.f32 %v3495, 1.442695
        %v4181 = vpow.pop %v4180
        %v4182 = vmul.f32 %v3496, 1.442695
        %v4183 = vpow.pop %v4182
        %v4184 = vmul.f32 %v3497, 1.442695
        %v4185 = vpow.pop %v4184
        %v4186 = vmul.f32 %v3498, 1.442695
        %v4187 = vpow.pop %v4186
        %v4188 = vmul.f32 %v3499, 1.442695
        %v4189 = vpow.pop %v4188
        %v4190 = vmul.f32 %v3500, 1.442695
        %v4191 = vpow.pop %v4190
        %v4192 = vmul.f32 %v3501, 1.442695
        %v4193 = vpow.pop %v4192
        %v4194 = vmul.f32 %v3502, 1.442695
        %v4195 = vpow.pop %v4194
        %v4196 = vmul.f32 %v3503, 1.442695
        %v4197 = vpow.pop %v4196
        %v4198 = vmul.f32 %v3504, 1.442695
        %v4199 = vpow.pop %v4198
        %v4200 = vmul.f32 %v3505, 1.442695
        %v4201 = vpow.pop %v4200
        %v4202 = vmul.f32 %v3506, 1.442695
        %v4203 = vpow.pop %v4202
        %v4204 = vmul.f32 %v3507, 1.442695
        %v4205 = vpow.pop %v4204
        %v4206 = vmul.f32 %v3508, 1.442695
        %v4207 = vpow.pop %v4206
        %v4208 = vmul.f32 %v3509, 1.442695
        %v4209 = vpow.pop %v4208
        %v4210 = vmul.f32 %v3510, 1.442695
        %v4211 = vpow.pop %v4210
        %v4212 = vmul.f32 %v3511, 1.442695
        %v4213 = vpow.pop %v4212
        %v4214 = vmul.f32 %v3512, 1.442695
        %v4215 = vpow.pop %v4214
        %v4216 = vmul.f32 %v3513, 1.442695
        %v4217 = vpow.pop %v4216
        %v4218 = vmul.f32 %v3514, 1.442695
        %v4219 = vpow.pop %v4218
        %v4220 = vmul.f32 %v3515, 1.442695
        %v4221 = vpow.pop %v4220
        %v4222 = vmul.f32 %v3516, 1.442695
        %v4223 = vpow.pop %v4222
        %v4224 = vmul.f32 %v3517, 1.442695
        %v4225 = vpow.pop %v4224
        %v4226 = vmul.f32 %v3518, 1.442695
        %v4227 = vpow.pop %v4226
        %v4228 = vmul.f32 %v3519, 1.442695
        %v4229 = vpow.pop %v4228
        %v4230 = vmul.f32 %v3520, 1.442695
        %v4231 = vpow.pop %v4230
        %v4232 = vmul.f32 %v3521, 1.442695
        %v4233 = vpow.pop %v4232
        %v4234 = vmul.f32 %v3522, 1.442695
        %v4235 = vpow.pop %v4234
        %v4236 = vmul.f32 %v3523, 1.442695
        %v4237 = vpow.pop %v4236
        %v4238 = vmul.f32 %v3524, 1.442695
        %v4239 = vpow.pop %v4238
        %v4240 = vmul.f32 %v3525, 1.442695
        %v4241 = vpow.pop %v4240
        %v4242 = vmul.f32 %v3526, 1.442695
        %v4243 = vpow.pop %v4242
        %v4244 = vmul.f32 %v3527, 1.442695
        %v4245 = vpow.pop %v4244
        %v4246 = vmul.f32 %v3528, 1.442695
        %v4247 = vpow.pop %v4246
        %v4248 = vmul.f32 %v3529, 1.442695
        %v4249 = vpow.pop %v4248
        %v4250 = vmul.f32 %v3530, 1.442695
        %v4251 = vpow.pop %v4250
        %v4252 = vmul.f32 %v3531, 1.442695
        %v4253 = vpow.pop %v4252
        %v4254 = vmul.f32 %v3532, 1.442695
        %v4255 = vpow.pop %v4254
        %v4256 = vmul.f32 %v3533, 1.442695
        %v4257 = vpow.pop %v4256
        %v4258 = vmul.f32 %v3534, 1.442695
        %v4259 = vpow.pop %v4258
        %v4260 = vmul.f32 %v3535, 1.442695
        %v4261 = vpow.pop %v4260
        %v4262 = vmul.f32 %v3536, 1.442695
        %v4263 = vpow.pop %v4262
        %v4264 = vmul.f32 %v3537, 1.442695
        %v4265 = vpow.pop %v4264
        %v4266 = vmul.f32 %v3538, 1.442695
        %v4267 = vpow.pop %v4266
        %v4268 = vmul.f32 %v3539, 1.442695
        %v4269 = vpow.pop %v4268
        %v4270 = vmul.f32 %v3540, 1.442695
        %v4271 = vpow.pop %v4270
        %v4272 = vmul.f32 %v3541, 1.442695
        %v4273 = vpow.pop %v4272
        %v4274 = vmul.f32 %v3542, 1.442695
        %v4275 = vpow.pop %v4274
        %v4276 = vmul.f32 %v3543, 1.442695
        %v4277 = vpow.pop %v4276
        %v4278 = vmul.f32 %v3544, 1.442695
        %v4279 = vpow.pop %v4278
        %v4280 = vmul.f32 %v3545, 1.442695
        %v4281 = vpow.pop %v4280
        %v4282 = vmul.f32 %v3546, 1.442695
        %v4283 = vpow.pop %v4282
        %v4284 = vmul.f32 %v3547, 1.442695
        %v4285 = vpow.pop %v4284
        %v4286 = vmul.f32 %v3548, 1.442695
        %v4287 = vpow.pop %v4286
        %v4288 = vmul.f32 %v3549, 1.442695
        %v4289 = vpow.pop %v4288
        %v4290 = vmul.f32 %v3550, 1.442695
        %v4291 = vpow.pop %v4290
        %v4292 = vmul.f32 %v3551, 1.442695
        %v4293 = vpow.pop %v4292
        %v4294 = vmul.f32 %v3552, 1.442695
        %v4295 = vpow.pop %v4294
        %v4296 = vmul.f32 %v3553, 1.442695
        %v4297 = vpow.pop %v4296
        %v4298 = vmul.f32 %v3554, 1.442695
        %v4299 = vpow.pop %v4298
        %v4300 = vmul.f32 %v3555, 1.442695
        %v4301 = vpow.pop %v4300
        %v4302 = vmul.f32 %v3556, 1.442695
        %v4303 = vpow.pop %v4302
        %v4304 = vmul.f32 %v3557, 1.442695
        %v4305 = vpow.pop %v4304
        %v4306 = vmul.f32 %v3558, 1.442695
        %v4307 = vpow.pop %v4306
        %v4308 = vmul.f32 %v3559, 1.442695
        %v4309 = vpow.pop %v4308
        %v4310 = vmul.f32 %v3560, 1.442695
        %v4311 = vpow.pop %v4310
        %v4312 = vmul.f32 %v3561, 1.442695
        %v4313 = vpow.pop %v4312
        %v4314 = vmul.f32 %v3562, 1.442695
        %v4315 = vpow.pop %v4314
        %v4316 = vmul.f32 %v3563, 1.442695
        %v4317 = vpow.pop %v4316
        %v4318 = vmul.f32 %v3564, 1.442695
        %v4319 = vpow.pop %v4318
        %v4320 = vmul.f32 %v3565, 1.442695
        %v4321 = vpow.pop %v4320
        %v4322 = vmul.f32 %v3566, 1.442695
        %v4323 = vpow.pop %v4322
        %v4324 = vmul.f32 %v3567, 1.442695
        %v4325 = vpow.pop %v4324
        %v4326 = vmul.f32 %v3568, 1.442695
        %v4327 = vpow.pop %v4326
        %v4328 = vmul.f32 %v3569, 1.442695
        %v4329 = vpow.pop %v4328
        %v4330 = vmul.f32 %v3570, 1.442695
        %v4331 = vpow.pop %v4330
        %v4332 = vmul.f32 %v3571, 1.442695
        %v4333 = vpow.pop %v4332
        %v4334 = vmul.f32 %v3572, 1.442695
        %v4335 = vpow.pop %v4334
        %v4336 = vmul.f32 %v3573, 1.442695
        %v4337 = vpow.pop %v4336
        %v4338 = vmul.f32 %v3574, 1.442695
        %v4339 = vpow.pop %v4338
        %v4340 = vmul.f32 %v3575, 1.442695
        %v4341 = vpow.pop %v4340
        %v4342 = vmul.f32 %v3576, 1.442695
        %v4343 = vpow.pop %v4342
        %v4344 = vmul.f32 %v3577, 1.442695
        %v4345 = vpow.pop %v4344
        %v4346 = vmul.f32 %v3578, 1.442695
        %v4347 = vpow.pop %v4346
        %v4348 = vmul.f32 %v3579, 1.442695
        %v4349 = vpow.pop %v4348
        %v4350 = vmul.f32 %v3580, 1.442695
        %v4351 = vpow.pop %v4350
        %v4352 = vmul.f32 %v3581, 1.442695
        %v4353 = vpow.pop %v4352
        %v4354 = vmul.f32 %v3582, 1.442695
        %v4355 = vpow.pop %v4354
        %v4356 = vmul.f32 %v3583, 1.442695
        %v4357 = vpow.pop %v4356
        %v4358 = vmul.f32 %v3584, 1.442695
        %v4359 = vpow.pop %v4358
        %v4360 = vmul.f32 %v3585, 1.442695
        %v4361 = vpow.pop %v4360
        %v4362 = vmul.f32 %v3586, 1.442695
        %v4363 = vpow.pop %v4362
        %v4364 = vmul.f32 %v3587, 1.442695
        %v4365 = vpow.pop %v4364
        %v4366 = vmul.f32 %v3588, 1.442695
        %v4367 = vpow.pop %v4366
        %v4368 = vmul.f32 %v3589, 1.442695
        %v4369 = vpow.pop %v4368
        %v4370 = vmul.f32 %v3590, 1.442695
        %v4371 = vpow.pop %v4370
        %v4372 = vmul.f32 %v3591, 1.442695
        %v4373 = vpow.pop %v4372
        %v4374 = vmul.f32 %v3592, 1.442695
        %v4375 = vpow.pop %v4374
        %v4376 = vmul.f32 %v3593, 1.442695
        %v4377 = vpow.pop %v4376
        %v4378 = vmul.f32 %v3594, 1.442695
        %v4379 = vpow.pop %v4378
        %v4380 = vmul.f32 %v3595, 1.442695
        %v4381 = vpow.pop %v4380
        %v4382 = vmul.f32 %v3596, 1.442695
        %v4383 = vpow.pop %v4382
        %v4384 = vmul.f32 %v3597, 1.442695
        %v4385 = vpow.pop %v4384
        %v4386 = vmul.f32 %v3598, 1.442695
        %v4387 = vpow.pop %v4386
        %v4388 = vmul.f32 %v3599, 1.442695
        %v4389 = vpow.pop %v4388
        %v4390 = vmul.f32 %v3600, 1.442695
        %v4391 = vpow.pop %v4390
        %v4392 = vmul.f32 %v3601, 1.442695
        %v4393 = vpow.pop %v4392
        %v4394 = vmul.f32 %v3602, 1.442695
        %v4395 = vpow.pop %v4394
        %v4396 = vmul.f32 %v3603, 1.442695
        %v4397 = vpow.pop %v4396
        %v4398 = vmul.f32 %v3604, 1.442695
        %v4399 = vpow.pop %v4398
        %v4400 = vmul.f32 %v3605, 1.442695
        %v4401 = vpow.pop %v4400
        %v4402 = vmul.f32 %v3606, 1.442695
        %v4403 = vpow.pop %v4402
        %v4404 = vmul.f32 %v3607, 1.442695
        %v4405 = vpow.pop %v4404
        %v4406 = vmul.f32 %v3608, 1.442695
        %v4407 = vpow.pop %v4406
        %v4408 = vmul.f32 %v3609, 1.442695
        %v4409 = vpow.pop %v4408
        %v4410 = vmul.f32 %v3610, 1.442695
        %v4411 = vpow.pop %v4410
        %v4412 = vmul.f32 %v3611, 1.442695
        %v4413 = vpow.pop %v4412
        %v4414 = vmul.f32 %v3612, 1.442695
        %v4415 = vpow.pop %v4414
        %v4416 = vmul.f32 %v3613, 1.442695
        %v4417 = vpow.pop %v4416
        %v4418 = vmul.f32 %v3614, 1.442695
        %v4419 = vpow.pop %v4418
        %v4420 = vmul.f32 %v3615, 1.442695
        %v4421 = vpow.pop %v4420
        %v4422 = vmul.f32 %v3616, 1.442695
        %v4423 = vpow.pop %v4422
        %v4424 = vmul.f32 %v3617, 1.442695
        %v4425 = vpow.pop %v4424
        %v4426 = vmul.f32 %v3618, 1.442695
        %v4427 = vpow.pop %v4426
        %v4428 = vmul.f32 %v3619, 1.442695
        %v4429 = vpow.pop %v4428
        %v4430 = vmul.f32 %v3620, 1.442695
        %v4431 = vpow.pop %v4430
        %v4432 = vmul.f32 %v3621, 1.442695
        %v4433 = vpow.pop %v4432
        %v4434 = vmul.f32 %v3622, 1.442695
        %v4435 = vpow.pop %v4434
        %v4436 = vmul.f32 %v3623, 1.442695
        %v4437 = vpow.pop %v4436
        %v4438 = vmul.f32 %v3624, 1.442695
        %v4439 = vpow.pop %v4438
        %v4440 = vmul.f32 %v3625, 1.442695
        %v4441 = vpow.pop %v4440
        %v4442 = vmul.f32 %v3626, 1.442695
        %v4443 = vpow.pop %v4442
        %v4444 = vmul.f32 %v3627, 1.442695
        %v4445 = vpow.pop %v4444
        %v4446 = vmul.f32 %v3628, 1.442695
        %v4447 = vpow.pop %v4446
        %v4448 = vmul.f32 %v3629, 1.442695
        %v4449 = vpow.pop %v4448
        %v4450 = vmul.f32 %v3630, 1.442695
        %v4451 = vpow.pop %v4450
        %v4452 = vmul.f32 %v3631, 1.442695
        %v4453 = vpow.pop %v4452
        %v4454 = vmul.f32 %v3632, 1.442695
        %v4455 = vpow.pop %v4454
        %v4456 = vmul.f32 %v3633, 1.442695
        %v4457 = vpow.pop %v4456
        %v4458 = vmul.f32 %v3634, 1.442695
        %v4459 = vpow.pop %v4458
        %v4460 = vmul.f32 %v3635, 1.442695
        %v4461 = vpow.pop %v4460
        %v4462 = vmul.f32 %v3636, 1.442695
        %v4463 = vpow.pop %v4462
        %v4464 = vmul.f32 %v3637, 1.442695
        %v4465 = vpow.pop %v4464
        %v4466 = vmul.f32 %v3638, 1.442695
        %v4467 = vpow.pop %v4466
        %v4468 = vmul.f32 %v3639, 1.442695
        %v4469 = vpow.pop %v4468
        %v4470 = vmul.f32 %v3640, 1.442695
        %v4471 = vpow.pop %v4470
        %v4472 = vmul.f32 %v3641, 1.442695
        %v4473 = vpow.pop %v4472
        %v4474 = vmul.f32 %v3642, 1.442695
        %v4475 = vpow.pop %v4474
        %v4476 = vmul.f32 %v3643, 1.442695
        %v4477 = vpow.pop %v4476
        %v4478 = vmul.f32 %v3644, 1.442695
        %v4479 = vpow.pop %v4478
        %v4480 = vmul.f32 %v3645, 1.442695
        %v4481 = vpow.pop %v4480
        %v4482 = vmul.f32 %v3646, 1.442695
        %v4483 = vpow.pop %v4482
        %v4484 = vmul.f32 %v3647, 1.442695
        %v4485 = vpow.pop %v4484
        %v4486 = vmul.f32 %v3648, 1.442695
        %v4487 = vpow.pop %v4486
        %v4488 = vmul.f32 %v3649, 1.442695
        %v4489 = vpow.pop %v4488
        %v4490 = vmul.f32 %v3650, 1.442695
        %v4491 = vpow.pop %v4490
        %v4492 = vmul.f32 %v3651, 1.442695
        %v4493 = vpow.pop %v4492
        %v4494 = vmul.f32 %v3652, 1.442695
        %v4495 = vpow.pop %v4494
        %v4496 = vmul.f32 %v3653, 1.442695
        %v4497 = vpow.pop %v4496
        %v4498 = vmul.f32 %v3654, 1.442695
        %v4499 = vpow.pop %v4498
        %v4500 = vmul.f32 %v3655, 1.442695
        %v4501 = vpow.pop %v4500
        %v4502 = vmul.f32 %v3656, 1.442695
        %v4503 = vpow.pop %v4502
        %v4504 = vmul.f32 %v3657, 1.442695
        %v4505 = vpow.pop %v4504
        %v4506 = vmul.f32 %v3658, 1.442695
        %v4507 = vpow.pop %v4506
        %v4508 = vmul.f32 %v3659, 1.442695
        %v4509 = vpow.pop %v4508
        %v4510 = vmul.f32 %v3660, 1.442695
        %v4511 = vpow.pop %v4510
        %v4512 = vmul.f32 %v3661, 1.442695
        %v4513 = vpow.pop %v4512
        %v4514 = vmul.f32 %v3662, 1.442695
        %v4515 = vpow.pop %v4514
        %v4516 = vmul.f32 %v3663, 1.442695
        %v4517 = vpow.pop %v4516
        %v4518 = vmul.f32 %v3664, 1.442695
        %v4519 = vpow.pop %v4518
        %v4520 = vmul.f32 %v3665, 1.442695
        %v4521 = vpow.pop %v4520
        %v4522 = vmul.f32 %v3666, 1.442695
        %v4523 = vpow.pop %v4522
        %v4524 = vmul.f32 %v3667, 1.442695
        %v4525 = vpow.pop %v4524
        %v4526 = vmul.f32 %v3668, 1.442695
        %v4527 = vpow.pop %v4526
        %v4528 = vmul.f32 %v3669, 1.442695
        %v4529 = vpow.pop %v4528
        %v4530 = vmul.f32 %v3670, 1.442695
        %v4531 = vpow.pop %v4530
        %v4532 = vmul.f32 %v3671, 1.442695
        %v4533 = vpow.pop %v4532
        %v4534 = vmul.f32 %v3672, 1.442695
        %v4535 = vpow.pop %v4534
        %v4536 = vmul.f32 %v3673, 1.442695
        %v4537 = vpow.pop %v4536
        %v4538 = vcvt.s32.f32 0
        %v4539 = vcvt.s32.f32 1
        %v4540 = vcvt.s32.f32 2
        %v4541 = vcvt.s32.f32 3
        %v4542 = vcvt.s32.f32 4
        %v4543 = vcvt.s32.f32 5
        %v4544 = vcvt.s32.f32 6
        %v4545 = vcvt.s32.f32 7
        %v4546 = vcvt.s32.f32 8
        %v4547 = vcvt.s32.f32 9
        %v4548 = vcvt.s32.f32 10
        %v4549 = vcvt.s32.f32 11
        %v4550 = vcvt.s32.f32 12
        %v4551 = vcvt.s32.f32 13
        %v4552 = vcvt.s32.f32 14
        %v4553 = vcvt.s32.f32 15
        %v4554 = vcvt.s32.f32 16
        %v4555 = vcvt.s32.f32 17
        %v4556 = vcvt.s32.f32 18
        %v4557 = vcvt.s32.f32 19
        %v4558 = vcvt.s32.f32 20
        %v4559 = vcvt.s32.f32 21
        %v4560 = vcvt.s32.f32 22
        %v4561 = vcvt.s32.f32 23
        %v4562 = vcvt.s32.f32 24
        %v4563 = vcvt.s32.f32 25
        %v4564 = vcvt.s32.f32 26
        %v4565 = vcvt.s32.f32 27
        %v4566 = vcvt.s32.f32 28
        %v4567 = vcvt.s32.f32 29
        %v4568 = vcvt.s32.f32 30
        %v4569 = vcvt.s32.f32 31
        %v4570 = vcvt.s32.f32 32
        %v4571 = vcvt.s32.f32 33
        %v4572 = vcvt.s32.f32 34
        %v4573 = vcvt.s32.f32 35
        %v4574 = vcvt.s32.f32 36
        %v4575 = vcvt.s32.f32 37
        %v4576 = vcvt.s32.f32 38
        %v4577 = vcvt.s32.f32 39
        %v4578 = vcvt.s32.f32 40
        %v4579 = vcvt.s32.f32 41
        %v4580 = vcvt.s32.f32 42
        %v4581 = vcvt.s32.f32 43
        %v4582 = vcvt.s32.f32 44
        %v4583 = vcvt.s32.f32 45
        %v4584 = vcvt.s32.f32 46
        %v4585 = vcvt.s32.f32 47
        %v4586 = vadd.f32 %v3675, %v3693
        %v4587 = vadd.f32 %v4586, %v3711
        %v4588 = vadd.f32 %v4587, %v3729
        %v4589 = vadd.f32 %v4588, %v3747
        %v4590 = vadd.f32 %v4589, %v3765
        %v4591 = vadd.f32 %v4590, %v3783
        %v4592 = vadd.f32 %v4591, %v3801
        %v4593 = vadd.f32 %v4592, %v3819
        %v4594 = vadd.f32 %v4593, %v3837
        %v4595 = vadd.f32 %v4594, %v3855
        %v4596 = vadd.f32 %v4595, %v3873
        %v4597 = vadd.f32 %v4596, %v3891
        %v4598 = vadd.f32 %v4597, %v3909
        %v4599 = vadd.f32 %v4598, %v3927
        %v4600 = vadd.f32 %v4599, %v3945
        %v4601 = vadd.f32 %v4600, %v3963
        %v4602 = vadd.f32 %v4601, %v3981
        %v4603 = vadd.f32 %v4602, %v3999
        %v4604 = vadd.f32 %v4603, %v4017
        %v4605 = vadd.f32 %v4604, %v4035
        %v4606 = vadd.f32 %v4605, %v4053
        %v4607 = vadd.f32 %v4606, %v4071
        %v4608 = vadd.f32 %v4607, %v4089
        %v4609 = vadd.f32 %v4608, %v4107
        %v4610 = vadd.f32 %v4609, %v4125
        %v4611 = vadd.f32 %v4610, %v4143
        %v4612 = vadd.f32 %v4611, %v4161
        %v4613 = vadd.f32 %v4612, %v4179
        %v4614 = vadd.f32 %v4613, %v4197
        %v4615 = vadd.f32 %v4614, %v4215
        %v4616 = vadd.f32 %v4615, %v4233
        %v4617 = vadd.f32 %v4616, %v4251
        %v4618 = vadd.f32 %v4617, %v4269
        %v4619 = vadd.f32 %v4618, %v4287
        %v4620 = vadd.f32 %v4619, %v4305
        %v4621 = vadd.f32 %v4620, %v4323
        %v4622 = vadd.f32 %v4621, %v4341
        %v4623 = vadd.f32 %v4622, %v4359
        %v4624 = vadd.f32 %v4623, %v4377
        %v4625 = vadd.f32 %v4624, %v4395
        %v4626 = vadd.f32 %v4625, %v4413
        %v4627 = vadd.f32 %v4626, %v4431
        %v4628 = vadd.f32 %v4627, %v4449
        %v4629 = vadd.f32 %v4628, %v4467
        %v4630 = vadd.f32 %v4629, %v4485
        %v4631 = vadd.f32 %v4630, %v4503
        %v4632 = vadd.f32 %v4631, %v4521
        %v4633 = vadd.f32 %v3677, %v3695
        %v4634 = vadd.f32 %v4633, %v3713
        %v4635 = vadd.f32 %v4634, %v3731
        %v4636 = vadd.f32 %v4635, %v3749
        %v4637 = vadd.f32 %v4636, %v3767
        %v4638 = vadd.f32 %v4637, %v3785
        %v4639 = vadd.f32 %v4638, %v3803
        %v4640 = vadd.f32 %v4639, %v3821
        %v4641 = vadd.f32 %v4640, %v3839
        %v4642 = vadd.f32 %v4641, %v3857
        %v4643 = vadd.f32 %v4642, %v3875
        %v4644 = vadd.f32 %v4643, %v3893
        %v4645 = vadd.f32 %v4644, %v3911
        %v4646 = vadd.f32 %v4645, %v3929
        %v4647 = vadd.f32 %v4646, %v3947
        %v4648 = vadd.f32 %v4647, %v3965
        %v4649 = vadd.f32 %v4648, %v3983
        %v4650 = vadd.f32 %v4649, %v4001
        %v4651 = vadd.f32 %v4650, %v4019
        %v4652 = vadd.f32 %v4651, %v4037
        %v4653 = vadd.f32 %v4652, %v4055
        %v4654 = vadd.f32 %v4653, %v4073
        %v4655 = vadd.f32 %v4654, %v4091
        %v4656 = vadd.f32 %v4655, %v4109
        %v4657 = vadd.f32 %v4656, %v4127
        %v4658 = vadd.f32 %v4657, %v4145
        %v4659 = vadd.f32 %v4658, %v4163
        %v4660 = vadd.f32 %v4659, %v4181
        %v4661 = vadd.f32 %v4660, %v4199
        %v4662 = vadd.f32 %v4661, %v4217
        %v4663 = vadd.f32 %v4662, %v4235
        %v4664 = vadd.f32 %v4663, %v4253
        %v4665 = vadd.f32 %v4664, %v4271
        %v4666 = vadd.f32 %v4665, %v4289
        %v4667 = vadd.f32 %v4666, %v4307
        %v4668 = vadd.f32 %v4667, %v4325
        %v4669 = vadd.f32 %v4668, %v4343
        %v4670 = vadd.f32 %v4669, %v4361
        %v4671 = vadd.f32 %v4670, %v4379
        %v4672 = vadd.f32 %v4671, %v4397
        %v4673 = vadd.f32 %v4672, %v4415
        %v4674 = vadd.f32 %v4673, %v4433
        %v4675 = vadd.f32 %v4674, %v4451
        %v4676 = vadd.f32 %v4675, %v4469
        %v4677 = vadd.f32 %v4676, %v4487
        %v4678 = vadd.f32 %v4677, %v4505
        %v4679 = vadd.f32 %v4678, %v4523
        %v4680 = vadd.f32 %v3679, %v3697
        %v4681 = vadd.f32 %v4680, %v3715
        %v4682 = vadd.f32 %v4681, %v3733
        %v4683 = vadd.f32 %v4682, %v3751
        %v4684 = vadd.f32 %v4683, %v3769
        %v4685 = vadd.f32 %v4684, %v3787
        %v4686 = vadd.f32 %v4685, %v3805
        %v4687 = vadd.f32 %v4686, %v3823
        %v4688 = vadd.f32 %v4687, %v3841
        %v4689 = vadd.f32 %v4688, %v3859
        %v4690 = vadd.f32 %v4689, %v3877
        %v4691 = vadd.f32 %v4690, %v3895
        %v4692 = vadd.f32 %v4691, %v3913
        %v4693 = vadd.f32 %v4692, %v3931
        %v4694 = vadd.f32 %v4693, %v3949
        %v4695 = vadd.f32 %v4694, %v3967
        %v4696 = vadd.f32 %v4695, %v3985
        %v4697 = vadd.f32 %v4696, %v4003
        %v4698 = vadd.f32 %v4697, %v4021
        %v4699 = vadd.f32 %v4698, %v4039
        %v4700 = vadd.f32 %v4699, %v4057
        %v4701 = vadd.f32 %v4700, %v4075
        %v4702 = vadd.f32 %v4701, %v4093
        %v4703 = vadd.f32 %v4702, %v4111
        %v4704 = vadd.f32 %v4703, %v4129
        %v4705 = vadd.f32 %v4704, %v4147
        %v4706 = vadd.f32 %v4705, %v4165
        %v4707 = vadd.f32 %v4706, %v4183
        %v4708 = vadd.f32 %v4707, %v4201
        %v4709 = vadd.f32 %v4708, %v4219
        %v4710 = vadd.f32 %v4709, %v4237
        %v4711 = vadd.f32 %v4710, %v4255
        %v4712 = vadd.f32 %v4711, %v4273
        %v4713 = vadd.f32 %v4712, %v4291
        %v4714 = vadd.f32 %v4713, %v4309
        %v4715 = vadd.f32 %v4714, %v4327
        %v4716 = vadd.f32 %v4715, %v4345
        %v4717 = vadd.f32 %v4716, %v4363
        %v4718 = vadd.f32 %v4717, %v4381
        %v4719 = vadd.f32 %v4718, %v4399
        %v4720 = vadd.f32 %v4719, %v4417
        %v4721 = vadd.f32 %v4720, %v4435
        %v4722 = vadd.f32 %v4721, %v4453
        %v4723 = vadd.f32 %v4722, %v4471
        %v4724 = vadd.f32 %v4723, %v4489
        %v4725 = vadd.f32 %v4724, %v4507
        %v4726 = vadd.f32 %v4725, %v4525
        %v4727 = vadd.f32 %v3681, %v3699
        %v4728 = vadd.f32 %v4727, %v3717
        %v4729 = vadd.f32 %v4728, %v3735
        %v4730 = vadd.f32 %v4729, %v3753
        %v4731 = vadd.f32 %v4730, %v3771
        %v4732 = vadd.f32 %v4731, %v3789
        %v4733 = vadd.f32 %v4732, %v3807
        %v4734 = vadd.f32 %v4733, %v3825
        %v4735 = vadd.f32 %v4734, %v3843
        %v4736 = vadd.f32 %v4735, %v3861
        %v4737 = vadd.f32 %v4736, %v3879
        %v4738 = vadd.f32 %v4737, %v3897
        %v4739 = vadd.f32 %v4738, %v3915
        %v4740 = vadd.f32 %v4739, %v3933
        %v4741 = vadd.f32 %v4740, %v3951
        %v4742 = vadd.f32 %v4741, %v3969
        %v4743 = vadd.f32 %v4742, %v3987
        %v4744 = vadd.f32 %v4743, %v4005
        %v4745 = vadd.f32 %v4744, %v4023
        %v4746 = vadd.f32 %v4745, %v4041
        %v4747 = vadd.f32 %v4746, %v4059
        %v4748 = vadd.f32 %v4747, %v4077
        %v4749 = vadd.f32 %v4748, %v4095
        %v4750 = vadd.f32 %v4749, %v4113
        %v4751 = vadd.f32 %v4750, %v4131
        %v4752 = vadd.f32 %v4751, %v4149
        %v4753 = vadd.f32 %v4752, %v4167
        %v4754 = vadd.f32 %v4753, %v4185
        %v4755 = vadd.f32 %v4754, %v4203
        %v4756 = vadd.f32 %v4755, %v4221
        %v4757 = vadd.f32 %v4756, %v4239
        %v4758 = vadd.f32 %v4757, %v4257
        %v4759 = vadd.f32 %v4758, %v4275
        %v4760 = vadd.f32 %v4759, %v4293
        %v4761 = vadd.f32 %v4760, %v4311
        %v4762 = vadd.f32 %v4761, %v4329
        %v4763 = vadd.f32 %v4762, %v4347
        %v4764 = vadd.f32 %v4763, %v4365
        %v4765 = vadd.f32 %v4764, %v4383
        %v4766 = vadd.f32 %v4765, %v4401
        %v4767 = vadd.f32 %v4766, %v4419
        %v4768 = vadd.f32 %v4767, %v4437
        %v4769 = vadd.f32 %v4768, %v4455
        %v4770 = vadd.f32 %v4769, %v4473
        %v4771 = vadd.f32 %v4770, %v4491
        %v4772 = vadd.f32 %v4771, %v4509
        %v4773 = vadd.f32 %v4772, %v4527
        %v4774 = vadd.f32 %v3683, %v3701
        %v4775 = vadd.f32 %v4774, %v3719
        %v4776 = vadd.f32 %v4775, %v3737
        %v4777 = vadd.f32 %v4776, %v3755
        %v4778 = vadd.f32 %v4777, %v3773
        %v4779 = vadd.f32 %v4778, %v3791
        %v4780 = vadd.f32 %v4779, %v3809
        %v4781 = vadd.f32 %v4780, %v3827
        %v4782 = vadd.f32 %v4781, %v3845
        %v4783 = vadd.f32 %v4782, %v3863
        %v4784 = vadd.f32 %v4783, %v3881
        %v4785 = vadd.f32 %v4784, %v3899
        %v4786 = vadd.f32 %v4785, %v3917
        %v4787 = vadd.f32 %v4786, %v3935
        %v4788 = vadd.f32 %v4787, %v3953
        %v4789 = vadd.f32 %v4788, %v3971
        %v4790 = vadd.f32 %v4789, %v3989
        %v4791 = vadd.f32 %v4790, %v4007
        %v4792 = vadd.f32 %v4791, %v4025
        %v4793 = vadd.f32 %v4792, %v4043
        %v4794 = vadd.f32 %v4793, %v4061
        %v4795 = vadd.f32 %v4794, %v4079
        %v4796 = vadd.f32 %v4795, %v4097
        %v4797 = vadd.f32 %v4796, %v4115
        %v4798 = vadd.f32 %v4797, %v4133
        %v4799 = vadd.f32 %v4798, %v4151
        %v4800 = vadd.f32 %v4799, %v4169
        %v4801 = vadd.f32 %v4800, %v4187
        %v4802 = vadd.f32 %v4801, %v4205
        %v4803 = vadd.f32 %v4802, %v4223
        %v4804 = vadd.f32 %v4803, %v4241
        %v4805 = vadd.f32 %v4804, %v4259
        %v4806 = vadd.f32 %v4805, %v4277
        %v4807 = vadd.f32 %v4806, %v4295
        %v4808 = vadd.f32 %v4807, %v4313
        %v4809 = vadd.f32 %v4808, %v4331
        %v4810 = vadd.f32 %v4809, %v4349
        %v4811 = vadd.f32 %v4810, %v4367
        %v4812 = vadd.f32 %v4811, %v4385
        %v4813 = vadd.f32 %v4812, %v4403
        %v4814 = vadd.f32 %v4813, %v4421
        %v4815 = vadd.f32 %v4814, %v4439
        %v4816 = vadd.f32 %v4815, %v4457
        %v4817 = vadd.f32 %v4816, %v4475
        %v4818 = vadd.f32 %v4817, %v4493
        %v4819 = vadd.f32 %v4818, %v4511
        %v4820 = vadd.f32 %v4819, %v4529
        %v4821 = vadd.f32 %v3685, %v3703
        %v4822 = vadd.f32 %v4821, %v3721
        %v4823 = vadd.f32 %v4822, %v3739
        %v4824 = vadd.f32 %v4823, %v3757
        %v4825 = vadd.f32 %v4824, %v3775
        %v4826 = vadd.f32 %v4825, %v3793
        %v4827 = vadd.f32 %v4826, %v3811
        %v4828 = vadd.f32 %v4827, %v3829
        %v4829 = vadd.f32 %v4828, %v3847
        %v4830 = vadd.f32 %v4829, %v3865
        %v4831 = vadd.f32 %v4830, %v3883
        %v4832 = vadd.f32 %v4831, %v3901
        %v4833 = vadd.f32 %v4832, %v3919
        %v4834 = vadd.f32 %v4833, %v3937
        %v4835 = vadd.f32 %v4834, %v3955
        %v4836 = vadd.f32 %v4835, %v3973
        %v4837 = vadd.f32 %v4836, %v3991
        %v4838 = vadd.f32 %v4837, %v4009
        %v4839 = vadd.f32 %v4838, %v4027
        %v4840 = vadd.f32 %v4839, %v4045
        %v4841 = vadd.f32 %v4840, %v4063
        %v4842 = vadd.f32 %v4841, %v4081
        %v4843 = vadd.f32 %v4842, %v4099
        %v4844 = vadd.f32 %v4843, %v4117
        %v4845 = vadd.f32 %v4844, %v4135
        %v4846 = vadd.f32 %v4845, %v4153
        %v4847 = vadd.f32 %v4846, %v4171
        %v4848 = vadd.f32 %v4847, %v4189
        %v4849 = vadd.f32 %v4848, %v4207
        %v4850 = vadd.f32 %v4849, %v4225
        %v4851 = vadd.f32 %v4850, %v4243
        %v4852 = vadd.f32 %v4851, %v4261
        %v4853 = vadd.f32 %v4852, %v4279
        %v4854 = vadd.f32 %v4853, %v4297
        %v4855 = vadd.f32 %v4854, %v4315
        %v4856 = vadd.f32 %v4855, %v4333
        %v4857 = vadd.f32 %v4856, %v4351
        %v4858 = vadd.f32 %v4857, %v4369
        %v4859 = vadd.f32 %v4858, %v4387
        %v4860 = vadd.f32 %v4859, %v4405
        %v4861 = vadd.f32 %v4860, %v4423
        %v4862 = vadd.f32 %v4861, %v4441
        %v4863 = vadd.f32 %v4862, %v4459
        %v4864 = vadd.f32 %v4863, %v4477
        %v4865 = vadd.f32 %v4864, %v4495
        %v4866 = vadd.f32 %v4865, %v4513
        %v4867 = vadd.f32 %v4866, %v4531
        %v4868 = vadd.f32 %v3687, %v3705
        %v4869 = vadd.f32 %v4868, %v3723
        %v4870 = vadd.f32 %v4869, %v3741
        %v4871 = vadd.f32 %v4870, %v3759
        %v4872 = vadd.f32 %v4871, %v3777
        %v4873 = vadd.f32 %v4872, %v3795
        %v4874 = vadd.f32 %v4873, %v3813
        %v4875 = vadd.f32 %v4874, %v3831
        %v4876 = vadd.f32 %v4875, %v3849
        %v4877 = vadd.f32 %v4876, %v3867
        %v4878 = vadd.f32 %v4877, %v3885
        %v4879 = vadd.f32 %v4878, %v3903
        %v4880 = vadd.f32 %v4879, %v3921
        %v4881 = vadd.f32 %v4880, %v3939
        %v4882 = vadd.f32 %v4881, %v3957
        %v4883 = vadd.f32 %v4882, %v3975
        %v4884 = vadd.f32 %v4883, %v3993
        %v4885 = vadd.f32 %v4884, %v4011
        %v4886 = vadd.f32 %v4885, %v4029
        %v4887 = vadd.f32 %v4886, %v4047
        %v4888 = vadd.f32 %v4887, %v4065
        %v4889 = vadd.f32 %v4888, %v4083
        %v4890 = vadd.f32 %v4889, %v4101
        %v4891 = vadd.f32 %v4890, %v4119
        %v4892 = vadd.f32 %v4891, %v4137
        %v4893 = vadd.f32 %v4892, %v4155
        %v4894 = vadd.f32 %v4893, %v4173
        %v4895 = vadd.f32 %v4894, %v4191
        %v4896 = vadd.f32 %v4895, %v4209
        %v4897 = vadd.f32 %v4896, %v4227
        %v4898 = vadd.f32 %v4897, %v4245
        %v4899 = vadd.f32 %v4898, %v4263
        %v4900 = vadd.f32 %v4899, %v4281
        %v4901 = vadd.f32 %v4900, %v4299
        %v4902 = vadd.f32 %v4901, %v4317
        %v4903 = vadd.f32 %v4902, %v4335
        %v4904 = vadd.f32 %v4903, %v4353
        %v4905 = vadd.f32 %v4904, %v4371
        %v4906 = vadd.f32 %v4905, %v4389
        %v4907 = vadd.f32 %v4906, %v4407
        %v4908 = vadd.f32 %v4907, %v4425
        %v4909 = vadd.f32 %v4908, %v4443
        %v4910 = vadd.f32 %v4909, %v4461
        %v4911 = vadd.f32 %v4910, %v4479
        %v4912 = vadd.f32 %v4911, %v4497
        %v4913 = vadd.f32 %v4912, %v4515
        %v4914 = vadd.f32 %v4913, %v4533
        %v4915 = vadd.f32 %v3689, %v3707
        %v4916 = vadd.f32 %v4915, %v3725
        %v4917 = vadd.f32 %v4916, %v3743
        %v4918 = vadd.f32 %v4917, %v3761
        %v4919 = vadd.f32 %v4918, %v3779
        %v4920 = vadd.f32 %v4919, %v3797
        %v4921 = vadd.f32 %v4920, %v3815
        %v4922 = vadd.f32 %v4921, %v3833
        %v4923 = vadd.f32 %v4922, %v3851
        %v4924 = vadd.f32 %v4923, %v3869
        %v4925 = vadd.f32 %v4924, %v3887
        %v4926 = vadd.f32 %v4925, %v3905
        %v4927 = vadd.f32 %v4926, %v3923
        %v4928 = vadd.f32 %v4927, %v3941
        %v4929 = vadd.f32 %v4928, %v3959
        %v4930 = vadd.f32 %v4929, %v3977
        %v4931 = vadd.f32 %v4930, %v3995
        %v4932 = vadd.f32 %v4931, %v4013
        %v4933 = vadd.f32 %v4932, %v4031
        %v4934 = vadd.f32 %v4933, %v4049
        %v4935 = vadd.f32 %v4934, %v4067
        %v4936 = vadd.f32 %v4935, %v4085
        %v4937 = vadd.f32 %v4936, %v4103
        %v4938 = vadd.f32 %v4937, %v4121
        %v4939 = vadd.f32 %v4938, %v4139
        %v4940 = vadd.f32 %v4939, %v4157
        %v4941 = vadd.f32 %v4940, %v4175
        %v4942 = vadd.f32 %v4941, %v4193
        %v4943 = vadd.f32 %v4942, %v4211
        %v4944 = vadd.f32 %v4943, %v4229
        %v4945 = vadd.f32 %v4944, %v4247
        %v4946 = vadd.f32 %v4945, %v4265
        %v4947 = vadd.f32 %v4946, %v4283
        %v4948 = vadd.f32 %v4947, %v4301
        %v4949 = vadd.f32 %v4948, %v4319
        %v4950 = vadd.f32 %v4949, %v4337
        %v4951 = vadd.f32 %v4950, %v4355
        %v4952 = vadd.f32 %v4951, %v4373
        %v4953 = vadd.f32 %v4952, %v4391
        %v4954 = vadd.f32 %v4953, %v4409
        %v4955 = vadd.f32 %v4954, %v4427
        %v4956 = vadd.f32 %v4955, %v4445
        %v4957 = vadd.f32 %v4956, %v4463
        %v4958 = vadd.f32 %v4957, %v4481
        %v4959 = vadd.f32 %v4958, %v4499
        %v4960 = vadd.f32 %v4959, %v4517
        %v4961 = vadd.f32 %v4960, %v4535
        %v4962 = vadd.f32 %v3691, %v3709
        %v4963 = vadd.f32 %v4962, %v3727
        %v4964 = vadd.f32 %v4963, %v3745
        %v4965 = vadd.f32 %v4964, %v3763
        %v4966 = vadd.f32 %v4965, %v3781
        %v4967 = vadd.f32 %v4966, %v3799
        %v4968 = vadd.f32 %v4967, %v3817
        %v4969 = vadd.f32 %v4968, %v3835
        %v4970 = vadd.f32 %v4969, %v3853
        %v4971 = vadd.f32 %v4970, %v3871
        %v4972 = vadd.f32 %v4971, %v3889
        %v4973 = vadd.f32 %v4972, %v3907
        %v4974 = vadd.f32 %v4973, %v3925
        %v4975 = vadd.f32 %v4974, %v3943
        %v4976 = vadd.f32 %v4975, %v3961
        %v4977 = vadd.f32 %v4976, %v3979
        %v4978 = vadd.f32 %v4977, %v3997
        %v4979 = vadd.f32 %v4978, %v4015
        %v4980 = vadd.f32 %v4979, %v4033
        %v4981 = vadd.f32 %v4980, %v4051
        %v4982 = vadd.f32 %v4981, %v4069
        %v4983 = vadd.f32 %v4982, %v4087
        %v4984 = vadd.f32 %v4983, %v4105
        %v4985 = vadd.f32 %v4984, %v4123
        %v4986 = vadd.f32 %v4985, %v4141
        %v4987 = vadd.f32 %v4986, %v4159
        %v4988 = vadd.f32 %v4987, %v4177
        %v4989 = vadd.f32 %v4988, %v4195
        %v4990 = vadd.f32 %v4989, %v4213
        %v4991 = vadd.f32 %v4990, %v4231
        %v4992 = vadd.f32 %v4991, %v4249
        %v4993 = vadd.f32 %v4992, %v4267
        %v4994 = vadd.f32 %v4993, %v4285
        %v4995 = vadd.f32 %v4994, %v4303
        %v4996 = vadd.f32 %v4995, %v4321
        %v4997 = vadd.f32 %v4996, %v4339
        %v4998 = vadd.f32 %v4997, %v4357
        %v4999 = vadd.f32 %v4998, %v4375
        %v5000 = vadd.f32 %v4999, %v4393
        %v5001 = vadd.f32 %v5000, %v4411
        %v5002 = vadd.f32 %v5001, %v4429
        %v5003 = vadd.f32 %v5002, %v4447
        %v5004 = vadd.f32 %v5003, %v4465
        %v5005 = vadd.f32 %v5004, %v4483
        %v5006 = vadd.f32 %v5005, %v4501
        %v5007 = vadd.f32 %v5006, %v4519
        %v5008 = vadd.f32 %v5007, %v4537
        %v5009 = vmul.f32 %v3675, %v4538
        %v5010 = vmul.f32 %v3677, %v4538
        %v5011 = vmul.f32 %v3679, %v4538
        %v5012 = vmul.f32 %v3681, %v4538
        %v5013 = vmul.f32 %v3683, %v4538
        %v5014 = vmul.f32 %v3685, %v4538
        %v5015 = vmul.f32 %v3687, %v4538
        %v5016 = vmul.f32 %v3689, %v4538
        %v5017 = vmul.f32 %v3691, %v4538
        %v5018 = vmul.f32 %v3693, %v4539
        %v5019 = vmul.f32 %v3695, %v4539
        %v5020 = vmul.f32 %v3697, %v4539
        %v5021 = vmul.f32 %v3699, %v4539
        %v5022 = vmul.f32 %v3701, %v4539
        %v5023 = vmul.f32 %v3703, %v4539
        %v5024 = vmul.f32 %v3705, %v4539
        %v5025 = vmul.f32 %v3707, %v4539
        %v5026 = vmul.f32 %v3709, %v4539
        %v5027 = vmul.f32 %v3711, %v4540
        %v5028 = vmul.f32 %v3713, %v4540
        %v5029 = vmul.f32 %v3715, %v4540
        %v5030 = vmul.f32 %v3717, %v4540
        %v5031 = vmul.f32 %v3719, %v4540
        %v5032 = vmul.f32 %v3721, %v4540
        %v5033 = vmul.f32 %v3723, %v4540
        %v5034 = vmul.f32 %v3725, %v4540
        %v5035 = vmul.f32 %v3727, %v4540
        %v5036 = vmul.f32 %v3729, %v4541
        %v5037 = vmul.f32 %v3731, %v4541
        %v5038 = vmul.f32 %v3733, %v4541
        %v5039 = vmul.f32 %v3735, %v4541
        %v5040 = vmul.f32 %v3737, %v4541
        %v5041 = vmul.f32 %v3739, %v4541
        %v5042 = vmul.f32 %v3741, %v4541
        %v5043 = vmul.f32 %v3743, %v4541
        %v5044 = vmul.f32 %v3745, %v4541
        %v5045 = vmul.f32 %v3747, %v4542
        %v5046 = vmul.f32 %v3749, %v4542
        %v5047 = vmul.f32 %v3751, %v4542
        %v5048 = vmul.f32 %v3753, %v4542
        %v5049 = vmul.f32 %v3755, %v4542
        %v5050 = vmul.f32 %v3757, %v4542
        %v5051 = vmul.f32 %v3759, %v4542
        %v5052 = vmul.f32 %v3761, %v4542
        %v5053 = vmul.f32 %v3763, %v4542
        %v5054 = vmul.f32 %v3765, %v4543
        %v5055 = vmul.f32 %v3767, %v4543
        %v5056 = vmul.f32 %v3769, %v4543
        %v5057 = vmul.f32 %v3771, %v4543
        %v5058 = vmul.f32 %v3773, %v4543
        %v5059 = vmul.f32 %v3775, %v4543
        %v5060 = vmul.f32 %v3777, %v4543
        %v5061 = vmul.f32 %v3779, %v4543
        %v5062 = vmul.f32 %v3781, %v4543
        %v5063 = vmul.f32 %v3783, %v4544
        %v5064 = vmul.f32 %v3785, %v4544
        %v5065 = vmul.f32 %v3787, %v4544
        %v5066 = vmul.f32 %v3789, %v4544
        %v5067 = vmul.f32 %v3791, %v4544
        %v5068 = vmul.f32 %v3793, %v4544
        %v5069 = vmul.f32 %v3795, %v4544
        %v5070 = vmul.f32 %v3797, %v4544
        %v5071 = vmul.f32 %v3799, %v4544
        %v5072 = vmul.f32 %v3801, %v4545
        %v5073 = vmul.f32 %v3803, %v4545
        %v5074 = vmul.f32 %v3805, %v4545
        %v5075 = vmul.f32 %v3807, %v4545
        %v5076 = vmul.f32 %v3809, %v4545
        %v5077 = vmul.f32 %v3811, %v4545
        %v5078 = vmul.f32 %v3813, %v4545
        %v5079 = vmul.f32 %v3815, %v4545
        %v5080 = vmul.f32 %v3817, %v4545
        %v5081 = vmul.f32 %v3819, %v4546
        %v5082 = vmul.f32 %v3821, %v4546
        %v5083 = vmul.f32 %v3823, %v4546
        %v5084 = vmul.f32 %v3825, %v4546
        %v5085 = vmul.f32 %v3827, %v4546
        %v5086 = vmul.f32 %v3829, %v4546
        %v5087 = vmul.f32 %v3831, %v4546
        %v5088 = vmul.f32 %v3833, %v4546
        %v5089 = vmul.f32 %v3835, %v4546
        %v5090 = vmul.f32 %v3837, %v4547
        %v5091 = vmul.f32 %v3839, %v4547
        %v5092 = vmul.f32 %v3841, %v4547
        %v5093 = vmul.f32 %v3843, %v4547
        %v5094 = vmul.f32 %v3845, %v4547
        %v5095 = vmul.f32 %v3847, %v4547
        %v5096 = vmul.f32 %v3849, %v4547
        %v5097 = vmul.f32 %v3851, %v4547
        %v5098 = vmul.f32 %v3853, %v4547
        %v5099 = vmul.f32 %v3855, %v4548
        %v5100 = vmul.f32 %v3857, %v4548
        %v5101 = vmul.f32 %v3859, %v4548
        %v5102 = vmul.f32 %v3861, %v4548
        %v5103 = vmul.f32 %v3863, %v4548
        %v5104 = vmul.f32 %v3865, %v4548
        %v5105 = vmul.f32 %v3867, %v4548
        %v5106 = vmul.f32 %v3869, %v4548
        %v5107 = vmul.f32 %v3871, %v4548
        %v5108 = vmul.f32 %v3873, %v4549
        %v5109 = vmul.f32 %v3875, %v4549
        %v5110 = vmul.f32 %v3877, %v4549
        %v5111 = vmul.f32 %v3879, %v4549
        %v5112 = vmul.f32 %v3881, %v4549
        %v5113 = vmul.f32 %v3883, %v4549
        %v5114 = vmul.f32 %v3885, %v4549
        %v5115 = vmul.f32 %v3887, %v4549
        %v5116 = vmul.f32 %v3889, %v4549
        %v5117 = vmul.f32 %v3891, %v4550
        %v5118 = vmul.f32 %v3893, %v4550
        %v5119 = vmul.f32 %v3895, %v4550
        %v5120 = vmul.f32 %v3897, %v4550
        %v5121 = vmul.f32 %v3899, %v4550
        %v5122 = vmul.f32 %v3901, %v4550
        %v5123 = vmul.f32 %v3903, %v4550
        %v5124 = vmul.f32 %v3905, %v4550
        %v5125 = vmul.f32 %v3907, %v4550
        %v5126 = vmul.f32 %v3909, %v4551
        %v5127 = vmul.f32 %v3911, %v4551
        %v5128 = vmul.f32 %v3913, %v4551
        %v5129 = vmul.f32 %v3915, %v4551
        %v5130 = vmul.f32 %v3917, %v4551
        %v5131 = vmul.f32 %v3919, %v4551
        %v5132 = vmul.f32 %v3921, %v4551
        %v5133 = vmul.f32 %v3923, %v4551
        %v5134 = vmul.f32 %v3925, %v4551
        %v5135 = vmul.f32 %v3927, %v4552
        %v5136 = vmul.f32 %v3929, %v4552
        %v5137 = vmul.f32 %v3931, %v4552
        %v5138 = vmul.f32 %v3933, %v4552
        %v5139 = vmul.f32 %v3935, %v4552
        %v5140 = vmul.f32 %v3937, %v4552
        %v5141 = vmul.f32 %v3939, %v4552
        %v5142 = vmul.f32 %v3941, %v4552
        %v5143 = vmul.f32 %v3943, %v4552
        %v5144 = vmul.f32 %v3945, %v4553
        %v5145 = vmul.f32 %v3947, %v4553
        %v5146 = vmul.f32 %v3949, %v4553
        %v5147 = vmul.f32 %v3951, %v4553
        %v5148 = vmul.f32 %v3953, %v4553
        %v5149 = vmul.f32 %v3955, %v4553
        %v5150 = vmul.f32 %v3957, %v4553
        %v5151 = vmul.f32 %v3959, %v4553
        %v5152 = vmul.f32 %v3961, %v4553
        %v5153 = vmul.f32 %v3963, %v4554
        %v5154 = vmul.f32 %v3965, %v4554
        %v5155 = vmul.f32 %v3967, %v4554
        %v5156 = vmul.f32 %v3969, %v4554
        %v5157 = vmul.f32 %v3971, %v4554
        %v5158 = vmul.f32 %v3973, %v4554
        %v5159 = vmul.f32 %v3975, %v4554
        %v5160 = vmul.f32 %v3977, %v4554
        %v5161 = vmul.f32 %v3979, %v4554
        %v5162 = vmul.f32 %v3981, %v4555
        %v5163 = vmul.f32 %v3983, %v4555
        %v5164 = vmul.f32 %v3985, %v4555
        %v5165 = vmul.f32 %v3987, %v4555
        %v5166 = vmul.f32 %v3989, %v4555
        %v5167 = vmul.f32 %v3991, %v4555
        %v5168 = vmul.f32 %v3993, %v4555
        %v5169 = vmul.f32 %v3995, %v4555
        %v5170 = vmul.f32 %v3997, %v4555
        %v5171 = vmul.f32 %v3999, %v4556
        %v5172 = vmul.f32 %v4001, %v4556
        %v5173 = vmul.f32 %v4003, %v4556
        %v5174 = vmul.f32 %v4005, %v4556
        %v5175 = vmul.f32 %v4007, %v4556
        %v5176 = vmul.f32 %v4009, %v4556
        %v5177 = vmul.f32 %v4011, %v4556
        %v5178 = vmul.f32 %v4013, %v4556
        %v5179 = vmul.f32 %v4015, %v4556
        %v5180 = vmul.f32 %v4017, %v4557
        %v5181 = vmul.f32 %v4019, %v4557
        %v5182 = vmul.f32 %v4021, %v4557
        %v5183 = vmul.f32 %v4023, %v4557
        %v5184 = vmul.f32 %v4025, %v4557
        %v5185 = vmul.f32 %v4027, %v4557
        %v5186 = vmul.f32 %v4029, %v4557
        %v5187 = vmul.f32 %v4031, %v4557
        %v5188 = vmul.f32 %v4033, %v4557
        %v5189 = vmul.f32 %v4035, %v4558
        %v5190 = vmul.f32 %v4037, %v4558
        %v5191 = vmul.f32 %v4039, %v4558
        %v5192 = vmul.f32 %v4041, %v4558
        %v5193 = vmul.f32 %v4043, %v4558
        %v5194 = vmul.f32 %v4045, %v4558
        %v5195 = vmul.f32 %v4047, %v4558
        %v5196 = vmul.f32 %v4049, %v4558
        %v5197 = vmul.f32 %v4051, %v4558
        %v5198 = vmul.f32 %v4053, %v4559
        %v5199 = vmul.f32 %v4055, %v4559
        %v5200 = vmul.f32 %v4057, %v4559
        %v5201 = vmul.f32 %v4059, %v4559
        %v5202 = vmul.f32 %v4061, %v4559
        %v5203 = vmul.f32 %v4063, %v4559
        %v5204 = vmul.f32 %v4065, %v4559
        %v5205 = vmul.f32 %v4067, %v4559
        %v5206 = vmul.f32 %v4069, %v4559
        %v5207 = vmul.f32 %v4071, %v4560
        %v5208 = vmul.f32 %v4073, %v4560
        %v5209 = vmul.f32 %v4075, %v4560
        %v5210 = vmul.f32 %v4077, %v4560
        %v5211 = vmul.f32 %v4079, %v4560
        %v5212 = vmul.f32 %v4081, %v4560
        %v5213 = vmul.f32 %v4083, %v4560
        %v5214 = vmul.f32 %v4085, %v4560
        %v5215 = vmul.f32 %v4087, %v4560
        %v5216 = vmul.f32 %v4089, %v4561
        %v5217 = vmul.f32 %v4091, %v4561
        %v5218 = vmul.f32 %v4093, %v4561
        %v5219 = vmul.f32 %v4095, %v4561
        %v5220 = vmul.f32 %v4097, %v4561
        %v5221 = vmul.f32 %v4099, %v4561
        %v5222 = vmul.f32 %v4101, %v4561
        %v5223 = vmul.f32 %v4103, %v4561
        %v5224 = vmul.f32 %v4105, %v4561
        %v5225 = vmul.f32 %v4107, %v4562
        %v5226 = vmul.f32 %v4109, %v4562
        %v5227 = vmul.f32 %v4111, %v4562
        %v5228 = vmul.f32 %v4113, %v4562
        %v5229 = vmul.f32 %v4115, %v4562
        %v5230 = vmul.f32 %v4117, %v4562
        %v5231 = vmul.f32 %v4119, %v4562
        %v5232 = vmul.f32 %v4121, %v4562
        %v5233 = vmul.f32 %v4123, %v4562
        %v5234 = vmul.f32 %v4125, %v4563
        %v5235 = vmul.f32 %v4127, %v4563
        %v5236 = vmul.f32 %v4129, %v4563
        %v5237 = vmul.f32 %v4131, %v4563
        %v5238 = vmul.f32 %v4133, %v4563
        %v5239 = vmul.f32 %v4135, %v4563
        %v5240 = vmul.f32 %v4137, %v4563
        %v5241 = vmul.f32 %v4139, %v4563
        %v5242 = vmul.f32 %v4141, %v4563
        %v5243 = vmul.f32 %v4143, %v4564
        %v5244 = vmul.f32 %v4145, %v4564
        %v5245 = vmul.f32 %v4147, %v4564
        %v5246 = vmul.f32 %v4149, %v4564
        %v5247 = vmul.f32 %v4151, %v4564
        %v5248 = vmul.f32 %v4153, %v4564
        %v5249 = vmul.f32 %v4155, %v4564
        %v5250 = vmul.f32 %v4157, %v4564
        %v5251 = vmul.f32 %v4159, %v4564
        %v5252 = vmul.f32 %v4161, %v4565
        %v5253 = vmul.f32 %v4163, %v4565
        %v5254 = vmul.f32 %v4165, %v4565
        %v5255 = vmul.f32 %v4167, %v4565
        %v5256 = vmul.f32 %v4169, %v4565
        %v5257 = vmul.f32 %v4171, %v4565
        %v5258 = vmul.f32 %v4173, %v4565
        %v5259 = vmul.f32 %v4175, %v4565
        %v5260 = vmul.f32 %v4177, %v4565
        %v5261 = vmul.f32 %v4179, %v4566
        %v5262 = vmul.f32 %v4181, %v4566
        %v5263 = vmul.f32 %v4183, %v4566
        %v5264 = vmul.f32 %v4185, %v4566
        %v5265 = vmul.f32 %v4187, %v4566
        %v5266 = vmul.f32 %v4189, %v4566
        %v5267 = vmul.f32 %v4191, %v4566
        %v5268 = vmul.f32 %v4193, %v4566
        %v5269 = vmul.f32 %v4195, %v4566
        %v5270 = vmul.f32 %v4197, %v4567
        %v5271 = vmul.f32 %v4199, %v4567
        %v5272 = vmul.f32 %v4201, %v4567
        %v5273 = vmul.f32 %v4203, %v4567
        %v5274 = vmul.f32 %v4205, %v4567
        %v5275 = vmul.f32 %v4207, %v4567
        %v5276 = vmul.f32 %v4209, %v4567
        %v5277 = vmul.f32 %v4211, %v4567
        %v5278 = vmul.f32 %v4213, %v4567
        %v5279 = vmul.f32 %v4215, %v4568
        %v5280 = vmul.f32 %v4217, %v4568
        %v5281 = vmul.f32 %v4219, %v4568
        %v5282 = vmul.f32 %v4221, %v4568
        %v5283 = vmul.f32 %v4223, %v4568
        %v5284 = vmul.f32 %v4225, %v4568
        %v5285 = vmul.f32 %v4227, %v4568
        %v5286 = vmul.f32 %v4229, %v4568
        %v5287 = vmul.f32 %v4231, %v4568
        %v5288 = vmul.f32 %v4233, %v4569
        %v5289 = vmul.f32 %v4235, %v4569
        %v5290 = vmul.f32 %v4237, %v4569
        %v5291 = vmul.f32 %v4239, %v4569
        %v5292 = vmul.f32 %v4241, %v4569
        %v5293 = vmul.f32 %v4243, %v4569
        %v5294 = vmul.f32 %v4245, %v4569
        %v5295 = vmul.f32 %v4247, %v4569
        %v5296 = vmul.f32 %v4249, %v4569
        %v5297 = vmul.f32 %v4251, %v4570
        %v5298 = vmul.f32 %v4253, %v4570
        %v5299 = vmul.f32 %v4255, %v4570
        %v5300 = vmul.f32 %v4257, %v4570
        %v5301 = vmul.f32 %v4259, %v4570
        %v5302 = vmul.f32 %v4261, %v4570
        %v5303 = vmul.f32 %v4263, %v4570
        %v5304 = vmul.f32 %v4265, %v4570
        %v5305 = vmul.f32 %v4267, %v4570
        %v5306 = vmul.f32 %v4269, %v4571
        %v5307 = vmul.f32 %v4271, %v4571
        %v5308 = vmul.f32 %v4273, %v4571
        %v5309 = vmul.f32 %v4275, %v4571
        %v5310 = vmul.f32 %v4277, %v4571
        %v5311 = vmul.f32 %v4279, %v4571
        %v5312 = vmul.f32 %v4281, %v4571
        %v5313 = vmul.f32 %v4283, %v4571
        %v5314 = vmul.f32 %v4285, %v4571
        %v5315 = vmul.f32 %v4287, %v4572
        %v5316 = vmul.f32 %v4289, %v4572
        %v5317 = vmul.f32 %v4291, %v4572
        %v5318 = vmul.f32 %v4293, %v4572
        %v5319 = vmul.f32 %v4295, %v4572
        %v5320 = vmul.f32 %v4297, %v4572
        %v5321 = vmul.f32 %v4299, %v4572
        %v5322 = vmul.f32 %v4301, %v4572
        %v5323 = vmul.f32 %v4303, %v4572
        %v5324 = vmul.f32 %v4305, %v4573
        %v5325 = vmul.f32 %v4307, %v4573
        %v5326 = vmul.f32 %v4309, %v4573
        %v5327 = vmul.f32 %v4311, %v4573
        %v5328 = vmul.f32 %v4313, %v4573
        %v5329 = vmul.f32 %v4315, %v4573
        %v5330 = vmul.f32 %v4317, %v4573
        %v5331 = vmul.f32 %v4319, %v4573
        %v5332 = vmul.f32 %v4321, %v4573
        %v5333 = vmul.f32 %v4323, %v4574
        %v5334 = vmul.f32 %v4325, %v4574
        %v5335 = vmul.f32 %v4327, %v4574
        %v5336 = vmul.f32 %v4329, %v4574
        %v5337 = vmul.f32 %v4331, %v4574
        %v5338 = vmul.f32 %v4333, %v4574
        %v5339 = vmul.f32 %v4335, %v4574
        %v5340 = vmul.f32 %v4337, %v4574
        %v5341 = vmul.f32 %v4339, %v4574
        %v5342 = vmul.f32 %v4341, %v4575
        %v5343 = vmul.f32 %v4343, %v4575
        %v5344 = vmul.f32 %v4345, %v4575
        %v5345 = vmul.f32 %v4347, %v4575
        %v5346 = vmul.f32 %v4349, %v4575
        %v5347 = vmul.f32 %v4351, %v4575
        %v5348 = vmul.f32 %v4353, %v4575
        %v5349 = vmul.f32 %v4355, %v4575
        %v5350 = vmul.f32 %v4357, %v4575
        %v5351 = vmul.f32 %v4359, %v4576
        %v5352 = vmul.f32 %v4361, %v4576
        %v5353 = vmul.f32 %v4363, %v4576
        %v5354 = vmul.f32 %v4365, %v4576
        %v5355 = vmul.f32 %v4367, %v4576
        %v5356 = vmul.f32 %v4369, %v4576
        %v5357 = vmul.f32 %v4371, %v4576
        %v5358 = vmul.f32 %v4373, %v4576
        %v5359 = vmul.f32 %v4375, %v4576
        %v5360 = vmul.f32 %v4377, %v4577
        %v5361 = vmul.f32 %v4379, %v4577
        %v5362 = vmul.f32 %v4381, %v4577
        %v5363 = vmul.f32 %v4383, %v4577
        %v5364 = vmul.f32 %v4385, %v4577
        %v5365 = vmul.f32 %v4387, %v4577
        %v5366 = vmul.f32 %v4389, %v4577
        %v5367 = vmul.f32 %v4391, %v4577
        %v5368 = vmul.f32 %v4393, %v4577
        %v5369 = vmul.f32 %v4395, %v4578
        %v5370 = vmul.f32 %v4397, %v4578
        %v5371 = vmul.f32 %v4399, %v4578
        %v5372 = vmul.f32 %v4401, %v4578
        %v5373 = vmul.f32 %v4403, %v4578
        %v5374 = vmul.f32 %v4405, %v4578
        %v5375 = vmul.f32 %v4407, %v4578
        %v5376 = vmul.f32 %v4409, %v4578
        %v5377 = vmul.f32 %v4411, %v4578
        %v5378 = vmul.f32 %v4413, %v4579
        %v5379 = vmul.f32 %v4415, %v4579
        %v5380 = vmul.f32 %v4417, %v4579
        %v5381 = vmul.f32 %v4419, %v4579
        %v5382 = vmul.f32 %v4421, %v4579
        %v5383 = vmul.f32 %v4423, %v4579
        %v5384 = vmul.f32 %v4425, %v4579
        %v5385 = vmul.f32 %v4427, %v4579
        %v5386 = vmul.f32 %v4429, %v4579
        %v5387 = vmul.f32 %v4431, %v4580
        %v5388 = vmul.f32 %v4433, %v4580
        %v5389 = vmul.f32 %v4435, %v4580
        %v5390 = vmul.f32 %v4437, %v4580
        %v5391 = vmul.f32 %v4439, %v4580
        %v5392 = vmul.f32 %v4441, %v4580
        %v5393 = vmul.f32 %v4443, %v4580
        %v5394 = vmul.f32 %v4445, %v4580
        %v5395 = vmul.f32 %v4447, %v4580
        %v5396 = vmul.f32 %v4449, %v4581
        %v5397 = vmul.f32 %v4451, %v4581
        %v5398 = vmul.f32 %v4453, %v4581
        %v5399 = vmul.f32 %v4455, %v4581
        %v5400 = vmul.f32 %v4457, %v4581
        %v5401 = vmul.f32 %v4459, %v4581
        %v5402 = vmul.f32 %v4461, %v4581
        %v5403 = vmul.f32 %v4463, %v4581
        %v5404 = vmul.f32 %v4465, %v4581
        %v5405 = vmul.f32 %v4467, %v4582
        %v5406 = vmul.f32 %v4469, %v4582
        %v5407 = vmul.f32 %v4471, %v4582
        %v5408 = vmul.f32 %v4473, %v4582
        %v5409 = vmul.f32 %v4475, %v4582
        %v5410 = vmul.f32 %v4477, %v4582
        %v5411 = vmul.f32 %v4479, %v4582
        %v5412 = vmul.f32 %v4481, %v4582
        %v5413 = vmul.f32 %v4483, %v4582
        %v5414 = vmul.f32 %v4485, %v4583
        %v5415 = vmul.f32 %v4487, %v4583
        %v5416 = vmul.f32 %v4489, %v4583
        %v5417 = vmul.f32 %v4491, %v4583
        %v5418 = vmul.f32 %v4493, %v4583
        %v5419 = vmul.f32 %v4495, %v4583
        %v5420 = vmul.f32 %v4497, %v4583
        %v5421 = vmul.f32 %v4499, %v4583
        %v5422 = vmul.f32 %v4501, %v4583
        %v5423 = vmul.f32 %v4503, %v4584
        %v5424 = vmul.f32 %v4505, %v4584
        %v5425 = vmul.f32 %v4507, %v4584
        %v5426 = vmul.f32 %v4509, %v4584
        %v5427 = vmul.f32 %v4511, %v4584
        %v5428 = vmul.f32 %v4513, %v4584
        %v5429 = vmul.f32 %v4515, %v4584
        %v5430 = vmul.f32 %v4517, %v4584
        %v5431 = vmul.f32 %v4519, %v4584
        %v5432 = vmul.f32 %v4521, %v4585
        %v5433 = vmul.f32 %v4523, %v4585
        %v5434 = vmul.f32 %v4525, %v4585
        %v5435 = vmul.f32 %v4527, %v4585
        %v5436 = vmul.f32 %v4529, %v4585
        %v5437 = vmul.f32 %v4531, %v4585
        %v5438 = vmul.f32 %v4533, %v4585
        %v5439 = vmul.f32 %v4535, %v4585
        %v5440 = vmul.f32 %v4537, %v4585
        %v5441 = vadd.f32 %v5009, %v5018
        %v5442 = vadd.f32 %v5441, %v5027
        %v5443 = vadd.f32 %v5442, %v5036
        %v5444 = vadd.f32 %v5443, %v5045
        %v5445 = vadd.f32 %v5444, %v5054
        %v5446 = vadd.f32 %v5445, %v5063
        %v5447 = vadd.f32 %v5446, %v5072
        %v5448 = vadd.f32 %v5447, %v5081
        %v5449 = vadd.f32 %v5448, %v5090
        %v5450 = vadd.f32 %v5449, %v5099
        %v5451 = vadd.f32 %v5450, %v5108
        %v5452 = vadd.f32 %v5451, %v5117
        %v5453 = vadd.f32 %v5452, %v5126
        %v5454 = vadd.f32 %v5453, %v5135
        %v5455 = vadd.f32 %v5454, %v5144
        %v5456 = vadd.f32 %v5455, %v5153
        %v5457 = vadd.f32 %v5456, %v5162
        %v5458 = vadd.f32 %v5457, %v5171
        %v5459 = vadd.f32 %v5458, %v5180
        %v5460 = vadd.f32 %v5459, %v5189
        %v5461 = vadd.f32 %v5460, %v5198
        %v5462 = vadd.f32 %v5461, %v5207
        %v5463 = vadd.f32 %v5462, %v5216
        %v5464 = vadd.f32 %v5463, %v5225
        %v5465 = vadd.f32 %v5464, %v5234
        %v5466 = vadd.f32 %v5465, %v5243
        %v5467 = vadd.f32 %v5466, %v5252
        %v5468 = vadd.f32 %v5467, %v5261
        %v5469 = vadd.f32 %v5468, %v5270
        %v5470 = vadd.f32 %v5469, %v5279
        %v5471 = vadd.f32 %v5470, %v5288
        %v5472 = vadd.f32 %v5471, %v5297
        %v5473 = vadd.f32 %v5472, %v5306
        %v5474 = vadd.f32 %v5473, %v5315
        %v5475 = vadd.f32 %v5474, %v5324
        %v5476 = vadd.f32 %v5475, %v5333
        %v5477 = vadd.f32 %v5476, %v5342
        %v5478 = vadd.f32 %v5477, %v5351
        %v5479 = vadd.f32 %v5478, %v5360
        %v5480 = vadd.f32 %v5479, %v5369
        %v5481 = vadd.f32 %v5480, %v5378
        %v5482 = vadd.f32 %v5481, %v5387
        %v5483 = vadd.f32 %v5482, %v5396
        %v5484 = vadd.f32 %v5483, %v5405
        %v5485 = vadd.f32 %v5484, %v5414
        %v5486 = vadd.f32 %v5485, %v5423
        %v5487 = vadd.f32 %v5486, %v5432
        %v5488 = vadd.f32 %v5010, %v5019
        %v5489 = vadd.f32 %v5488, %v5028
        %v5490 = vadd.f32 %v5489, %v5037
        %v5491 = vadd.f32 %v5490, %v5046
        %v5492 = vadd.f32 %v5491, %v5055
        %v5493 = vadd.f32 %v5492, %v5064
        %v5494 = vadd.f32 %v5493, %v5073
        %v5495 = vadd.f32 %v5494, %v5082
        %v5496 = vadd.f32 %v5495, %v5091
        %v5497 = vadd.f32 %v5496, %v5100
        %v5498 = vadd.f32 %v5497, %v5109
        %v5499 = vadd.f32 %v5498, %v5118
        %v5500 = vadd.f32 %v5499, %v5127
        %v5501 = vadd.f32 %v5500, %v5136
        %v5502 = vadd.f32 %v5501, %v5145
        %v5503 = vadd.f32 %v5502, %v5154
        %v5504 = vadd.f32 %v5503, %v5163
        %v5505 = vadd.f32 %v5504, %v5172
        %v5506 = vadd.f32 %v5505, %v5181
        %v5507 = vadd.f32 %v5506, %v5190
        %v5508 = vadd.f32 %v5507, %v5199
        %v5509 = vadd.f32 %v5508, %v5208
        %v5510 = vadd.f32 %v5509, %v5217
        %v5511 = vadd.f32 %v5510, %v5226
        %v5512 = vadd.f32 %v5511, %v5235
        %v5513 = vadd.f32 %v5512, %v5244
        %v5514 = vadd.f32 %v5513, %v5253
        %v5515 = vadd.f32 %v5514, %v5262
        %v5516 = vadd.f32 %v5515, %v5271
        %v5517 = vadd.f32 %v5516, %v5280
        %v5518 = vadd.f32 %v5517, %v5289
        %v5519 = vadd.f32 %v5518, %v5298
        %v5520 = vadd.f32 %v5519, %v5307
        %v5521 = vadd.f32 %v5520, %v5316
        %v5522 = vadd.f32 %v5521, %v5325
        %v5523 = vadd.f32 %v5522, %v5334
        %v5524 = vadd.f32 %v5523, %v5343
        %v5525 = vadd.f32 %v5524, %v5352
        %v5526 = vadd.f32 %v5525, %v5361
        %v5527 = vadd.f32 %v5526, %v5370
        %v5528 = vadd.f32 %v5527, %v5379
        %v5529 = vadd.f32 %v5528, %v5388
        %v5530 = vadd.f32 %v5529, %v5397
        %v5531 = vadd.f32 %v5530, %v5406
        %v5532 = vadd.f32 %v5531, %v5415
        %v5533 = vadd.f32 %v5532, %v5424
        %v5534 = vadd.f32 %v5533, %v5433
        %v5535 = vadd.f32 %v5011, %v5020
        %v5536 = vadd.f32 %v5535, %v5029
        %v5537 = vadd.f32 %v5536, %v5038
        %v5538 = vadd.f32 %v5537, %v5047
        %v5539 = vadd.f32 %v5538, %v5056
        %v5540 = vadd.f32 %v5539, %v5065
        %v5541 = vadd.f32 %v5540, %v5074
        %v5542 = vadd.f32 %v5541, %v5083
        %v5543 = vadd.f32 %v5542, %v5092
        %v5544 = vadd.f32 %v5543, %v5101
        %v5545 = vadd.f32 %v5544, %v5110
        %v5546 = vadd.f32 %v5545, %v5119
        %v5547 = vadd.f32 %v5546, %v5128
        %v5548 = vadd.f32 %v5547, %v5137
        %v5549 = vadd.f32 %v5548, %v5146
        %v5550 = vadd.f32 %v5549, %v5155
        %v5551 = vadd.f32 %v5550, %v5164
        %v5552 = vadd.f32 %v5551, %v5173
        %v5553 = vadd.f32 %v5552, %v5182
        %v5554 = vadd.f32 %v5553, %v5191
        %v5555 = vadd.f32 %v5554, %v5200
        %v5556 = vadd.f32 %v5555, %v5209
        %v5557 = vadd.f32 %v5556, %v5218
        %v5558 = vadd.f32 %v5557, %v5227
        %v5559 = vadd.f32 %v5558, %v5236
        %v5560 = vadd.f32 %v5559, %v5245
        %v5561 = vadd.f32 %v5560, %v5254
        %v5562 = vadd.f32 %v5561, %v5263
        %v5563 = vadd.f32 %v5562, %v5272
        %v5564 = vadd.f32 %v5563, %v5281
        %v5565 = vadd.f32 %v5564, %v5290
        %v5566 = vadd.f32 %v5565, %v5299
        %v5567 = vadd.f32 %v5566, %v5308
        %v5568 = vadd.f32 %v5567, %v5317
        %v5569 = vadd.f32 %v5568, %v5326
        %v5570 = vadd.f32 %v5569, %v5335
        %v5571 = vadd.f32 %v5570, %v5344
        %v5572 = vadd.f32 %v5571, %v5353
        %v5573 = vadd.f32 %v5572, %v5362
        %v5574 = vadd.f32 %v5573, %v5371
        %v5575 = vadd.f32 %v5574, %v5380
        %v5576 = vadd.f32 %v5575, %v5389
        %v5577 = vadd.f32 %v5576, %v5398
        %v5578 = vadd.f32 %v5577, %v5407
        %v5579 = vadd.f32 %v5578, %v5416
        %v5580 = vadd.f32 %v5579, %v5425
        %v5581 = vadd.f32 %v5580, %v5434
        %v5582 = vadd.f32 %v5012, %v5021
        %v5583 = vadd.f32 %v5582, %v5030
        %v5584 = vadd.f32 %v5583, %v5039
        %v5585 = vadd.f32 %v5584, %v5048
        %v5586 = vadd.f32 %v5585, %v5057
        %v5587 = vadd.f32 %v5586, %v5066
        %v5588 = vadd.f32 %v5587, %v5075
        %v5589 = vadd.f32 %v5588, %v5084
        %v5590 = vadd.f32 %v5589, %v5093
        %v5591 = vadd.f32 %v5590, %v5102
        %v5592 = vadd.f32 %v5591, %v5111
        %v5593 = vadd.f32 %v5592, %v5120
        %v5594 = vadd.f32 %v5593, %v5129
        %v5595 = vadd.f32 %v5594, %v5138
        %v5596 = vadd.f32 %v5595, %v5147
        %v5597 = vadd.f32 %v5596, %v5156
        %v5598 = vadd.f32 %v5597, %v5165
        %v5599 = vadd.f32 %v5598, %v5174
        %v5600 = vadd.f32 %v5599, %v5183
        %v5601 = vadd.f32 %v5600, %v5192
        %v5602 = vadd.f32 %v5601, %v5201
        %v5603 = vadd.f32 %v5602, %v5210
        %v5604 = vadd.f32 %v5603, %v5219
        %v5605 = vadd.f32 %v5604, %v5228
        %v5606 = vadd.f32 %v5605, %v5237
        %v5607 = vadd.f32 %v5606, %v5246
        %v5608 = vadd.f32 %v5607, %v5255
        %v5609 = vadd.f32 %v5608, %v5264
        %v5610 = vadd.f32 %v5609, %v5273
        %v5611 = vadd.f32 %v5610, %v5282
        %v5612 = vadd.f32 %v5611, %v5291
        %v5613 = vadd.f32 %v5612, %v5300
        %v5614 = vadd.f32 %v5613, %v5309
        %v5615 = vadd.f32 %v5614, %v5318
        %v5616 = vadd.f32 %v5615, %v5327
        %v5617 = vadd.f32 %v5616, %v5336
        %v5618 = vadd.f32 %v5617, %v5345
        %v5619 = vadd.f32 %v5618, %v5354
        %v5620 = vadd.f32 %v5619, %v5363
        %v5621 = vadd.f32 %v5620, %v5372
        %v5622 = vadd.f32 %v5621, %v5381
        %v5623 = vadd.f32 %v5622, %v5390
        %v5624 = vadd.f32 %v5623, %v5399
        %v5625 = vadd.f32 %v5624, %v5408
        %v5626 = vadd.f32 %v5625, %v5417
        %v5627 = vadd.f32 %v5626, %v5426
        %v5628 = vadd.f32 %v5627, %v5435
        %v5629 = vadd.f32 %v5013, %v5022
        %v5630 = vadd.f32 %v5629, %v5031
        %v5631 = vadd.f32 %v5630, %v5040
        %v5632 = vadd.f32 %v5631, %v5049
        %v5633 = vadd.f32 %v5632, %v5058
        %v5634 = vadd.f32 %v5633, %v5067
        %v5635 = vadd.f32 %v5634, %v5076
        %v5636 = vadd.f32 %v5635, %v5085
        %v5637 = vadd.f32 %v5636, %v5094
        %v5638 = vadd.f32 %v5637, %v5103
        %v5639 = vadd.f32 %v5638, %v5112
        %v5640 = vadd.f32 %v5639, %v5121
        %v5641 = vadd.f32 %v5640, %v5130
        %v5642 = vadd.f32 %v5641, %v5139
        %v5643 = vadd.f32 %v5642, %v5148
        %v5644 = vadd.f32 %v5643, %v5157
        %v5645 = vadd.f32 %v5644, %v5166
        %v5646 = vadd.f32 %v5645, %v5175
        %v5647 = vadd.f32 %v5646, %v5184
        %v5648 = vadd.f32 %v5647, %v5193
        %v5649 = vadd.f32 %v5648, %v5202
        %v5650 = vadd.f32 %v5649, %v5211
        %v5651 = vadd.f32 %v5650, %v5220
        %v5652 = vadd.f32 %v5651, %v5229
        %v5653 = vadd.f32 %v5652, %v5238
        %v5654 = vadd.f32 %v5653, %v5247
        %v5655 = vadd.f32 %v5654, %v5256
        %v5656 = vadd.f32 %v5655, %v5265
        %v5657 = vadd.f32 %v5656, %v5274
        %v5658 = vadd.f32 %v5657, %v5283
        %v5659 = vadd.f32 %v5658, %v5292
        %v5660 = vadd.f32 %v5659, %v5301
        %v5661 = vadd.f32 %v5660, %v5310
        %v5662 = vadd.f32 %v5661, %v5319
        %v5663 = vadd.f32 %v5662, %v5328
        %v5664 = vadd.f32 %v5663, %v5337
        %v5665 = vadd.f32 %v5664, %v5346
        %v5666 = vadd.f32 %v5665, %v5355
        %v5667 = vadd.f32 %v5666, %v5364
        %v5668 = vadd.f32 %v5667, %v5373
        %v5669 = vadd.f32 %v5668, %v5382
        %v5670 = vadd.f32 %v5669, %v5391
        %v5671 = vadd.f32 %v5670, %v5400
        %v5672 = vadd.f32 %v5671, %v5409
        %v5673 = vadd.f32 %v5672, %v5418
        %v5674 = vadd.f32 %v5673, %v5427
        %v5675 = vadd.f32 %v5674, %v5436
        %v5676 = vadd.f32 %v5014, %v5023
        %v5677 = vadd.f32 %v5676, %v5032
        %v5678 = vadd.f32 %v5677, %v5041
        %v5679 = vadd.f32 %v5678, %v5050
        %v5680 = vadd.f32 %v5679, %v5059
        %v5681 = vadd.f32 %v5680, %v5068
        %v5682 = vadd.f32 %v5681, %v5077
        %v5683 = vadd.f32 %v5682, %v5086
        %v5684 = vadd.f32 %v5683, %v5095
        %v5685 = vadd.f32 %v5684, %v5104
        %v5686 = vadd.f32 %v5685, %v5113
        %v5687 = vadd.f32 %v5686, %v5122
        %v5688 = vadd.f32 %v5687, %v5131
        %v5689 = vadd.f32 %v5688, %v5140
        %v5690 = vadd.f32 %v5689, %v5149
        %v5691 = vadd.f32 %v5690, %v5158
        %v5692 = vadd.f32 %v5691, %v5167
        %v5693 = vadd.f32 %v5692, %v5176
        %v5694 = vadd.f32 %v5693, %v5185
        %v5695 = vadd.f32 %v5694, %v5194
        %v5696 = vadd.f32 %v5695, %v5203
        %v5697 = vadd.f32 %v5696, %v5212
        %v5698 = vadd.f32 %v5697, %v5221
        %v5699 = vadd.f32 %v5698, %v5230
        %v5700 = vadd.f32 %v5699, %v5239
        %v5701 = vadd.f32 %v5700, %v5248
        %v5702 = vadd.f32 %v5701, %v5257
        %v5703 = vadd.f32 %v5702, %v5266
        %v5704 = vadd.f32 %v5703, %v5275
        %v5705 = vadd.f32 %v5704, %v5284
        %v5706 = vadd.f32 %v5705, %v5293
        %v5707 = vadd.f32 %v5706, %v5302
        %v5708 = vadd.f32 %v5707, %v5311
        %v5709 = vadd.f32 %v5708, %v5320
        %v5710 = vadd.f32 %v5709, %v5329
        %v5711 = vadd.f32 %v5710, %v5338
        %v5712 = vadd.f32 %v5711, %v5347
        %v5713 = vadd.f32 %v5712, %v5356
        %v5714 = vadd.f32 %v5713, %v5365
        %v5715 = vadd.f32 %v5714, %v5374
        %v5716 = vadd.f32 %v5715, %v5383
        %v5717 = vadd.f32 %v5716, %v5392
        %v5718 = vadd.f32 %v5717, %v5401
        %v5719 = vadd.f32 %v5718, %v5410
        %v5720 = vadd.f32 %v5719, %v5419
        %v5721 = vadd.f32 %v5720, %v5428
        %v5722 = vadd.f32 %v5721, %v5437
        %v5723 = vadd.f32 %v5015, %v5024
        %v5724 = vadd.f32 %v5723, %v5033
        %v5725 = vadd.f32 %v5724, %v5042
        %v5726 = vadd.f32 %v5725, %v5051
        %v5727 = vadd.f32 %v5726, %v5060
        %v5728 = vadd.f32 %v5727, %v5069
        %v5729 = vadd.f32 %v5728, %v5078
        %v5730 = vadd.f32 %v5729, %v5087
        %v5731 = vadd.f32 %v5730, %v5096
        %v5732 = vadd.f32 %v5731, %v5105
        %v5733 = vadd.f32 %v5732, %v5114
        %v5734 = vadd.f32 %v5733, %v5123
        %v5735 = vadd.f32 %v5734, %v5132
        %v5736 = vadd.f32 %v5735, %v5141
        %v5737 = vadd.f32 %v5736, %v5150
        %v5738 = vadd.f32 %v5737, %v5159
        %v5739 = vadd.f32 %v5738, %v5168
        %v5740 = vadd.f32 %v5739, %v5177
        %v5741 = vadd.f32 %v5740, %v5186
        %v5742 = vadd.f32 %v5741, %v5195
        %v5743 = vadd.f32 %v5742, %v5204
        %v5744 = vadd.f32 %v5743, %v5213
        %v5745 = vadd.f32 %v5744, %v5222
        %v5746 = vadd.f32 %v5745, %v5231
        %v5747 = vadd.f32 %v5746, %v5240
        %v5748 = vadd.f32 %v5747, %v5249
        %v5749 = vadd.f32 %v5748, %v5258
        %v5750 = vadd.f32 %v5749, %v5267
        %v5751 = vadd.f32 %v5750, %v5276
        %v5752 = vadd.f32 %v5751, %v5285
        %v5753 = vadd.f32 %v5752, %v5294
        %v5754 = vadd.f32 %v5753, %v5303
        %v5755 = vadd.f32 %v5754, %v5312
        %v5756 = vadd.f32 %v5755, %v5321
        %v5757 = vadd.f32 %v5756, %v5330
        %v5758 = vadd.f32 %v5757, %v5339
        %v5759 = vadd.f32 %v5758, %v5348
        %v5760 = vadd.f32 %v5759, %v5357
        %v5761 = vadd.f32 %v5760, %v5366
        %v5762 = vadd.f32 %v5761, %v5375
        %v5763 = vadd.f32 %v5762, %v5384
        %v5764 = vadd.f32 %v5763, %v5393
        %v5765 = vadd.f32 %v5764, %v5402
        %v5766 = vadd.f32 %v5765, %v5411
        %v5767 = vadd.f32 %v5766, %v5420
        %v5768 = vadd.f32 %v5767, %v5429
        %v5769 = vadd.f32 %v5768, %v5438
        %v5770 = vadd.f32 %v5016, %v5025
        %v5771 = vadd.f32 %v5770, %v5034
        %v5772 = vadd.f32 %v5771, %v5043
        %v5773 = vadd.f32 %v5772, %v5052
        %v5774 = vadd.f32 %v5773, %v5061
        %v5775 = vadd.f32 %v5774, %v5070
        %v5776 = vadd.f32 %v5775, %v5079
        %v5777 = vadd.f32 %v5776, %v5088
        %v5778 = vadd.f32 %v5777, %v5097
        %v5779 = vadd.f32 %v5778, %v5106
        %v5780 = vadd.f32 %v5779, %v5115
        %v5781 = vadd.f32 %v5780, %v5124
        %v5782 = vadd.f32 %v5781, %v5133
        %v5783 = vadd.f32 %v5782, %v5142
        %v5784 = vadd.f32 %v5783, %v5151
        %v5785 = vadd.f32 %v5784, %v5160
        %v5786 = vadd.f32 %v5785, %v5169
        %v5787 = vadd.f32 %v5786, %v5178
        %v5788 = vadd.f32 %v5787, %v5187
        %v5789 = vadd.f32 %v5788, %v5196
        %v5790 = vadd.f32 %v5789, %v5205
        %v5791 = vadd.f32 %v5790, %v5214
        %v5792 = vadd.f32 %v5791, %v5223
        %v5793 = vadd.f32 %v5792, %v5232
        %v5794 = vadd.f32 %v5793, %v5241
        %v5795 = vadd.f32 %v5794, %v5250
        %v5796 = vadd.f32 %v5795, %v5259
        %v5797 = vadd.f32 %v5796, %v5268
        %v5798 = vadd.f32 %v5797, %v5277
        %v5799 = vadd.f32 %v5798, %v5286
        %v5800 = vadd.f32 %v5799, %v5295
        %v5801 = vadd.f32 %v5800, %v5304
        %v5802 = vadd.f32 %v5801, %v5313
        %v5803 = vadd.f32 %v5802, %v5322
        %v5804 = vadd.f32 %v5803, %v5331
        %v5805 = vadd.f32 %v5804, %v5340
        %v5806 = vadd.f32 %v5805, %v5349
        %v5807 = vadd.f32 %v5806, %v5358
        %v5808 = vadd.f32 %v5807, %v5367
        %v5809 = vadd.f32 %v5808, %v5376
        %v5810 = vadd.f32 %v5809, %v5385
        %v5811 = vadd.f32 %v5810, %v5394
        %v5812 = vadd.f32 %v5811, %v5403
        %v5813 = vadd.f32 %v5812, %v5412
        %v5814 = vadd.f32 %v5813, %v5421
        %v5815 = vadd.f32 %v5814, %v5430
        %v5816 = vadd.f32 %v5815, %v5439
        %v5817 = vadd.f32 %v5017, %v5026
        %v5818 = vadd.f32 %v5817, %v5035
        %v5819 = vadd.f32 %v5818, %v5044
        %v5820 = vadd.f32 %v5819, %v5053
        %v5821 = vadd.f32 %v5820, %v5062
        %v5822 = vadd.f32 %v5821, %v5071
        %v5823 = vadd.f32 %v5822, %v5080
        %v5824 = vadd.f32 %v5823, %v5089
        %v5825 = vadd.f32 %v5824, %v5098
        %v5826 = vadd.f32 %v5825, %v5107
        %v5827 = vadd.f32 %v5826, %v5116
        %v5828 = vadd.f32 %v5827, %v5125
        %v5829 = vadd.f32 %v5828, %v5134
        %v5830 = vadd.f32 %v5829, %v5143
        %v5831 = vadd.f32 %v5830, %v5152
        %v5832 = vadd.f32 %v5831, %v5161
        %v5833 = vadd.f32 %v5832, %v5170
        %v5834 = vadd.f32 %v5833, %v5179
        %v5835 = vadd.f32 %v5834, %v5188
        %v5836 = vadd.f32 %v5835, %v5197
        %v5837 = vadd.f32 %v5836, %v5206
        %v5838 = vadd.f32 %v5837, %v5215
        %v5839 = vadd.f32 %v5838, %v5224
        %v5840 = vadd.f32 %v5839, %v5233
        %v5841 = vadd.f32 %v5840, %v5242
        %v5842 = vadd.f32 %v5841, %v5251
        %v5843 = vadd.f32 %v5842, %v5260
        %v5844 = vadd.f32 %v5843, %v5269
        %v5845 = vadd.f32 %v5844, %v5278
        %v5846 = vadd.f32 %v5845, %v5287
        %v5847 = vadd.f32 %v5846, %v5296
        %v5848 = vadd.f32 %v5847, %v5305
        %v5849 = vadd.f32 %v5848, %v5314
        %v5850 = vadd.f32 %v5849, %v5323
        %v5851 = vadd.f32 %v5850, %v5332
        %v5852 = vadd.f32 %v5851, %v5341
        %v5853 = vadd.f32 %v5852, %v5350
        %v5854 = vadd.f32 %v5853, %v5359
        %v5855 = vadd.f32 %v5854, %v5368
        %v5856 = vadd.f32 %v5855, %v5377
        %v5857 = vadd.f32 %v5856, %v5386
        %v5858 = vadd.f32 %v5857, %v5395
        %v5859 = vadd.f32 %v5858, %v5404
        %v5860 = vadd.f32 %v5859, %v5413
        %v5861 = vadd.f32 %v5860, %v5422
        %v5862 = vadd.f32 %v5861, %v5431
        %v5863 = vadd.f32 %v5862, %v5440
        %v5864 = vrcp.pop %v4632
        %v5865 = vmul.f32 %v5487, %v5864
        %v5866 = vrcp.pop %v4679
        %v5867 = vmul.f32 %v5534, %v5866
        %v5868 = vrcp.pop %v4726
        %v5869 = vmul.f32 %v5581, %v5868
        %v5870 = vrcp.pop %v4773
        %v5871 = vmul.f32 %v5628, %v5870
        %v5872 = vrcp.pop %v4820
        %v5873 = vmul.f32 %v5675, %v5872
        %v5874 = vrcp.pop %v4867
        %v5875 = vmul.f32 %v5722, %v5874
        %v5876 = vrcp.pop %v4914
        %v5877 = vmul.f32 %v5769, %v5876
        %v5878 = vrcp.pop %v4961
        %v5879 = vmul.f32 %v5816, %v5878
        %v5880 = vrcp.pop %v5008
        %v5881 = vmul.f32 %v5863, %v5880
        %5882 = vst [vmem:[%s193] sm:$0xff] %v5865
        %5883 = vst [vmem:[%s193 + $0x8] sm:$0xff] %v5867
        %5884 = vst [vmem:[%s193 + $0x10] sm:$0xff] %v5869
        %5885 = vst [vmem:[%s193 + $0x18] sm:$0xff] %v5871
        %5886 = vst [vmem:[%s193 + $0x20] sm:$0xff] %v5873
        %5887 = vst [vmem:[%s193 + $0x28] sm:$0xff] %v5875
        %5888 = vst [vmem:[%s193 + $0x30] sm:$0xff] %v5877
        %5889 = vst [vmem:[%s193 + $0x38] sm:$0xff] %v5879
        %5890 = vst [vmem:[%s193 + $0x40] sm:$0xff] %v5881
        %s5891 = sand.u32 %s112, 1
        %s5892 = scalar_lea.sflag [#allocation3], %s5891
        %s5893 = sand.u32 %s112, 1
        %s5894 = smul.addr %s5893, 72
        %s5895 = scalar_lea.vmem [#allocation2], %s5894
        // Predicated region
        $region33: #{tpu_custom_call.1} parent=31 // pred_check
          %p5896 = pneg %p122
        $region34: #{tpu_custom_call.1} parent=31 // pred_check_branch
          %5898 = sbr.rel (%p5896) target = $region36
        $region35: #{tpu_custom_call.1} parent=31 // pred_region
          %s5899 = smul.u32 3, %s22
          %s5901 = ssub.s32 1152, 1152
          %5902 = vsyncadd %s5892, %s5901
          %s5903 = smul.addr %s21, 9
          %s5904 = sadd.s32 %s5899, %s5903
          %s5905 = smul.addr %s5904, 128
          %s5906 = scalar_lea.hbm %s3, %s5905
          %s5907 = sshll.u32 %s5895, 4
          %s5908 = int_to_ptr.vmem [resolvable:$true] %s5907
          %5913 = dma.vmem_to_hbm [thread:$0]  %s5908, 1152, %s5906, %s5892, 384, 384, 24
        $region36: #{tpu_custom_call.1} parent=31 // pred_fallthru
          _
      $region32: #{tpu_custom_call.1} parent=5 // pred_fallthru
        _
      %p5914 = scmp.le.s32.totalorder 2, %s12
      // Predicated region
      $region37: #{tpu_custom_call.1} parent=5 // pred_check
        %p5915 = pneg %p5914
      $region38: #{tpu_custom_call.1} parent=5 // pred_check_branch
        %5917 = sbr.rel (%p5915) target = $region40
      $region39: #{tpu_custom_call.1} parent=5 // pred_region
        %s5918 = ssub.s32 %s12, 2
        // Predicated region
        $region41: #{tpu_custom_call.1} parent=39 // pred_check
          %p5919 = pneg %p128
        $region42: #{tpu_custom_call.1} parent=39 // pred_check_branch
          %5921 = sbr.rel (%p5919) target = $region44
        $region43: #{tpu_custom_call.1} parent=39 // pred_region
          %s5922 = sand.u32 %s113, 1
          %s5923 = scalar_lea.sflag [#allocation3], %s5922
          %s5924 = sand.u32 %s113, 1
          %s5925 = smul.addr %s5924, 72
          %s5926 = scalar_lea.vmem [#allocation2], %s5925
          %5927 = dma.done %s5923, 1152
        $region44: #{tpu_custom_call.1} parent=39 // pred_fallthru
          _
      $region40: #{tpu_custom_call.1} parent=5 // pred_fallthru
        _
    $region6: #{tpu_custom_call.1} parent=1 // loop_footer
      %s16 = sadd.s32 1, %s12
    $region7: #{tpu_custom_call.1} parent=1 // loop_footer_branch
      %11 = sbr.rel target = $region3
    $region8: #{tpu_custom_call.1} parent=1 // loop_exit
      _
    %5928 = vsyncpa [#allocation3], 1
    %s5929 = scalar_lea.sflag [#allocation3], 1
    %5930 = vsyncpa %s5929, 1

</llo_original>
